<compile_context>
chip_gen: v7x
topology: tpu7x:2x2x1
jax: 0.10.0
libtpu: 0.0.40
codegen_flags: <defaults>
</compile_context>

<pallas_src>
import functools

import numpy as np
import jax
import jax.numpy as jnp
from jax.experimental import pallas as pl
from jax.experimental.pallas import tpu as pltpu

BN_EPS = 1e-5
BIG = 1e10          # "no candidate" distance sentinel
BIG_IDX_F = 1e9     # index sentinel used during lane-min selection


def _round_up(x, m):
    return ((x + m - 1) // m) * m


# ============================================================================
# 1. Fused 1x1-conv / BatchNorm / ReLU chain (Pallas, M-tiled, lane-dense)
# ============================================================================
def _matmul_stats_kernel(x_ref, w_ref, y_ref, st_ref):
    # x: (TM, K) bf16, w: (K, Cp) bf16 -> y: (TM, Cp) f32 + per-tile sum/sumsq.
    y = jnp.dot(x_ref[...], w_ref[...], preferred_element_type=jnp.float32)
    y_ref[...] = y
    s0 = jnp.sum(y, axis=0, keepdims=True)
    s1 = jnp.sum(y * y, axis=0, keepdims=True)
    st_ref[0] = jnp.concatenate([s0, s1], axis=0)


def _bn_relu_matmul_stats_kernel(y_ref, sc_ref, sh_ref, w_ref, z_ref, st_ref, *,
                                 tile_m, m_true):
    # normalize+ReLU previous layer, then matmul of the next layer (fused).
    i = pl.program_id(0)
    a = jnp.maximum(y_ref[...] * sc_ref[...] + sh_ref[...], 0.0)
    # zero rows beyond the true M so padded rows never pollute the next layer's
    # global BN statistics.
    row = i * tile_m + jax.lax.broadcasted_iota(jnp.int32, (tile_m, 1), 0)
    a = jnp.where(row < m_true, a, 0.0)
    z = jnp.dot(a.astype(jnp.bfloat16), w_ref[...],
                preferred_element_type=jnp.float32)
    z_ref[...] = z
    s0 = jnp.sum(z, axis=0, keepdims=True)
    s1 = jnp.sum(z * z, axis=0, keepdims=True)
    st_ref[0] = jnp.concatenate([s0, s1], axis=0)


def _bn_relu_kernel(y_ref, sc_ref, sh_ref, o_ref):
    o_ref[...] = jnp.maximum(y_ref[...] * sc_ref[...] + sh_ref[...], 0.0)


def _matmul_stats(x, w, tile_m):
    mp, k = x.shape
    cp = w.shape[1]
    nt = mp // tile_m
    return pl.pallas_call(
        _matmul_stats_kernel,
        out_shape=(jax.ShapeDtypeStruct((mp, cp), jnp.float32),
                   jax.ShapeDtypeStruct((nt, 2, cp), jnp.float32)),
        grid=(nt,),
        in_specs=[pl.BlockSpec((tile_m, k), lambda i: (i, 0)),
                  pl.BlockSpec((k, cp), lambda i: (0, 0))],
        out_specs=(pl.BlockSpec((tile_m, cp), lambda i: (i, 0)),
                   pl.BlockSpec((1, 2, cp), lambda i: (i, 0, 0))),
        compiler_params=pltpu.CompilerParams(dimension_semantics=("parallel",)),
    )(x, w)


def _bn_relu_matmul_stats(y, scale, shift, w, tile_m, m_true):
    mp, cin = y.shape
    cp = w.shape[1]
    nt = mp // tile_m
    kernel = functools.partial(_bn_relu_matmul_stats_kernel,
                               tile_m=tile_m, m_true=m_true)
    return pl.pallas_call(
        kernel,
        out_shape=(jax.ShapeDtypeStruct((mp, cp), jnp.float32),
                   jax.ShapeDtypeStruct((nt, 2, cp), jnp.float32)),
        grid=(nt,),
        in_specs=[pl.BlockSpec((tile_m, cin), lambda i: (i, 0)),
                  pl.BlockSpec((1, cin), lambda i: (0, 0)),
                  pl.BlockSpec((1, cin), lambda i: (0, 0)),
                  pl.BlockSpec((cin, cp), lambda i: (0, 0))],
        out_specs=(pl.BlockSpec((tile_m, cp), lambda i: (i, 0)),
                   pl.BlockSpec((1, 2, cp), lambda i: (i, 0, 0))),
        compiler_params=pltpu.CompilerParams(dimension_semantics=("parallel",)),
    )(y, scale, shift, w)


def _bn_relu(y, scale, shift, tile_m):
    mp, cp = y.shape
    nt = mp // tile_m
    return pl.pallas_call(
        _bn_relu_kernel,
        out_shape=jax.ShapeDtypeStruct((mp, cp), jnp.float32),
        grid=(nt,),
        in_specs=[pl.BlockSpec((tile_m, cp), lambda i: (i, 0)),
                  pl.BlockSpec((1, cp), lambda i: (0, 0)),
                  pl.BlockSpec((1, cp), lambda i: (0, 0))],
        out_specs=pl.BlockSpec((tile_m, cp), lambda i: (i, 0)),
        compiler_params=pltpu.CompilerParams(dimension_semantics=("parallel",)),
    )(y, scale, shift)


def _stats_to_scale_shift(part, gamma_p, beta_p, m_true):
    # Tiny (2, Cp) reduction done in plain JAX between pallas_calls.
    # TODO(synk): sum/sumsq variance can suffer f32 cancellation for huge M;
    # switch to a centered two-pass if that regime matters.
    s = jnp.sum(part, axis=0)
    mean = s[0] / float(m_true)
    var = jnp.maximum(s[1] / float(m_true) - mean * mean, 0.0)
    inv = jax.lax.rsqrt(var + BN_EPS)
    scale = gamma_p * inv            # gamma_p == 0 on padded lanes -> stay 0
    shift = beta_p - mean * scale
    return scale.reshape(1, -1), shift.reshape(1, -1)


def _choose_m_tiling(m):
    # Big enough tiles for pipelining, sized well inside the v7x 64 MiB VMEM.
    if m <= 512:
        t = max(8, _round_up(m, 8))
        return t, t
    return 512, _round_up(m, 512)


def mlp_chain(x, layers):
    """Chain of [1x1 conv (no bias) -> BatchNorm1d(batch stats) -> ReLU].

    layers: list of (W (Cin, Cout) f32, gamma (Cout,), beta (Cout,)).
    x: (M, Cin0) f32.  Returns (M, Cout_last) f32.
    """
    m, c0 = x.shape
    tile_m, mp = _choose_m_tiling(m)
    x_p = jnp.pad(x, ((0, mp - m), (0, 0))).astype(jnp.bfloat16)

    # Pre-pad every weight/gamma/beta so all Pallas outputs are lane-dense
    # (Cout multiple of 128); padded lanes carry zero weight and gamma=0.
    prepped = []
    k_in = c0
    for (w, g, b) in layers:
        cin_real, cout = w.shape
        cp = _round_up(cout, 128)
        wp = jnp.zeros((k_in, cp), jnp.bfloat16).at[:cin_real, :cout].set(
            w.astype(jnp.bfloat16))
        gp = jnp.zeros((cp,), jnp.float32).at[:cout].set(g)
        bp = jnp.zeros((cp,), jnp.float32).at[:cout].set(b)
        prepped.append((wp, gp, bp, cout))
        k_in = cp

    wp0, g0, b0, _ = prepped[0]
    y, part = _matmul_stats(x_p, wp0, tile_m)
    scale, shift = _stats_to_scale_shift(part, g0, b0, m)
    for k in range(1, len(prepped)):
        wpk, gk, bk, _ = prepped[k]
        y, part = _bn_relu_matmul_stats(y, scale, shift, wpk, tile_m, m)
        scale, shift = _stats_to_scale_shift(part, gk, bk, m)
    out = _bn_relu(y, scale, shift, tile_m)
    return out[:m, :prepped[-1][3]]


# ============================================================================
# 2. Streaming three-NN (Pallas): running top-3 per (query point, grid center)
# ============================================================================
def _three_nn_kernel(qc_ref, qa_ref, qb_ref, s_ref, sb_ref, dist_ref, idx_ref,
                     best_d, best_i, *, n_tile, radius, neighbor_type,
                     sentinel_base):
    ni = pl.program_id(1)

    @pl.when(ni == 0)
    def _():
        lane0 = jax.lax.broadcasted_iota(jnp.int32, best_i.shape, 1)
        best_d[...] = jnp.full(best_d.shape, BIG, jnp.float32)
        best_i[...] = sentinel_base + lane0        # unique, never a real index

    # query (sublane) columns
    qcx = qc_ref[:, 0:1]; qcy = qc_ref[:, 1:2]; qcz = qc_ref[:, 2:3]
    qax = qa_ref[:, 0:1]; qay = qa_ref[:, 1:2]; qaz = qa_ref[:, 2:3]
    qb = qb_ref[...]
    # support (lane) rows
    sx = s_ref[0:1, :]; sy = s_ref[1:2, :]; sz = s_ref[2:3, :]
    sb = sb_ref[...]

    # ranking distance: grid-center -> support point (squared)
    dx = qcx - sx; dy = qcy - sy; dz = qcz - sz
    d2 = dx * dx + dy * dy + dz * dz

    # candidate test uses the anchor (new_xyz) point, cube or ball, same batch.
    ax = qax - sx; ay = qay - sy; az = qaz - sz
    if neighbor_type == 1:   # ball
        in_range = (ax * ax + ay * ay + az * az) <= radius * radius
    else:                    # cube
        in_range = ((jnp.abs(ax) <= radius) & (jnp.abs(ay) <= radius)
                    & (jnp.abs(az) <= radius))
    cand = in_range & (qb == sb)
    d2 = jnp.where(cand, d2, BIG)

    col = ni * n_tile + jax.lax.broadcasted_iota(jnp.int32, d2.shape, 1)

    # merge running top-3 (kept in a 128-lane scratch for aligned concat) with
    # this block, via three min/select/mask sweeps over the lane axis.
    cur_d = jnp.concatenate([best_d[...], d2], axis=1)
    cur_i = jnp.concatenate([best_i[...], col], axis=1)

    top_d, top_i = [], []
    for _ in range(3):
        dmin = jnp.min(cur_d, axis=1, keepdims=True)
        imin_f = jnp.min(jnp.where(cur_d == dmin, cur_i.astype(jnp.float32),
                                   BIG_IDX_F), axis=1, keepdims=True)
        imin = imin_f.astype(jnp.int32)
        top_d.append(dmin)
        top_i.append(imin)
        cur_d = jnp.where(cur_i == imin, BIG, cur_d)

    lane = jax.lax.broadcasted_iota(jnp.int32, best_i.shape, 1)
    best_d[...] = jnp.where(lane == 0, top_d[0],
                  jnp.where(lane == 1, top_d[1],
                  jnp.where(lane == 2, top_d[2], BIG)))
    best_i[...] = jnp.where(lane == 0, top_i[0],
                  jnp.where(lane == 1, top_i[1],
                  jnp.where(lane == 2, top_i[2], sentinel_base + lane)))

    @pl.when(ni == pl.num_programs(1) - 1)
    def _():
        dist_ref[...] = jnp.concatenate(top_d, axis=1)
        idx_ref[...] = jnp.concatenate(top_i, axis=1)


def three_nn_for_vector_pool(support_xyz, support_bid, new_xyz, new_bid,
                             grid_centers, max_dist, neighbor_type, dist_mult):
    """Streaming replacement for three_nn_for_vector_pool_by_two_step.

    Returns (dist (M,G,3) squared distances, idx (M,G,3) with -1 for empty).
    """
    M, G, _ = grid_centers.shape
    N = support_xyz.shape[0]
    Q = M * G

    if Q >= 256:
        TILE_Q = 256
    else:
        TILE_Q = max(8, _round_up(Q, 8))
    Qp = _round_up(Q, TILE_Q)
    N_TILE = 512 if N >= 512 else _round_up(max(N, 1), 128)
    Np = _round_up(N, N_TILE)

    qc = jnp.pad(grid_centers.reshape(Q, 3), ((0, Qp - Q), (0, 0)))
    qa = jnp.pad(jnp.repeat(new_xyz, G, axis=0), ((0, Qp - Q), (0, 0)))
    qb = jnp.pad(jnp.repeat(new_bid.astype(jnp.int32), G), ((0, Qp - Q),),
                 constant_values=-3).reshape(Qp, 1)
    s_t = jnp.pad(support_xyz, ((0, Np - N), (0, 0))).T            # (3, Np)
    sb = jnp.pad(support_bid.astype(jnp.int32), ((0, Np - N),),
                 constant_values=-2).reshape(1, Np)

    kernel = functools.partial(
        _three_nn_kernel, n_tile=N_TILE,
        radius=float(max_dist * dist_mult),
        neighbor_type=int(neighbor_type), sentinel_base=int(Np))

    dist, idx = pl.pallas_call(
        kernel,
        out_shape=(jax.ShapeDtypeStruct((Qp, 3), jnp.float32),
                   jax.ShapeDtypeStruct((Qp, 3), jnp.int32)),
        grid=(Qp // TILE_Q, Np // N_TILE),
        in_specs=[pl.BlockSpec((TILE_Q, 3), lambda qi, ni: (qi, 0)),
                  pl.BlockSpec((TILE_Q, 3), lambda qi, ni: (qi, 0)),
                  pl.BlockSpec((TILE_Q, 1), lambda qi, ni: (qi, 0)),
                  pl.BlockSpec((3, N_TILE), lambda qi, ni: (0, ni)),
                  pl.BlockSpec((1, N_TILE), lambda qi, ni: (0, ni))],
        out_specs=(pl.BlockSpec((TILE_Q, 3), lambda qi, ni: (qi, 0)),
                   pl.BlockSpec((TILE_Q, 3), lambda qi, ni: (qi, 0))),
        scratch_shapes=[pltpu.VMEM((TILE_Q, 128), jnp.float32),
                        pltpu.VMEM((TILE_Q, 128), jnp.int32)],
        compiler_params=pltpu.CompilerParams(
            dimension_semantics=("parallel", "arbitrary")),
    )(qc, qa, qb, s_t, sb)

    dist = dist[:Q].reshape(M, G, 3)
    idx = idx[:Q].reshape(M, G, 3)

    # fixup: duplicate nearest neighbour for missing slots, -1 if none at all.
    thresh = 0.5 * BIG
    d1, d2, d3 = dist[..., 0], dist[..., 1], dist[..., 2]
    i1, i2, i3 = idx[..., 0], idx[..., 1], idx[..., 2]
    has1, has2, has3 = d1 < thresh, d2 < thresh, d3 < thresh
    i2 = jnp.where(has2, i2, i1); d2 = jnp.where(has2, d2, d1)
    i3 = jnp.where(has3, i3, i2); d3 = jnp.where(has3, d3, d2)
    i1 = jnp.where(has1, i1, -1)
    i2 = jnp.where(has1, i2, -1)
    i3 = jnp.where(has1, i3, -1)
    return (jnp.stack([d1, d2, d3], axis=-1),
            jnp.stack([i1, i2, i3], axis=-1).astype(jnp.int32))


# ============================================================================
# 3. Local interpolation glue (JAX gathers)
# ============================================================================
def local_interpolate(support_xyz, support_bid, features, new_xyz, new_bid,
                      grid_centers, max_dist, neighbor_type, dist_mult):
    """VectorPoolLocalInterpolateModule.forward with mlp=None, use_xyz=True."""
    M, G, _ = grid_centers.shape
    dist, idx = three_nn_for_vector_pool(support_xyz, support_bid, new_xyz,
                                         new_bid, grid_centers, max_dist,
                                         neighbor_type, dist_mult)
    dist_recip = 1.0 / (dist + 1e-8)
    norm = jnp.sum(dist_recip, axis=-1, keepdims=True)
    weight = dist_recip / jnp.maximum(norm, 1e-8)

    idx_flat = idx.reshape(-1, 3)
    empty = idx_flat[:, 0] < 0
    idx_safe = jnp.where(empty[:, None], 0, idx_flat)
    w_flat = weight.reshape(-1, 3)

    # TODO(synk): fuse these random gathers + weighted sum + xyz-concat into a
    # Pallas DMA-gather kernel feeding the grouped conv directly.
    gathered = features[idx_safe]                                    # (M*G,3,C)
    interp = jnp.sum(gathered * w_flat[..., None], axis=1)           # (M*G,C)
    near_xyz = support_xyz[idx_safe]                                 # (M*G,3,3)
    local_xyz = (grid_centers.reshape(-1, 1, 3) - near_xyz).reshape(-1, 9)
    feats = jnp.concatenate([interp, local_xyz], axis=-1)            # (M*G,C+9)
    feats = jnp.where(empty[:, None], 0.0, feats)
    return feats


def get_dense_voxel_offsets(max_dist, num_voxels):
    R = max_dist
    def grids(n):
        return np.arange(-R + R / n, R - R / n + 1e-5, 2 * R / n,
                         dtype=np.float32)
    xg, yg, zg = np.meshgrid(grids(num_voxels[0]), grids(num_voxels[1]),
                             grids(num_voxels[2]), indexing='ij')
    return np.stack([xg.reshape(-1), yg.reshape(-1), zg.reshape(-1)], axis=-1)


# ============================================================================
# 4. Module forward passes
# ============================================================================
def vector_pool_aggregation_forward(gp, cfg, xyz, xyz_bid, new_xyz, new_bid,
                                    features):
    nrc = cfg['num_reduced_channels']
    N, C = features.shape
    assert C % nrc == 0
    feat_red = features.reshape(N, C // nrc, nrc).sum(axis=1)          # (N,nrc)

    G = cfg['total_voxels']
    offsets = jnp.asarray(get_dense_voxel_offsets(cfg['max_dist'],
                                                  cfg['num_local_voxel']))
    grid_centers = new_xyz[:, None, :] + offsets[None, :, :]           # (M,G,3)

    vfeat = local_interpolate(xyz, xyz_bid, feat_red, new_xyz, new_bid,
                              grid_centers, cfg['max_dist'],
                              cfg['neighbor_type'], cfg['dist_mult'])
    M = new_xyz.shape[0]
    vfeat = vfeat.reshape(M, G * (nrc + 9))

    # grouped conv (block-diagonal matmul) + BN + ReLU, then post MLPs -- all
    # one fused Pallas chain (intermediates touch HBM exactly once).
    layers = [(gp['agg_w_bd'], gp['agg_gamma'], gp['agg_beta'])] + list(gp['post'])
    y = mlp_chain(vfeat, layers)
    return new_xyz, y


def msg_forward(params, group_cfgs, xyz, xyz_bid, new_xyz, new_bid, features):
    feats = []
    for gp, cfg in zip(params['groups'], group_cfgs):
        _, f = vector_pool_aggregation_forward(gp, cfg, xyz, xyz_bid,
                                               new_xyz, new_bid, features)
        feats.append(f)
    y = jnp.concatenate([new_xyz] + feats, axis=-1)                    # (M, 3+sum)
    y = mlp_chain(y, params['msg_post'])
    return new_xyz, y


# ============================================================================
# 5. Deterministic parameter construction (kaiming convs, BN gamma=1 beta=0)
# ============================================================================
def kaiming(key, shape, fan_in):
    return jax.random.normal(key, shape, jnp.float32) * np.sqrt(2.0 / fan_in)


def build_params(key, group_cfgs, num_c_local_agg, msg_post_mlps, nrc):
    params = {'groups': [], 'msg_post': []}
    c_msg_in = 3
    for cfg in group_cfgs:
        G = cfg['total_voxels']
        cg = nrc + 9
        co = num_c_local_agg
        key, k1 = jax.random.split(key)
        w_g = kaiming(k1, (G, cg, co), cg)
        # block-diagonal dense form of the grouped 1x1 conv (single MXU matmul)
        w_bd = jnp.zeros((G * cg, G * co), jnp.float32)
        for g in range(G):
            w_bd = w_bd.at[g * cg:(g + 1) * cg, g * co:(g + 1) * co].set(w_g[g])
        gp = {'agg_w_bd': w_bd,
              'agg_gamma': jnp.ones((G * co,), jnp.float32),
              'agg_beta': jnp.zeros((G * co,), jnp.float32),
              'post': []}
        c_in = G * co
        for c_out in cfg['post_mlps']:
            key, k1 = jax.random.split(key)
            gp['post'].append((kaiming(k1, (c_in, c_out), c_in),
                               jnp.ones((c_out,), jnp.float32),
                               jnp.zeros((c_out,), jnp.float32)))
            c_in = c_out
        params['groups'].append(gp)
        c_msg_in += cfg['post_mlps'][-1]

    c_in = c_msg_in
    for c_out in msg_post_mlps:
        key, k1 = jax.random.split(key)
        params['msg_post'].append((kaiming(k1, (c_in, c_out), c_in),
                                   jnp.ones((c_out,), jnp.float32),
                                   jnp.zeros((c_out,), jnp.float32)))
        c_in = c_out
    return params


# ============================================================================
if __name__ == "__main__":
    key = jax.random.PRNGKey(0)

    # small shapes
    B = 2
    n_per, m_per = 16, 8
    N, M = B * n_per, B * m_per
    input_channels = 16
    num_reduced_channels = 8
    num_c_local_agg = 32       # NUM_CHANNELS_OF_LOCAL_AGGREGATION
    msg_post_mlps = (64, 32)   # MSG_POST_MLPS

    group_cfgs = [
        dict(num_local_voxel=(2, 2, 2), total_voxels=8, max_dist=0.4,
             neighbor_type=0, dist_mult=2.0, post_mlps=(32,),
             num_reduced_channels=num_reduced_channels),
        dict(num_local_voxel=(2, 2, 2), total_voxels=8, max_dist=0.8,
             neighbor_type=0, dist_mult=2.0, post_mlps=(32,),
             num_reduced_channels=num_reduced_channels),
    ]

    key, kx, kn, kf, kp = jax.random.split(key, 5)
    xyz = jax.random.uniform(kx, (N, 3), jnp.float32, 0.0, 2.0)
    new_xyz = jax.random.uniform(kn, (M, 3), jnp.float32, 0.0, 2.0)
    features = jax.random.normal(kf, (N, input_channels), jnp.float32)
    xyz_bid = jnp.asarray(np.repeat(np.arange(B), n_per), jnp.int32)   # xyz_batch_cnt
    new_bid = jnp.asarray(np.repeat(np.arange(B), m_per), jnp.int32)   # new_xyz_batch_cnt

    params = build_params(kp, group_cfgs, num_c_local_agg, msg_post_mlps,
                          num_reduced_channels)

    fwd = jax.jit(lambda p, a, ab, b, bb, f: msg_forward(p, group_cfgs,
                                                         a, ab, b, bb, f))
    cur_xyz, out = fwd(params, xyz, xyz_bid, new_xyz, new_bid, features)
    out = jax.block_until_ready(out)
    assert cur_xyz.shape == (M, 3)
    assert out.shape == (M, msg_post_mlps[-1])
    assert bool(jnp.all(jnp.isfinite(out)))
    print("KERNEL_OK")
</pallas_src>

<mosaic_0001>
module attributes {stable_mosaic.version = 11 : i64} {
  func.func @_three_nn_kernel(%arg0: i32, %arg1: i32, %arg2: memref<128x3xf32, #tpu.memory_space<vmem>>, %arg3: memref<128x3xf32, #tpu.memory_space<vmem>>, %arg4: memref<128x1xi32, #tpu.memory_space<vmem>>, %arg5: memref<3x128xf32, #tpu.memory_space<vmem>>, %arg6: memref<1x128xi32, #tpu.memory_space<vmem>>, %arg7: memref<128x3xf32, #tpu.memory_space<vmem>>, %arg8: memref<128x3xi32, #tpu.memory_space<vmem>>, %arg9: memref<128x128xf32, #tpu.memory_space<vmem>>, %arg10: memref<128x128xi32, #tpu.memory_space<vmem>>) attributes {dimension_semantics = [#tpu.dimension_semantics<parallel>, #tpu.dimension_semantics<arbitrary>], iteration_bounds = array<i64: 1, 1>, scalar_prefetch = 0 : i64, scratch_operands = 2 : i64, tpu.core_type = #tpu.core_type<tc>, window_params = [{transform_indices = @transform_0, window_bounds = array<i64: 128, 3>}, {transform_indices = @transform_1, window_bounds = array<i64: 128, 3>}, {transform_indices = @transform_2, window_bounds = array<i64: 128, 1>}, {transform_indices = @transform_3, window_bounds = array<i64: 3, 128>}, {transform_indices = @transform_4, window_bounds = array<i64: 1, 128>}, {transform_indices = @transform_5, window_bounds = array<i64: 128, 3>}, {transform_indices = @transform_6, window_bounds = array<i64: 128, 3>}]} {
    %c0_i32 = arith.constant 0 : i32
    %0 = arith.cmpi eq, %arg1, %c0_i32 : i32
    %1 = arith.extui %0 : i1 to i32
    %c0_i32_0 = arith.constant 0 : i32
    %2 = arith.cmpi ne, %1, %c0_i32_0 : i32
    scf.if %2 {
      %139 = tpu.iota {dimensions = array<i32: 1>} : vector<128x128xi32>
      %cst_50 = arith.constant 1.000000e+10 : f32
      %140 = vector.broadcast %cst_50 : f32 to vector<128x128xf32>
      %c0_51 = arith.constant 0 : index
      %c0_52 = arith.constant 0 : index
      %141 = vector.load %arg9[%c0_51, %c0_52] : memref<128x128xf32, #tpu.memory_space<vmem>>, vector<128x128xf32>
      tpu.vector_store %arg9[%c0_51, %c0_52], %140 {strides = array<i32>} : memref<128x128xf32, #tpu.memory_space<vmem>>, vector<128x128xf32>,
      %c128_i32_53 = arith.constant 128 : i32
      %142 = vector.broadcast %c128_i32_53 : i32 to vector<128x128xi32>
      %143 = arith.addi %142, %139 : vector<128x128xi32>
      %c0_54 = arith.constant 0 : index
      %c0_55 = arith.constant 0 : index
      %144 = vector.load %arg10[%c0_54, %c0_55] : memref<128x128xi32, #tpu.memory_space<vmem>>, vector<128x128xi32>
      tpu.vector_store %arg10[%c0_54, %c0_55], %143 {strides = array<i32>} : memref<128x128xi32, #tpu.memory_space<vmem>>, vector<128x128xi32>,
    } else {
    }
    %c0 = arith.constant 0 : index
    %c0_1 = arith.constant 0 : index
    %3 = vector.load %arg2[%c0, %c0_1] : memref<128x3xf32, #tpu.memory_space<vmem>>, vector<128x1xf32>
    %c0_2 = arith.constant 0 : index
    %c1 = arith.constant 1 : index
    %4 = vector.load %arg2[%c0_2, %c1] : memref<128x3xf32, #tpu.memory_space<vmem>>, vector<128x1xf32>
    %c0_3 = arith.constant 0 : index
    %c2 = arith.constant 2 : index
    %5 = vector.load %arg2[%c0_3, %c2] : memref<128x3xf32, #tpu.memory_space<vmem>>, vector<128x1xf32>
    %c0_4 = arith.constant 0 : index
    %c0_5 = arith.constant 0 : index
    %6 = vector.load %arg3[%c0_4, %c0_5] : memref<128x3xf32, #tpu.memory_space<vmem>>, vector<128x1xf32>
    %c0_6 = arith.constant 0 : index
    %c1_7 = arith.constant 1 : index
    %7 = vector.load %arg3[%c0_6, %c1_7] : memref<128x3xf32, #tpu.memory_space<vmem>>, vector<128x1xf32>
    %c0_8 = arith.constant 0 : index
    %c2_9 = arith.constant 2 : index
    %8 = vector.load %arg3[%c0_8, %c2_9] : memref<128x3xf32, #tpu.memory_space<vmem>>, vector<128x1xf32>
    %c0_10 = arith.constant 0 : index
    %c0_11 = arith.constant 0 : index
    %9 = vector.load %arg4[%c0_10, %c0_11] : memref<128x1xi32, #tpu.memory_space<vmem>>, vector<128x1xi32>
    %c0_12 = arith.constant 0 : index
    %c0_13 = arith.constant 0 : index
    %10 = vector.load %arg5[%c0_12, %c0_13] : memref<3x128xf32, #tpu.memory_space<vmem>>, vector<1x128xf32>
    %c1_14 = arith.constant 1 : index
    %c0_15 = arith.constant 0 : index
    %11 = vector.load %arg5[%c1_14, %c0_15] : memref<3x128xf32, #tpu.memory_space<vmem>>, vector<1x128xf32>
    %c2_16 = arith.constant 2 : index
    %c0_17 = arith.constant 0 : index
    %12 = vector.load %arg5[%c2_16, %c0_17] : memref<3x128xf32, #tpu.memory_space<vmem>>, vector<1x128xf32>
    %c0_18 = arith.constant 0 : index
    %c0_19 = arith.constant 0 : index
    %13 = vector.load %arg6[%c0_18, %c0_19] : memref<1x128xi32, #tpu.memory_space<vmem>>, vector<1x128xi32>
    %14 = vector.broadcast %3 : vector<128x1xf32> to vector<128x128xf32>
    %15 = vector.broadcast %10 : vector<1x128xf32> to vector<128x128xf32>
    %16 = arith.subf %14, %15 : vector<128x128xf32>
    %17 = vector.broadcast %4 : vector<128x1xf32> to vector<128x128xf32>
    %18 = vector.broadcast %11 : vector<1x128xf32> to vector<128x128xf32>
    %19 = arith.subf %17, %18 : vector<128x128xf32>
    %20 = vector.broadcast %5 : vector<128x1xf32> to vector<128x128xf32>
    %21 = vector.broadcast %12 : vector<1x128xf32> to vector<128x128xf32>
    %22 = arith.subf %20, %21 : vector<128x128xf32>
    %23 = arith.mulf %16, %16 : vector<128x128xf32>
    %24 = arith.mulf %19, %19 : vector<128x128xf32>
    %25 = arith.addf %23, %24 : vector<128x128xf32>
    %26 = arith.mulf %22, %22 : vector<128x128xf32>
    %27 = arith.addf %25, %26 : vector<128x128xf32>
    %28 = vector.broadcast %6 : vector<128x1xf32> to vector<128x128xf32>
    %29 = vector.broadcast %10 : vector<1x128xf32> to vector<128x128xf32>
    %30 = arith.subf %28, %29 : vector<128x128xf32>
    %31 = vector.broadcast %7 : vector<128x1xf32> to vector<128x128xf32>
    %32 = vector.broadcast %11 : vector<1x128xf32> to vector<128x128xf32>
    %33 = arith.subf %31, %32 : vector<128x128xf32>
    %34 = vector.broadcast %8 : vector<128x1xf32> to vector<128x128xf32>
    %35 = vector.broadcast %12 : vector<1x128xf32> to vector<128x128xf32>
    %36 = arith.subf %34, %35 : vector<128x128xf32>
    %37 = math.absf %30 : vector<128x128xf32>
    %cst = arith.constant 1.600000e+00 : f32
    %38 = vector.broadcast %cst : f32 to vector<128x128xf32>
    %39 = arith.cmpf ole, %37, %38 : vector<128x128xf32>
    %40 = math.absf %33 : vector<128x128xf32>
    %cst_20 = arith.constant 1.600000e+00 : f32
    %41 = vector.broadcast %cst_20 : f32 to vector<128x128xf32>
    %42 = arith.cmpf ole, %40, %41 : vector<128x128xf32>
    %43 = arith.andi %39, %42 : vector<128x128xi1>
    %44 = math.absf %36 : vector<128x128xf32>
    %cst_21 = arith.constant 1.600000e+00 : f32
    %45 = vector.broadcast %cst_21 : f32 to vector<128x128xf32>
    %46 = arith.cmpf ole, %44, %45 : vector<128x128xf32>
    %47 = arith.andi %43, %46 : vector<128x128xi1>
    %48 = vector.broadcast %9 : vector<128x1xi32> to vector<128x128xi32>
    %49 = vector.broadcast %13 : vector<1x128xi32> to vector<128x128xi32>
    %50 = arith.cmpi eq, %48, %49 : vector<128x128xi32>
    %51 = arith.andi %47, %50 : vector<128x128xi1>
    %cst_22 = arith.constant 1.000000e+10 : f32
    %52 = vector.broadcast %cst_22 : f32 to vector<128x128xf32>
    %53 = arith.select %51, %27, %52 : vector<128x128xi1>, vector<128x128xf32>
    %c128_i32 = arith.constant 128 : i32
    %54 = arith.muli %arg1, %c128_i32 : i32
    %55 = tpu.iota {dimensions = array<i32: 1>} : vector<128x128xi32>
    %56 = vector.broadcast %54 : i32 to vector<128x128xi32>
    %57 = arith.addi %56, %55 : vector<128x128xi32>
    %c0_23 = arith.constant 0 : index
    %c0_24 = arith.constant 0 : index
    %58 = vector.load %arg9[%c0_23, %c0_24] : memref<128x128xf32, #tpu.memory_space<vmem>>, vector<128x128xf32>
    %59 = tpu.concatenate %58, %53 in 1 : vector<128x128xf32>, vector<128x128xf32> -> vector<128x256xf32>
    %c0_25 = arith.constant 0 : index
    %c0_26 = arith.constant 0 : index
    %60 = vector.load %arg10[%c0_25, %c0_26] : memref<128x128xi32, #tpu.memory_space<vmem>>, vector<128x128xi32>
    %61 = tpu.concatenate %60, %57 in 1 : vector<128x128xi32>, vector<128x128xi32> -> vector<128x256xi32>
    %cst_27 = arith.constant dense<0x7F800000> : vector<128xf32>
    %62 = vector.multi_reduction <minimumf>, %59, %cst_27 [1] : vector<128x256xf32> to vector<128xf32>
    %63 = vector.shape_cast %62 : vector<128xf32> to vector<128x1xf32>
    %64 = vector.broadcast %63 : vector<128x1xf32> to vector<128x256xf32>
    %65 = arith.cmpf oeq, %59, %64 : vector<128x256xf32>
    %66 = arith.sitofp %61 : vector<128x256xi32> to vector<128x256xf32>
    %cst_28 = arith.constant 1.000000e+09 : f32
    %67 = vector.broadcast %cst_28 : f32 to vector<128x256xf32>
    %68 = arith.select %65, %66, %67 : vector<128x256xi1>, vector<128x256xf32>
    %cst_29 = arith.constant dense<0x7F800000> : vector<128xf32>
    %69 = vector.multi_reduction <minimumf>, %68, %cst_29 [1] : vector<128x256xf32> to vector<128xf32>
    %70 = vector.shape_cast %69 : vector<128xf32> to vector<128x1xf32>
    %71 = arith.fptosi %70 : vector<128x1xf32> to vector<128x1xi32>
    %72 = vector.broadcast %71 : vector<128x1xi32> to vector<128x256xi32>
    %73 = arith.cmpi eq, %61, %72 : vector<128x256xi32>
    %cst_30 = arith.constant 1.000000e+10 : f32
    %74 = vector.broadcast %cst_30 : f32 to vector<128x256xf32>
    %75 = arith.select %73, %74, %59 : vector<128x256xi1>, vector<128x256xf32>
    %cst_31 = arith.constant dense<0x7F800000> : vector<128xf32>
    %76 = vector.multi_reduction <minimumf>, %75, %cst_31 [1] : vector<128x256xf32> to vector<128xf32>
    %77 = vector.shape_cast %76 : vector<128xf32> to vector<128x1xf32>
    %78 = vector.broadcast %77 : vector<128x1xf32> to vector<128x256xf32>
    %79 = arith.cmpf oeq, %75, %78 : vector<128x256xf32>
    %80 = arith.sitofp %61 : vector<128x256xi32> to vector<128x256xf32>
    %cst_32 = arith.constant 1.000000e+09 : f32
    %81 = vector.broadcast %cst_32 : f32 to vector<128x256xf32>
    %82 = arith.select %79, %80, %81 : vector<128x256xi1>, vector<128x256xf32>
    %cst_33 = arith.constant dense<0x7F800000> : vector<128xf32>
    %83 = vector.multi_reduction <minimumf>, %82, %cst_33 [1] : vector<128x256xf32> to vector<128xf32>
    %84 = vector.shape_cast %83 : vector<128xf32> to vector<128x1xf32>
    %85 = arith.fptosi %84 : vector<128x1xf32> to vector<128x1xi32>
    %86 = vector.broadcast %85 : vector<128x1xi32> to vector<128x256xi32>
    %87 = arith.cmpi eq, %61, %86 : vector<128x256xi32>
    %cst_34 = arith.constant 1.000000e+10 : f32
    %88 = vector.broadcast %cst_34 : f32 to vector<128x256xf32>
    %89 = arith.select %87, %88, %75 : vector<128x256xi1>, vector<128x256xf32>
    %cst_35 = arith.constant dense<0x7F800000> : vector<128xf32>
    %90 = vector.multi_reduction <minimumf>, %89, %cst_35 [1] : vector<128x256xf32> to vector<128xf32>
    %91 = vector.shape_cast %90 : vector<128xf32> to vector<128x1xf32>
    %92 = vector.broadcast %91 : vector<128x1xf32> to vector<128x256xf32>
    %93 = arith.cmpf oeq, %89, %92 : vector<128x256xf32>
    %94 = arith.sitofp %61 : vector<128x256xi32> to vector<128x256xf32>
    %cst_36 = arith.constant 1.000000e+09 : f32
    %95 = vector.broadcast %cst_36 : f32 to vector<128x256xf32>
    %96 = arith.select %93, %94, %95 : vector<128x256xi1>, vector<128x256xf32>
    %cst_37 = arith.constant dense<0x7F800000> : vector<128xf32>
    %97 = vector.multi_reduction <minimumf>, %96, %cst_37 [1] : vector<128x256xf32> to vector<128xf32>
    %98 = vector.shape_cast %97 : vector<128xf32> to vector<128x1xf32>
    %99 = arith.fptosi %98 : vector<128x1xf32> to vector<128x1xi32>
    %100 = tpu.iota {dimensions = array<i32: 1>} : vector<128x128xi32>
    %c0_i32_38 = arith.constant 0 : i32
    %101 = vector.broadcast %c0_i32_38 : i32 to vector<128x128xi32>
    %102 = arith.cmpi eq, %100, %101 : vector<128x128xi32>
    %c1_i32 = arith.constant 1 : i32
    %103 = vector.broadcast %c1_i32 : i32 to vector<128x128xi32>
    %104 = arith.cmpi eq, %100, %103 : vector<128x128xi32>
    %c2_i32 = arith.constant 2 : i32
    %105 = vector.broadcast %c2_i32 : i32 to vector<128x128xi32>
    %106 = arith.cmpi eq, %100, %105 : vector<128x128xi32>
    %cst_39 = arith.constant 1.000000e+10 : f32
    %107 = vector.shape_cast %91 : vector<128x1xf32> to vector<128x1xf32>
    %108 = vector.broadcast %107 : vector<128x1xf32> to vector<128x128xf32>
    %109 = vector.broadcast %cst_39 : f32 to vector<128x128xf32>
    %110 = arith.select %106, %108, %109 : vector<128x128xi1>, vector<128x128xf32>
    %111 = vector.shape_cast %77 : vector<128x1xf32> to vector<128x1xf32>
    %112 = vector.broadcast %111 : vector<128x1xf32> to vector<128x128xf32>
    %113 = arith.select %104, %112, %110 : vector<128x128xi1>, vector<128x128xf32>
    %114 = vector.shape_cast %63 : vector<128x1xf32> to vector<128x1xf32>
    %115 = vector.broadcast %114 : vector<128x1xf32> to vector<128x128xf32>
    %116 = arith.select %102, %115, %113 : vector<128x128xi1>, vector<128x128xf32>
    %c0_40 = arith.constant 0 : index
    %c0_41 = arith.constant 0 : index
    %117 = vector.load %arg9[%c0_40, %c0_41] : memref<128x128xf32, #tpu.memory_space<vmem>>, vector<128x128xf32>
    tpu.vector_store %arg9[%c0_40, %c0_41], %116 {strides = array<i32>} : memref<128x128xf32, #tpu.memory_space<vmem>>, vector<128x128xf32>,
    %c0_i32_42 = arith.constant 0 : i32
    %118 = vector.broadcast %c0_i32_42 : i32 to vector<128x128xi32>
    %119 = arith.cmpi eq, %100, %118 : vector<128x128xi32>
    %c1_i32_43 = arith.constant 1 : i32
    %120 = vector.broadcast %c1_i32_43 : i32 to vector<128x128xi32>
    %121 = arith.cmpi eq, %100, %120 : vector<128x128xi32>
    %c2_i32_44 = arith.constant 2 : i32
    %122 = vector.broadcast %c2_i32_44 : i32 to vector<128x128xi32>
    %123 = arith.cmpi eq, %100, %122 : vector<128x128xi32>
    %c128_i32_45 = arith.constant 128 : i32
    %124 = vector.broadcast %c128_i32_45 : i32 to vector<128x128xi32>
    %125 = arith.addi %124, %100 : vector<128x128xi32>
    %126 = vector.shape_cast %99 : vector<128x1xi32> to vector<128x1xi32>
    %127 = vector.broadcast %126 : vector<128x1xi32> to vector<128x128xi32>
    %128 = arith.select %123, %127, %125 : vector<128x128xi1>, vector<128x128xi32>
    %129 = vector.shape_cast %85 : vector<128x1xi32> to vector<128x1xi32>
    %130 = vector.broadcast %129 : vector<128x1xi32> to vector<128x128xi32>
    %131 = arith.select %121, %130, %128 : vector<128x128xi1>, vector<128x128xi32>
    %132 = vector.shape_cast %71 : vector<128x1xi32> to vector<128x1xi32>
    %133 = vector.broadcast %132 : vector<128x1xi32> to vector<128x128xi32>
    %134 = arith.select %119, %133, %131 : vector<128x128xi1>, vector<128x128xi32>
    %c0_46 = arith.constant 0 : index
    %c0_47 = arith.constant 0 : index
    %135 = vector.load %arg10[%c0_46, %c0_47] : memref<128x128xi32, #tpu.memory_space<vmem>>, vector<128x128xi32>
    tpu.vector_store %arg10[%c0_46, %c0_47], %134 {strides = array<i32>} : memref<128x128xi32, #tpu.memory_space<vmem>>, vector<128x128xi32>,
    %c0_i32_48 = arith.constant 0 : i32
    %136 = arith.cmpi eq, %arg1, %c0_i32_48 : i32
    %137 = arith.extui %136 : i1 to i32
    %c0_i32_49 = arith.constant 0 : i32
    %138 = arith.cmpi ne, %137, %c0_i32_49 : i32
    scf.if %138 {
      %139 = tpu.concatenate %63, %77, %91 in 1 : vector<128x1xf32>, vector<128x1xf32>, vector<128x1xf32> -> vector<128x3xf32>
      %c0_50 = arith.constant 0 : index
      %c0_51 = arith.constant 0 : index
      %140 = vector.load %arg7[%c0_50, %c0_51] : memref<128x3xf32, #tpu.memory_space<vmem>>, vector<128x3xf32>
      tpu.vector_store %arg7[%c0_50, %c0_51], %139 {strides = array<i32>} : memref<128x3xf32, #tpu.memory_space<vmem>>, vector<128x3xf32>,
      %141 = tpu.concatenate %71, %85, %99 in 1 : vector<128x1xi32>, vector<128x1xi32>, vector<128x1xi32> -> vector<128x3xi32>
      %c0_52 = arith.constant 0 : index
      %c0_53 = arith.constant 0 : index
      %142 = vector.load %arg8[%c0_52, %c0_53] : memref<128x3xi32, #tpu.memory_space<vmem>>, vector<128x3xi32>
      tpu.vector_store %arg8[%c0_52, %c0_53], %141 {strides = array<i32>} : memref<128x3xi32, #tpu.memory_space<vmem>>, vector<128x3xi32>,
    } else {
    }
    return
  }
  func.func @transform_0(%arg0: i32, %arg1: i32) -> (i32, i32) {
    %c0_i32 = arith.constant 0 : i32
    %c0_i32_0 = arith.constant 0 : i32
    return %arg0, %c0_i32 : i32, i32
  }
  func.func @transform_1(%arg0: i32, %arg1: i32) -> (i32, i32) {
    %c0_i32 = arith.constant 0 : i32
    %c0_i32_0 = arith.constant 0 : i32
    return %arg0, %c0_i32 : i32, i32
  }
  func.func @transform_2(%arg0: i32, %arg1: i32) -> (i32, i32) {
    %c0_i32 = arith.constant 0 : i32
    %c0_i32_0 = arith.constant 0 : i32
    return %arg0, %c0_i32 : i32, i32
  }
  func.func @transform_3(%arg0: i32, %arg1: i32) -> (i32, i32) {
    %c0_i32 = arith.constant 0 : i32
    %c0_i32_0 = arith.constant 0 : i32
    return %c0_i32, %arg1 : i32, i32
  }
  func.func @transform_4(%arg0: i32, %arg1: i32) -> (i32, i32) {
    %c0_i32 = arith.constant 0 : i32
    %c0_i32_0 = arith.constant 0 : i32
    return %c0_i32, %arg1 : i32, i32
  }
  func.func @transform_5(%arg0: i32, %arg1: i32) -> (i32, i32) {
    %c0_i32 = arith.constant 0 : i32
    %c0_i32_0 = arith.constant 0 : i32
    return %arg0, %c0_i32 : i32, i32
  }
  func.func @transform_6(%arg0: i32, %arg1: i32) -> (i32, i32) {
    %c0_i32 = arith.constant 0 : i32
    %c0_i32_0 = arith.constant 0 : i32
    return %arg0, %c0_i32 : i32, i32
  }
}

module attributes {stable_mosaic.version = 11 : i64} {
  func.func @_three_nn_kernel(%arg0: i32, %arg1: i32, %arg2: memref<128x3xf32, #tpu.memory_space<vmem>>, %arg3: memref<128x3xf32, #tpu.memory_space<vmem>>, %arg4: memref<128x1xi32, #tpu.memory_space<vmem>>, %arg5: memref<3x128xf32, #tpu.memory_space<vmem>>, %arg6: memref<1x128xi32, #tpu.memory_space<vmem>>, %arg7: memref<128x3xf32, #tpu.memory_space<vmem>>, %arg8: memref<128x3xi32, #tpu.memory_space<vmem>>, %arg9: memref<128x128xf32, #tpu.memory_space<vmem>>, %arg10: memref<128x128xi32, #tpu.memory_space<vmem>>) attributes {dimension_semantics = [#tpu.dimension_semantics<parallel>, #tpu.dimension_semantics<arbitrary>], iteration_bounds = array<i64: 1, 1>, scalar_prefetch = 0 : i64, scratch_operands = 2 : i64, tpu.core_type = #tpu.core_type<tc>, window_params = [{transform_indices = @transform_0, window_bounds = array<i64: 128, 3>}, {transform_indices = @transform_1, window_bounds = array<i64: 128, 3>}, {transform_indices = @transform_2, window_bounds = array<i64: 128, 1>}, {transform_indices = @transform_3, window_bounds = array<i64: 3, 128>}, {transform_indices = @transform_4, window_bounds = array<i64: 1, 128>}, {transform_indices = @transform_5, window_bounds = array<i64: 128, 3>}, {transform_indices = @transform_6, window_bounds = array<i64: 128, 3>}]} {
    %c0_i32 = arith.constant 0 : i32
    %0 = arith.cmpi eq, %arg1, %c0_i32 : i32
    %1 = arith.extui %0 : i1 to i32
    %c0_i32_0 = arith.constant 0 : i32
    %2 = arith.cmpi ne, %1, %c0_i32_0 : i32
    scf.if %2 {
      %139 = tpu.iota {dimensions = array<i32: 1>} : vector<128x128xi32>
      %cst_50 = arith.constant 1.000000e+10 : f32
      %140 = vector.broadcast %cst_50 : f32 to vector<128x128xf32>
      %c0_51 = arith.constant 0 : index
      %c0_52 = arith.constant 0 : index
      %141 = vector.load %arg9[%c0_51, %c0_52] : memref<128x128xf32, #tpu.memory_space<vmem>>, vector<128x128xf32>
      tpu.vector_store %arg9[%c0_51, %c0_52], %140 {strides = array<i32>} : memref<128x128xf32, #tpu.memory_space<vmem>>, vector<128x128xf32>,
      %c128_i32_53 = arith.constant 128 : i32
      %142 = vector.broadcast %c128_i32_53 : i32 to vector<128x128xi32>
      %143 = arith.addi %142, %139 : vector<128x128xi32>
      %c0_54 = arith.constant 0 : index
      %c0_55 = arith.constant 0 : index
      %144 = vector.load %arg10[%c0_54, %c0_55] : memref<128x128xi32, #tpu.memory_space<vmem>>, vector<128x128xi32>
      tpu.vector_store %arg10[%c0_54, %c0_55], %143 {strides = array<i32>} : memref<128x128xi32, #tpu.memory_space<vmem>>, vector<128x128xi32>,
    } else {
    }
    %c0 = arith.constant 0 : index
    %c0_1 = arith.constant 0 : index
    %3 = vector.load %arg2[%c0, %c0_1] : memref<128x3xf32, #tpu.memory_space<vmem>>, vector<128x1xf32>
    %c0_2 = arith.constant 0 : index
    %c1 = arith.constant 1 : index
    %4 = vector.load %arg2[%c0_2, %c1] : memref<128x3xf32, #tpu.memory_space<vmem>>, vector<128x1xf32>
    %c0_3 = arith.constant 0 : index
    %c2 = arith.constant 2 : index
    %5 = vector.load %arg2[%c0_3, %c2] : memref<128x3xf32, #tpu.memory_space<vmem>>, vector<128x1xf32>
    %c0_4 = arith.constant 0 : index
    %c0_5 = arith.constant 0 : index
    %6 = vector.load %arg3[%c0_4, %c0_5] : memref<128x3xf32, #tpu.memory_space<vmem>>, vector<128x1xf32>
    %c0_6 = arith.constant 0 : index
    %c1_7 = arith.constant 1 : index
    %7 = vector.load %arg3[%c0_6, %c1_7] : memref<128x3xf32, #tpu.memory_space<vmem>>, vector<128x1xf32>
    %c0_8 = arith.constant 0 : index
    %c2_9 = arith.constant 2 : index
    %8 = vector.load %arg3[%c0_8, %c2_9] : memref<128x3xf32, #tpu.memory_space<vmem>>, vector<128x1xf32>
    %c0_10 = arith.constant 0 : index
    %c0_11 = arith.constant 0 : index
    %9 = vector.load %arg4[%c0_10, %c0_11] : memref<128x1xi32, #tpu.memory_space<vmem>>, vector<128x1xi32>
    %c0_12 = arith.constant 0 : index
    %c0_13 = arith.constant 0 : index
    %10 = vector.load %arg5[%c0_12, %c0_13] : memref<3x128xf32, #tpu.memory_space<vmem>>, vector<1x128xf32>
    %c1_14 = arith.constant 1 : index
    %c0_15 = arith.constant 0 : index
    %11 = vector.load %arg5[%c1_14, %c0_15] : memref<3x128xf32, #tpu.memory_space<vmem>>, vector<1x128xf32>
    %c2_16 = arith.constant 2 : index
    %c0_17 = arith.constant 0 : index
    %12 = vector.load %arg5[%c2_16, %c0_17] : memref<3x128xf32, #tpu.memory_space<vmem>>, vector<1x128xf32>
    %c0_18 = arith.constant 0 : index
    %c0_19 = arith.constant 0 : index
    %13 = vector.load %arg6[%c0_18, %c0_19] : memref<1x128xi32, #tpu.memory_space<vmem>>, vector<1x128xi32>
    %14 = vector.broadcast %3 : vector<128x1xf32> to vector<128x128xf32>
    %15 = vector.broadcast %10 : vector<1x128xf32> to vector<128x128xf32>
    %16 = arith.subf %14, %15 : vector<128x128xf32>
    %17 = vector.broadcast %4 : vector<128x1xf32> to vector<128x128xf32>
    %18 = vector.broadcast %11 : vector<1x128xf32> to vector<128x128xf32>
    %19 = arith.subf %17, %18 : vector<128x128xf32>
    %20 = vector.broadcast %5 : vector<128x1xf32> to vector<128x128xf32>
    %21 = vector.broadcast %12 : vector<1x128xf32> to vector<128x128xf32>
    %22 = arith.subf %20, %21 : vector<128x128xf32>
    %23 = arith.mulf %16, %16 : vector<128x128xf32>
    %24 = arith.mulf %19, %19 : vector<128x128xf32>
    %25 = arith.addf %23, %24 : vector<128x128xf32>
    %26 = arith.mulf %22, %22 : vector<128x128xf32>
    %27 = arith.addf %25, %26 : vector<128x128xf32>
    %28 = vector.broadcast %6 : vector<128x1xf32> to vector<128x128xf32>
    %29 = vector.broadcast %10 : vector<1x128xf32> to vector<128x128xf32>
    %30 = arith.subf %28, %29 : vector<128x128xf32>
    %31 = vector.broadcast %7 : vector<128x1xf32> to vector<128x128xf32>
    %32 = vector.broadcast %11 : vector<1x128xf32> to vector<128x128xf32>
    %33 = arith.subf %31, %32 : vector<128x128xf32>
    %34 = vector.broadcast %8 : vector<128x1xf32> to vector<128x128xf32>
    %35 = vector.broadcast %12 : vector<1x128xf32> to vector<128x128xf32>
    %36 = arith.subf %34, %35 : vector<128x128xf32>
    %37 = math.absf %30 : vector<128x128xf32>
    %cst = arith.constant 8.000000e-01 : f32
    %38 = vector.broadcast %cst : f32 to vector<128x128xf32>
    %39 = arith.cmpf ole, %37, %38 : vector<128x128xf32>
    %40 = math.absf %33 : vector<128x128xf32>
    %cst_20 = arith.constant 8.000000e-01 : f32
    %41 = vector.broadcast %cst_20 : f32 to vector<128x128xf32>
    %42 = arith.cmpf ole, %40, %41 : vector<128x128xf32>
    %43 = arith.andi %39, %42 : vector<128x128xi1>
    %44 = math.absf %36 : vector<128x128xf32>
    %cst_21 = arith.constant 8.000000e-01 : f32
    %45 = vector.broadcast %cst_21 : f32 to vector<128x128xf32>
    %46 = arith.cmpf ole, %44, %45 : vector<128x128xf32>
    %47 = arith.andi %43, %46 : vector<128x128xi1>
    %48 = vector.broadcast %9 : vector<128x1xi32> to vector<128x128xi32>
    %49 = vector.broadcast %13 : vector<1x128xi32> to vector<128x128xi32>
    %50 = arith.cmpi eq, %48, %49 : vector<128x128xi32>
    %51 = arith.andi %47, %50 : vector<128x128xi1>
    %cst_22 = arith.constant 1.000000e+10 : f32
    %52 = vector.broadcast %cst_22 : f32 to vector<128x128xf32>
    %53 = arith.select %51, %27, %52 : vector<128x128xi1>, vector<128x128xf32>
    %c128_i32 = arith.constant 128 : i32
    %54 = arith.muli %arg1, %c128_i32 : i32
    %55 = tpu.iota {dimensions = array<i32: 1>} : vector<128x128xi32>
    %56 = vector.broadcast %54 : i32 to vector<128x128xi32>
    %57 = arith.addi %56, %55 : vector<128x128xi32>
    %c0_23 = arith.constant 0 : index
    %c0_24 = arith.constant 0 : index
    %58 = vector.load %arg9[%c0_23, %c0_24] : memref<128x128xf32, #tpu.memory_space<vmem>>, vector<128x128xf32>
    %59 = tpu.concatenate %58, %53 in 1 : vector<128x128xf32>, vector<128x128xf32> -> vector<128x256xf32>
    %c0_25 = arith.constant 0 : index
    %c0_26 = arith.constant 0 : index
    %60 = vector.load %arg10[%c0_25, %c0_26] : memref<128x128xi32, #tpu.memory_space<vmem>>, vector<128x128xi32>
    %61 = tpu.concatenate %60, %57 in 1 : vector<128x128xi32>, vector<128x128xi32> -> vector<128x256xi32>
    %cst_27 = arith.constant dense<0x7F800000> : vector<128xf32>
    %62 = vector.multi_reduction <minimumf>, %59, %cst_27 [1] : vector<128x256xf32> to vector<128xf32>
    %63 = vector.shape_cast %62 : vector<128xf32> to vector<128x1xf32>
    %64 = vector.broadcast %63 : vector<128x1xf32> to vector<128x256xf32>
    %65 = arith.cmpf oeq, %59, %64 : vector<128x256xf32>
    %66 = arith.sitofp %61 : vector<128x256xi32> to vector<128x256xf32>
    %cst_28 = arith.constant 1.000000e+09 : f32
    %67 = vector.broadcast %cst_28 : f32 to vector<128x256xf32>
    %68 = arith.select %65, %66, %67 : vector<128x256xi1>, vector<128x256xf32>
    %cst_29 = arith.constant dense<0x7F800000> : vector<128xf32>
    %69 = vector.multi_reduction <minimumf>, %68, %cst_29 [1] : vector<128x256xf32> to vector<128xf32>
    %70 = vector.shape_cast %69 : vector<128xf32> to vector<128x1xf32>
    %71 = arith.fptosi %70 : vector<128x1xf32> to vector<128x1xi32>
    %72 = vector.broadcast %71 : vector<128x1xi32> to vector<128x256xi32>
    %73 = arith.cmpi eq, %61, %72 : vector<128x256xi32>
    %cst_30 = arith.constant 1.000000e+10 : f32
    %74 = vector.broadcast %cst_30 : f32 to vector<128x256xf32>
    %75 = arith.select %73, %74, %59 : vector<128x256xi1>, vector<128x256xf32>
    %cst_31 = arith.constant dense<0x7F800000> : vector<128xf32>
    %76 = vector.multi_reduction <minimumf>, %75, %cst_31 [1] : vector<128x256xf32> to vector<128xf32>
    %77 = vector.shape_cast %76 : vector<128xf32> to vector<128x1xf32>
    %78 = vector.broadcast %77 : vector<128x1xf32> to vector<128x256xf32>
    %79 = arith.cmpf oeq, %75, %78 : vector<128x256xf32>
    %80 = arith.sitofp %61 : vector<128x256xi32> to vector<128x256xf32>
    %cst_32 = arith.constant 1.000000e+09 : f32
    %81 = vector.broadcast %cst_32 : f32 to vector<128x256xf32>
    %82 = arith.select %79, %80, %81 : vector<128x256xi1>, vector<128x256xf32>
    %cst_33 = arith.constant dense<0x7F800000> : vector<128xf32>
    %83 = vector.multi_reduction <minimumf>, %82, %cst_33 [1] : vector<128x256xf32> to vector<128xf32>
    %84 = vector.shape_cast %83 : vector<128xf32> to vector<128x1xf32>
    %85 = arith.fptosi %84 : vector<128x1xf32> to vector<128x1xi32>
    %86 = vector.broadcast %85 : vector<128x1xi32> to vector<128x256xi32>
    %87 = arith.cmpi eq, %61, %86 : vector<128x256xi32>
    %cst_34 = arith.constant 1.000000e+10 : f32
    %88 = vector.broadcast %cst_34 : f32 to vector<128x256xf32>
    %89 = arith.select %87, %88, %75 : vector<128x256xi1>, vector<128x256xf32>
    %cst_35 = arith.constant dense<0x7F800000> : vector<128xf32>
    %90 = vector.multi_reduction <minimumf>, %89, %cst_35 [1] : vector<128x256xf32> to vector<128xf32>
    %91 = vector.shape_cast %90 : vector<128xf32> to vector<128x1xf32>
    %92 = vector.broadcast %91 : vector<128x1xf32> to vector<128x256xf32>
    %93 = arith.cmpf oeq, %89, %92 : vector<128x256xf32>
    %94 = arith.sitofp %61 : vector<128x256xi32> to vector<128x256xf32>
    %cst_36 = arith.constant 1.000000e+09 : f32
    %95 = vector.broadcast %cst_36 : f32 to vector<128x256xf32>
    %96 = arith.select %93, %94, %95 : vector<128x256xi1>, vector<128x256xf32>
    %cst_37 = arith.constant dense<0x7F800000> : vector<128xf32>
    %97 = vector.multi_reduction <minimumf>, %96, %cst_37 [1] : vector<128x256xf32> to vector<128xf32>
    %98 = vector.shape_cast %97 : vector<128xf32> to vector<128x1xf32>
    %99 = arith.fptosi %98 : vector<128x1xf32> to vector<128x1xi32>
    %100 = tpu.iota {dimensions = array<i32: 1>} : vector<128x128xi32>
    %c0_i32_38 = arith.constant 0 : i32
    %101 = vector.broadcast %c0_i32_38 : i32 to vector<128x128xi32>
    %102 = arith.cmpi eq, %100, %101 : vector<128x128xi32>
    %c1_i32 = arith.constant 1 : i32
    %103 = vector.broadcast %c1_i32 : i32 to vector<128x128xi32>
    %104 = arith.cmpi eq, %100, %103 : vector<128x128xi32>
    %c2_i32 = arith.constant 2 : i32
    %105 = vector.broadcast %c2_i32 : i32 to vector<128x128xi32>
    %106 = arith.cmpi eq, %100, %105 : vector<128x128xi32>
    %cst_39 = arith.constant 1.000000e+10 : f32
    %107 = vector.shape_cast %91 : vector<128x1xf32> to vector<128x1xf32>
    %108 = vector.broadcast %107 : vector<128x1xf32> to vector<128x128xf32>
    %109 = vector.broadcast %cst_39 : f32 to vector<128x128xf32>
    %110 = arith.select %106, %108, %109 : vector<128x128xi1>, vector<128x128xf32>
    %111 = vector.shape_cast %77 : vector<128x1xf32> to vector<128x1xf32>
    %112 = vector.broadcast %111 : vector<128x1xf32> to vector<128x128xf32>
    %113 = arith.select %104, %112, %110 : vector<128x128xi1>, vector<128x128xf32>
    %114 = vector.shape_cast %63 : vector<128x1xf32> to vector<128x1xf32>
    %115 = vector.broadcast %114 : vector<128x1xf32> to vector<128x128xf32>
    %116 = arith.select %102, %115, %113 : vector<128x128xi1>, vector<128x128xf32>
    %c0_40 = arith.constant 0 : index
    %c0_41 = arith.constant 0 : index
    %117 = vector.load %arg9[%c0_40, %c0_41] : memref<128x128xf32, #tpu.memory_space<vmem>>, vector<128x128xf32>
    tpu.vector_store %arg9[%c0_40, %c0_41], %116 {strides = array<i32>} : memref<128x128xf32, #tpu.memory_space<vmem>>, vector<128x128xf32>,
    %c0_i32_42 = arith.constant 0 : i32
    %118 = vector.broadcast %c0_i32_42 : i32 to vector<128x128xi32>
    %119 = arith.cmpi eq, %100, %118 : vector<128x128xi32>
    %c1_i32_43 = arith.constant 1 : i32
    %120 = vector.broadcast %c1_i32_43 : i32 to vector<128x128xi32>
    %121 = arith.cmpi eq, %100, %120 : vector<128x128xi32>
    %c2_i32_44 = arith.constant 2 : i32
    %122 = vector.broadcast %c2_i32_44 : i32 to vector<128x128xi32>
    %123 = arith.cmpi eq, %100, %122 : vector<128x128xi32>
    %c128_i32_45 = arith.constant 128 : i32
    %124 = vector.broadcast %c128_i32_45 : i32 to vector<128x128xi32>
    %125 = arith.addi %124, %100 : vector<128x128xi32>
    %126 = vector.shape_cast %99 : vector<128x1xi32> to vector<128x1xi32>
    %127 = vector.broadcast %126 : vector<128x1xi32> to vector<128x128xi32>
    %128 = arith.select %123, %127, %125 : vector<128x128xi1>, vector<128x128xi32>
    %129 = vector.shape_cast %85 : vector<128x1xi32> to vector<128x1xi32>
    %130 = vector.broadcast %129 : vector<128x1xi32> to vector<128x128xi32>
    %131 = arith.select %121, %130, %128 : vector<128x128xi1>, vector<128x128xi32>
    %132 = vector.shape_cast %71 : vector<128x1xi32> to vector<128x1xi32>
    %133 = vector.broadcast %132 : vector<128x1xi32> to vector<128x128xi32>
    %134 = arith.select %119, %133, %131 : vector<128x128xi1>, vector<128x128xi32>
    %c0_46 = arith.constant 0 : index
    %c0_47 = arith.constant 0 : index
    %135 = vector.load %arg10[%c0_46, %c0_47] : memref<128x128xi32, #tpu.memory_space<vmem>>, vector<128x128xi32>
    tpu.vector_store %arg10[%c0_46, %c0_47], %134 {strides = array<i32>} : memref<128x128xi32, #tpu.memory_space<vmem>>, vector<128x128xi32>,
    %c0_i32_48 = arith.constant 0 : i32
    %136 = arith.cmpi eq, %arg1, %c0_i32_48 : i32
    %137 = arith.extui %136 : i1 to i32
    %c0_i32_49 = arith.constant 0 : i32
    %138 = arith.cmpi ne, %137, %c0_i32_49 : i32
    scf.if %138 {
      %139 = tpu.concatenate %63, %77, %91 in 1 : vector<128x1xf32>, vector<128x1xf32>, vector<128x1xf32> -> vector<128x3xf32>
      %c0_50 = arith.constant 0 : index
      %c0_51 = arith.constant 0 : index
      %140 = vector.load %arg7[%c0_50, %c0_51] : memref<128x3xf32, #tpu.memory_space<vmem>>, vector<128x3xf32>
      tpu.vector_store %arg7[%c0_50, %c0_51], %139 {strides = array<i32>} : memref<128x3xf32, #tpu.memory_space<vmem>>, vector<128x3xf32>,
      %141 = tpu.concatenate %71, %85, %99 in 1 : vector<128x1xi32>, vector<128x1xi32>, vector<128x1xi32> -> vector<128x3xi32>
      %c0_52 = arith.constant 0 : index
      %c0_53 = arith.constant 0 : index
      %142 = vector.load %arg8[%c0_52, %c0_53] : memref<128x3xi32, #tpu.memory_space<vmem>>, vector<128x3xi32>
      tpu.vector_store %arg8[%c0_52, %c0_53], %141 {strides = array<i32>} : memref<128x3xi32, #tpu.memory_space<vmem>>, vector<128x3xi32>,
    } else {
    }
    return
  }
  func.func @transform_0(%arg0: i32, %arg1: i32) -> (i32, i32) {
    %c0_i32 = arith.constant 0 : i32
    %c0_i32_0 = arith.constant 0 : i32
    return %arg0, %c0_i32 : i32, i32
  }
  func.func @transform_1(%arg0: i32, %arg1: i32) -> (i32, i32) {
    %c0_i32 = arith.constant 0 : i32
    %c0_i32_0 = arith.constant 0 : i32
    return %arg0, %c0_i32 : i32, i32
  }
  func.func @transform_2(%arg0: i32, %arg1: i32) -> (i32, i32) {
    %c0_i32 = arith.constant 0 : i32
    %c0_i32_0 = arith.constant 0 : i32
    return %arg0, %c0_i32 : i32, i32
  }
  func.func @transform_3(%arg0: i32, %arg1: i32) -> (i32, i32) {
    %c0_i32 = arith.constant 0 : i32
    %c0_i32_0 = arith.constant 0 : i32
    return %c0_i32, %arg1 : i32, i32
  }
  func.func @transform_4(%arg0: i32, %arg1: i32) -> (i32, i32) {
    %c0_i32 = arith.constant 0 : i32
    %c0_i32_0 = arith.constant 0 : i32
    return %c0_i32, %arg1 : i32, i32
  }
  func.func @transform_5(%arg0: i32, %arg1: i32) -> (i32, i32) {
    %c0_i32 = arith.constant 0 : i32
    %c0_i32_0 = arith.constant 0 : i32
    return %arg0, %c0_i32 : i32, i32
  }
  func.func @transform_6(%arg0: i32, %arg1: i32) -> (i32, i32) {
    %c0_i32 = arith.constant 0 : i32
    %c0_i32_0 = arith.constant 0 : i32
    return %arg0, %c0_i32 : i32, i32
  }
}

module attributes {stable_mosaic.version = 11 : i64} {
  func.func @_matmul_stats_kernel(%arg0: i32, %arg1: memref<16x136xbf16, #tpu.memory_space<vmem>>, %arg2: memref<136x256xbf16, #tpu.memory_space<vmem>>, %arg3: memref<16x256xf32, #tpu.memory_space<vmem>>, %arg4: memref<1x2x256xf32, #tpu.memory_space<vmem>>) attributes {dimension_semantics = [#tpu.dimension_semantics<parallel>], iteration_bounds = array<i64: 1>, scalar_prefetch = 0 : i64, scratch_operands = 0 : i64, tpu.core_type = #tpu.core_type<tc>, window_params = [{transform_indices = @transform_0, window_bounds = array<i64: 16, 136>}, {pipeline_mode = #tpu.pipeline_mode<synchronous>, transform_indices = @transform_1, window_bounds = array<i64: 136, 256>}, {transform_indices = @transform_2, window_bounds = array<i64: 16, 256>}, {transform_indices = @transform_3, window_bounds = array<i64: 1, 2, 256>}]} {
    %c0 = arith.constant 0 : index
    %c0_0 = arith.constant 0 : index
    %0 = vector.load %arg1[%c0, %c0_0] : memref<16x136xbf16, #tpu.memory_space<vmem>>, vector<16x136xbf16>
    %c0_1 = arith.constant 0 : index
    %c0_2 = arith.constant 0 : index
    %1 = vector.load %arg2[%c0_1, %c0_2] : memref<136x256xbf16, #tpu.memory_space<vmem>>, vector<136x256xbf16>
    %cst = arith.constant dense<0.000000e+00> : vector<16x256xf32>
    %2 = tpu.matmul %0, %1, %cst {dimension_numbers = #tpu.dot_dimension_numbers<[1], [0], [0], [1], [0, 0, 1, 1], [], []>} : vector<16x136xbf16>, vector<136x256xbf16>, vector<16x256xf32> -> vector<16x256xf32>
    %c0_3 = arith.constant 0 : index
    %c0_4 = arith.constant 0 : index
    %3 = vector.load %arg3[%c0_3, %c0_4] : memref<16x256xf32, #tpu.memory_space<vmem>>, vector<16x256xf32>
    tpu.vector_store %arg3[%c0_3, %c0_4], %2 {strides = array<i32>} : memref<16x256xf32, #tpu.memory_space<vmem>>, vector<16x256xf32>,
    %cst_5 = arith.constant dense<0.000000e+00> : vector<256xf32>
    %4 = vector.multi_reduction <add>, %2, %cst_5 [0] : vector<16x256xf32> to vector<256xf32>
    %5 = vector.shape_cast %4 : vector<256xf32> to vector<1x256xf32>
    %6 = arith.mulf %2, %2 : vector<16x256xf32>
    %cst_6 = arith.constant dense<0.000000e+00> : vector<256xf32>
    %7 = vector.multi_reduction <add>, %6, %cst_6 [0] : vector<16x256xf32> to vector<256xf32>
    %8 = vector.shape_cast %7 : vector<256xf32> to vector<1x256xf32>
    %9 = tpu.concatenate %5, %8 in 0 : vector<1x256xf32>, vector<1x256xf32> -> vector<2x256xf32>
    %c0_7 = arith.constant 0 : index
    %c0_8 = arith.constant 0 : index
    %c0_9 = arith.constant 0 : index
    %10 = vector.load %arg4[%c0_7, %c0_8, %c0_9] : memref<1x2x256xf32, #tpu.memory_space<vmem>>, vector<1x2x256xf32>
    %11 = vector.shape_cast %10 : vector<1x2x256xf32> to vector<2x256xf32>
    %12 = vector.shape_cast %9 : vector<2x256xf32> to vector<1x2x256xf32>
    tpu.vector_store %arg4[%c0_7, %c0_8, %c0_9], %12 {strides = array<i32>} : memref<1x2x256xf32, #tpu.memory_space<vmem>>, vector<1x2x256xf32>,
    return
  }
  func.func @transform_0(%arg0: i32) -> (i32, i32) {
    %c0_i32 = arith.constant 0 : i32
    %c0_i32_0 = arith.constant 0 : i32
    return %arg0, %c0_i32 : i32, i32
  }
  func.func @transform_1(%arg0: i32) -> (i32, i32) {
    %c0_i32 = arith.constant 0 : i32
    %c0_i32_0 = arith.constant 0 : i32
    %c0_i32_1 = arith.constant 0 : i32
    return %c0_i32, %c0_i32_0 : i32, i32
  }
  func.func @transform_2(%arg0: i32) -> (i32, i32) {
    %c0_i32 = arith.constant 0 : i32
    %c0_i32_0 = arith.constant 0 : i32
    return %arg0, %c0_i32 : i32, i32
  }
  func.func @transform_3(%arg0: i32) -> (i32, i32, i32) {
    %c0_i32 = arith.constant 0 : i32
    %c0_i32_0 = arith.constant 0 : i32
    %c0_i32_1 = arith.constant 0 : i32
    return %arg0, %c0_i32, %c0_i32_0 : i32, i32, i32
  }
}

module attributes {stable_mosaic.version = 11 : i64} {
  func.func @_bn_relu_kernel(%arg0: i32, %arg1: memref<16x128xf32, #tpu.memory_space<vmem>>, %arg2: memref<1x128xf32, #tpu.memory_space<vmem>>, %arg3: memref<1x128xf32, #tpu.memory_space<vmem>>, %arg4: memref<16x128xf32, #tpu.memory_space<vmem>>) attributes {dimension_semantics = [#tpu.dimension_semantics<parallel>], iteration_bounds = array<i64: 1>, scalar_prefetch = 0 : i64, scratch_operands = 0 : i64, tpu.core_type = #tpu.core_type<tc>, window_params = [{transform_indices = @transform_0, window_bounds = array<i64: 16, 128>}, {pipeline_mode = #tpu.pipeline_mode<synchronous>, transform_indices = @transform_1, window_bounds = array<i64: 1, 128>}, {pipeline_mode = #tpu.pipeline_mode<synchronous>, transform_indices = @transform_2, window_bounds = array<i64: 1, 128>}, {transform_indices = @transform_3, window_bounds = array<i64: 16, 128>}]} {
    %c0 = arith.constant 0 : index
    %c0_0 = arith.constant 0 : index
    %0 = vector.load %arg1[%c0, %c0_0] : memref<16x128xf32, #tpu.memory_space<vmem>>, vector<16x128xf32>
    %c0_1 = arith.constant 0 : index
    %c0_2 = arith.constant 0 : index
    %1 = vector.load %arg2[%c0_1, %c0_2] : memref<1x128xf32, #tpu.memory_space<vmem>>, vector<1x128xf32>
    %2 = vector.broadcast %1 : vector<1x128xf32> to vector<16x128xf32>
    %3 = arith.mulf %0, %2 : vector<16x128xf32>
    %c0_3 = arith.constant 0 : index
    %c0_4 = arith.constant 0 : index
    %4 = vector.load %arg3[%c0_3, %c0_4] : memref<1x128xf32, #tpu.memory_space<vmem>>, vector<1x128xf32>
    %5 = vector.broadcast %4 : vector<1x128xf32> to vector<16x128xf32>
    %6 = arith.addf %3, %5 : vector<16x128xf32>
    %cst = arith.constant 0.000000e+00 : f32
    %7 = vector.broadcast %cst : f32 to vector<16x128xf32>
    %8 = arith.maximumf %6, %7 : vector<16x128xf32>
    %c0_5 = arith.constant 0 : index
    %c0_6 = arith.constant 0 : index
    %9 = vector.load %arg4[%c0_5, %c0_6] : memref<16x128xf32, #tpu.memory_space<vmem>>, vector<16x128xf32>
    tpu.vector_store %arg4[%c0_5, %c0_6], %8 {strides = array<i32>} : memref<16x128xf32, #tpu.memory_space<vmem>>, vector<16x128xf32>,
    return
  }
  func.func @transform_0(%arg0: i32) -> (i32, i32) {
    %c0_i32 = arith.constant 0 : i32
    %c0_i32_0 = arith.constant 0 : i32
    return %arg0, %c0_i32 : i32, i32
  }
  func.func @transform_1(%arg0: i32) -> (i32, i32) {
    %c0_i32 = arith.constant 0 : i32
    %c0_i32_0 = arith.constant 0 : i32
    %c0_i32_1 = arith.constant 0 : i32
    return %c0_i32, %c0_i32_0 : i32, i32
  }
  func.func @transform_2(%arg0: i32) -> (i32, i32) {
    %c0_i32 = arith.constant 0 : i32
    %c0_i32_0 = arith.constant 0 : i32
    %c0_i32_1 = arith.constant 0 : i32
    return %c0_i32, %c0_i32_0 : i32, i32
  }
  func.func @transform_3(%arg0: i32) -> (i32, i32) {
    %c0_i32 = arith.constant 0 : i32
    %c0_i32_0 = arith.constant 0 : i32
    return %arg0, %c0_i32 : i32, i32
  }
}

module attributes {stable_mosaic.version = 11 : i64} {
  func.func @_bn_relu_matmul_stats_kernel(%arg0: i32, %arg1: memref<16x256xf32, #tpu.memory_space<vmem>>, %arg2: memref<1x256xf32, #tpu.memory_space<vmem>>, %arg3: memref<1x256xf32, #tpu.memory_space<vmem>>, %arg4: memref<256x128xbf16, #tpu.memory_space<vmem>>, %arg5: memref<16x128xf32, #tpu.memory_space<vmem>>, %arg6: memref<1x2x128xf32, #tpu.memory_space<vmem>>) attributes {dimension_semantics = [#tpu.dimension_semantics<parallel>], iteration_bounds = array<i64: 1>, scalar_prefetch = 0 : i64, scratch_operands = 0 : i64, tpu.core_type = #tpu.core_type<tc>, window_params = [{transform_indices = @transform_0, window_bounds = array<i64: 16, 256>}, {pipeline_mode = #tpu.pipeline_mode<synchronous>, transform_indices = @transform_1, window_bounds = array<i64: 1, 256>}, {pipeline_mode = #tpu.pipeline_mode<synchronous>, transform_indices = @transform_2, window_bounds = array<i64: 1, 256>}, {pipeline_mode = #tpu.pipeline_mode<synchronous>, transform_indices = @transform_3, window_bounds = array<i64: 256, 128>}, {transform_indices = @transform_4, window_bounds = array<i64: 16, 128>}, {transform_indices = @transform_5, window_bounds = array<i64: 1, 2, 128>}]} {
    %c0 = arith.constant 0 : index
    %c0_0 = arith.constant 0 : index
    %0 = vector.load %arg1[%c0, %c0_0] : memref<16x256xf32, #tpu.memory_space<vmem>>, vector<16x256xf32>
    %c0_1 = arith.constant 0 : index
    %c0_2 = arith.constant 0 : index
    %1 = vector.load %arg2[%c0_1, %c0_2] : memref<1x256xf32, #tpu.memory_space<vmem>>, vector<1x256xf32>
    %2 = vector.broadcast %1 : vector<1x256xf32> to vector<16x256xf32>
    %3 = arith.mulf %0, %2 : vector<16x256xf32>
    %c0_3 = arith.constant 0 : index
    %c0_4 = arith.constant 0 : index
    %4 = vector.load %arg3[%c0_3, %c0_4] : memref<1x256xf32, #tpu.memory_space<vmem>>, vector<1x256xf32>
    %5 = vector.broadcast %4 : vector<1x256xf32> to vector<16x256xf32>
    %6 = arith.addf %3, %5 : vector<16x256xf32>
    %cst = arith.constant 0.000000e+00 : f32
    %7 = vector.broadcast %cst : f32 to vector<16x256xf32>
    %8 = arith.maximumf %6, %7 : vector<16x256xf32>
    %c16_i32 = arith.constant 16 : i32
    %9 = arith.muli %arg0, %c16_i32 : i32
    %10 = tpu.iota {dimensions = array<i32: 0>} : vector<16x1xi32>
    %11 = vector.broadcast %9 : i32 to vector<16x1xi32>
    %12 = arith.addi %11, %10 : vector<16x1xi32>
    %c16_i32_5 = arith.constant 16 : i32
    %13 = vector.broadcast %c16_i32_5 : i32 to vector<16x1xi32>
    %14 = arith.cmpi slt, %12, %13 : vector<16x1xi32>
    %cst_6 = arith.constant 0.000000e+00 : f32
    %15 = vector.shape_cast %14 : vector<16x1xi1> to vector<16x1xi1>
    %16 = vector.broadcast %15 : vector<16x1xi1> to vector<16x256xi1>
    %17 = vector.broadcast %cst_6 : f32 to vector<16x256xf32>
    %18 = arith.select %16, %8, %17 : vector<16x256xi1>, vector<16x256xf32>
    %19 = arith.truncf %18 : vector<16x256xf32> to vector<16x256xbf16>
    %c0_7 = arith.constant 0 : index
    %c0_8 = arith.constant 0 : index
    %20 = vector.load %arg4[%c0_7, %c0_8] : memref<256x128xbf16, #tpu.memory_space<vmem>>, vector<256x128xbf16>
    %cst_9 = arith.constant dense<0.000000e+00> : vector<16x128xf32>
    %21 = tpu.matmul %19, %20, %cst_9 {dimension_numbers = #tpu.dot_dimension_numbers<[1], [0], [0], [1], [0, 0, 1, 1], [], []>} : vector<16x256xbf16>, vector<256x128xbf16>, vector<16x128xf32> -> vector<16x128xf32>
    %c0_10 = arith.constant 0 : index
    %c0_11 = arith.constant 0 : index
    %22 = vector.load %arg5[%c0_10, %c0_11] : memref<16x128xf32, #tpu.memory_space<vmem>>, vector<16x128xf32>
    tpu.vector_store %arg5[%c0_10, %c0_11], %21 {strides = array<i32>} : memref<16x128xf32, #tpu.memory_space<vmem>>, vector<16x128xf32>,
    %cst_12 = arith.constant dense<0.000000e+00> : vector<128xf32>
    %23 = vector.multi_reduction <add>, %21, %cst_12 [0] : vector<16x128xf32> to vector<128xf32>
    %24 = vector.shape_cast %23 : vector<128xf32> to vector<1x128xf32>
    %25 = arith.mulf %21, %21 : vector<16x128xf32>
    %cst_13 = arith.constant dense<0.000000e+00> : vector<128xf32>
    %26 = vector.multi_reduction <add>, %25, %cst_13 [0] : vector<16x128xf32> to vector<128xf32>
    %27 = vector.shape_cast %26 : vector<128xf32> to vector<1x128xf32>
    %28 = tpu.concatenate %24, %27 in 0 : vector<1x128xf32>, vector<1x128xf32> -> vector<2x128xf32>
    %c0_14 = arith.constant 0 : index
    %c0_15 = arith.constant 0 : index
    %c0_16 = arith.constant 0 : index
    %29 = vector.load %arg6[%c0_14, %c0_15, %c0_16] : memref<1x2x128xf32, #tpu.memory_space<vmem>>, vector<1x2x128xf32>
    %30 = vector.shape_cast %29 : vector<1x2x128xf32> to vector<2x128xf32>
    %31 = vector.shape_cast %28 : vector<2x128xf32> to vector<1x2x128xf32>
    tpu.vector_store %arg6[%c0_14, %c0_15, %c0_16], %31 {strides = array<i32>} : memref<1x2x128xf32, #tpu.memory_space<vmem>>, vector<1x2x128xf32>,
    return
  }
  func.func @transform_0(%arg0: i32) -> (i32, i32) {
    %c0_i32 = arith.constant 0 : i32
    %c0_i32_0 = arith.constant 0 : i32
    return %arg0, %c0_i32 : i32, i32
  }
  func.func @transform_1(%arg0: i32) -> (i32, i32) {
    %c0_i32 = arith.constant 0 : i32
    %c0_i32_0 = arith.constant 0 : i32
    %c0_i32_1 = arith.constant 0 : i32
    return %c0_i32, %c0_i32_0 : i32, i32
  }
  func.func @transform_2(%arg0: i32) -> (i32, i32) {
    %c0_i32 = arith.constant 0 : i32
    %c0_i32_0 = arith.constant 0 : i32
    %c0_i32_1 = arith.constant 0 : i32
    return %c0_i32, %c0_i32_0 : i32, i32
  }
  func.func @transform_3(%arg0: i32) -> (i32, i32) {
    %c0_i32 = arith.constant 0 : i32
    %c0_i32_0 = arith.constant 0 : i32
    %c0_i32_1 = arith.constant 0 : i32
    return %c0_i32, %c0_i32_0 : i32, i32
  }
  func.func @transform_4(%arg0: i32) -> (i32, i32) {
    %c0_i32 = arith.constant 0 : i32
    %c0_i32_0 = arith.constant 0 : i32
    return %arg0, %c0_i32 : i32, i32
  }
  func.func @transform_5(%arg0: i32) -> (i32, i32, i32) {
    %c0_i32 = arith.constant 0 : i32
    %c0_i32_0 = arith.constant 0 : i32
    %c0_i32_1 = arith.constant 0 : i32
    return %arg0, %c0_i32, %c0_i32_0 : i32, i32, i32
  }
}

module attributes {stable_mosaic.version = 11 : i64} {
  func.func @_bn_relu_matmul_stats_kernel(%arg0: i32, %arg1: memref<16x128xf32, #tpu.memory_space<vmem>>, %arg2: memref<1x128xf32, #tpu.memory_space<vmem>>, %arg3: memref<1x128xf32, #tpu.memory_space<vmem>>, %arg4: memref<128x128xbf16, #tpu.memory_space<vmem>>, %arg5: memref<16x128xf32, #tpu.memory_space<vmem>>, %arg6: memref<1x2x128xf32, #tpu.memory_space<vmem>>) attributes {dimension_semantics = [#tpu.dimension_semantics<parallel>], iteration_bounds = array<i64: 1>, scalar_prefetch = 0 : i64, scratch_operands = 0 : i64, tpu.core_type = #tpu.core_type<tc>, window_params = [{transform_indices = @transform_0, window_bounds = array<i64: 16, 128>}, {pipeline_mode = #tpu.pipeline_mode<synchronous>, transform_indices = @transform_1, window_bounds = array<i64: 1, 128>}, {pipeline_mode = #tpu.pipeline_mode<synchronous>, transform_indices = @transform_2, window_bounds = array<i64: 1, 128>}, {pipeline_mode = #tpu.pipeline_mode<synchronous>, transform_indices = @transform_3, window_bounds = array<i64: 128, 128>}, {transform_indices = @transform_4, window_bounds = array<i64: 16, 128>}, {transform_indices = @transform_5, window_bounds = array<i64: 1, 2, 128>}]} {
    %c0 = arith.constant 0 : index
    %c0_0 = arith.constant 0 : index
    %0 = vector.load %arg1[%c0, %c0_0] : memref<16x128xf32, #tpu.memory_space<vmem>>, vector<16x128xf32>
    %c0_1 = arith.constant 0 : index
    %c0_2 = arith.constant 0 : index
    %1 = vector.load %arg2[%c0_1, %c0_2] : memref<1x128xf32, #tpu.memory_space<vmem>>, vector<1x128xf32>
    %2 = vector.broadcast %1 : vector<1x128xf32> to vector<16x128xf32>
    %3 = arith.mulf %0, %2 : vector<16x128xf32>
    %c0_3 = arith.constant 0 : index
    %c0_4 = arith.constant 0 : index
    %4 = vector.load %arg3[%c0_3, %c0_4] : memref<1x128xf32, #tpu.memory_space<vmem>>, vector<1x128xf32>
    %5 = vector.broadcast %4 : vector<1x128xf32> to vector<16x128xf32>
    %6 = arith.addf %3, %5 : vector<16x128xf32>
    %cst = arith.constant 0.000000e+00 : f32
    %7 = vector.broadcast %cst : f32 to vector<16x128xf32>
    %8 = arith.maximumf %6, %7 : vector<16x128xf32>
    %c16_i32 = arith.constant 16 : i32
    %9 = arith.muli %arg0, %c16_i32 : i32
    %10 = tpu.iota {dimensions = array<i32: 0>} : vector<16x1xi32>
    %11 = vector.broadcast %9 : i32 to vector<16x1xi32>
    %12 = arith.addi %11, %10 : vector<16x1xi32>
    %c16_i32_5 = arith.constant 16 : i32
    %13 = vector.broadcast %c16_i32_5 : i32 to vector<16x1xi32>
    %14 = arith.cmpi slt, %12, %13 : vector<16x1xi32>
    %cst_6 = arith.constant 0.000000e+00 : f32
    %15 = vector.shape_cast %14 : vector<16x1xi1> to vector<16x1xi1>
    %16 = vector.broadcast %15 : vector<16x1xi1> to vector<16x128xi1>
    %17 = vector.broadcast %cst_6 : f32 to vector<16x128xf32>
    %18 = arith.select %16, %8, %17 : vector<16x128xi1>, vector<16x128xf32>
    %19 = arith.truncf %18 : vector<16x128xf32> to vector<16x128xbf16>
    %c0_7 = arith.constant 0 : index
    %c0_8 = arith.constant 0 : index
    %20 = vector.load %arg4[%c0_7, %c0_8] : memref<128x128xbf16, #tpu.memory_space<vmem>>, vector<128x128xbf16>
    %cst_9 = arith.constant dense<0.000000e+00> : vector<16x128xf32>
    %21 = tpu.matmul %19, %20, %cst_9 {dimension_numbers = #tpu.dot_dimension_numbers<[1], [0], [0], [1], [0, 0, 1, 1], [], []>} : vector<16x128xbf16>, vector<128x128xbf16>, vector<16x128xf32> -> vector<16x128xf32>
    %c0_10 = arith.constant 0 : index
    %c0_11 = arith.constant 0 : index
    %22 = vector.load %arg5[%c0_10, %c0_11] : memref<16x128xf32, #tpu.memory_space<vmem>>, vector<16x128xf32>
    tpu.vector_store %arg5[%c0_10, %c0_11], %21 {strides = array<i32>} : memref<16x128xf32, #tpu.memory_space<vmem>>, vector<16x128xf32>,
    %cst_12 = arith.constant dense<0.000000e+00> : vector<128xf32>
    %23 = vector.multi_reduction <add>, %21, %cst_12 [0] : vector<16x128xf32> to vector<128xf32>
    %24 = vector.shape_cast %23 : vector<128xf32> to vector<1x128xf32>
    %25 = arith.mulf %21, %21 : vector<16x128xf32>
    %cst_13 = arith.constant dense<0.000000e+00> : vector<128xf32>
    %26 = vector.multi_reduction <add>, %25, %cst_13 [0] : vector<16x128xf32> to vector<128xf32>
    %27 = vector.shape_cast %26 : vector<128xf32> to vector<1x128xf32>
    %28 = tpu.concatenate %24, %27 in 0 : vector<1x128xf32>, vector<1x128xf32> -> vector<2x128xf32>
    %c0_14 = arith.constant 0 : index
    %c0_15 = arith.constant 0 : index
    %c0_16 = arith.constant 0 : index
    %29 = vector.load %arg6[%c0_14, %c0_15, %c0_16] : memref<1x2x128xf32, #tpu.memory_space<vmem>>, vector<1x2x128xf32>
    %30 = vector.shape_cast %29 : vector<1x2x128xf32> to vector<2x128xf32>
    %31 = vector.shape_cast %28 : vector<2x128xf32> to vector<1x2x128xf32>
    tpu.vector_store %arg6[%c0_14, %c0_15, %c0_16], %31 {strides = array<i32>} : memref<1x2x128xf32, #tpu.memory_space<vmem>>, vector<1x2x128xf32>,
    return
  }
  func.func @transform_0(%arg0: i32) -> (i32, i32) {
    %c0_i32 = arith.constant 0 : i32
    %c0_i32_0 = arith.constant 0 : i32
    return %arg0, %c0_i32 : i32, i32
  }
  func.func @transform_1(%arg0: i32) -> (i32, i32) {
    %c0_i32 = arith.constant 0 : i32
    %c0_i32_0 = arith.constant 0 : i32
    %c0_i32_1 = arith.constant 0 : i32
    return %c0_i32, %c0_i32_0 : i32, i32
  }
  func.func @transform_2(%arg0: i32) -> (i32, i32) {
    %c0_i32 = arith.constant 0 : i32
    %c0_i32_0 = arith.constant 0 : i32
    %c0_i32_1 = arith.constant 0 : i32
    return %c0_i32, %c0_i32_0 : i32, i32
  }
  func.func @transform_3(%arg0: i32) -> (i32, i32) {
    %c0_i32 = arith.constant 0 : i32
    %c0_i32_0 = arith.constant 0 : i32
    %c0_i32_1 = arith.constant 0 : i32
    return %c0_i32, %c0_i32_0 : i32, i32
  }
  func.func @transform_4(%arg0: i32) -> (i32, i32) {
    %c0_i32 = arith.constant 0 : i32
    %c0_i32_0 = arith.constant 0 : i32
    return %arg0, %c0_i32 : i32, i32
  }
  func.func @transform_5(%arg0: i32) -> (i32, i32, i32) {
    %c0_i32 = arith.constant 0 : i32
    %c0_i32_0 = arith.constant 0 : i32
    %c0_i32_1 = arith.constant 0 : i32
    return %arg0, %c0_i32, %c0_i32_0 : i32, i32, i32
  }
}

module attributes {stable_mosaic.version = 11 : i64} {
  func.func @_matmul_stats_kernel(%arg0: i32, %arg1: memref<16x67xbf16, #tpu.memory_space<vmem>>, %arg2: memref<67x128xbf16, #tpu.memory_space<vmem>>, %arg3: memref<16x128xf32, #tpu.memory_space<vmem>>, %arg4: memref<1x2x128xf32, #tpu.memory_space<vmem>>) attributes {dimension_semantics = [#tpu.dimension_semantics<parallel>], iteration_bounds = array<i64: 1>, scalar_prefetch = 0 : i64, scratch_operands = 0 : i64, tpu.core_type = #tpu.core_type<tc>, window_params = [{transform_indices = @transform_0, window_bounds = array<i64: 16, 67>}, {pipeline_mode = #tpu.pipeline_mode<synchronous>, transform_indices = @transform_1, window_bounds = array<i64: 67, 128>}, {transform_indices = @transform_2, window_bounds = array<i64: 16, 128>}, {transform_indices = @transform_3, window_bounds = array<i64: 1, 2, 128>}]} {
    %c0 = arith.constant 0 : index
    %c0_0 = arith.constant 0 : index
    %0 = vector.load %arg1[%c0, %c0_0] : memref<16x67xbf16, #tpu.memory_space<vmem>>, vector<16x67xbf16>
    %c0_1 = arith.constant 0 : index
    %c0_2 = arith.constant 0 : index
    %1 = vector.load %arg2[%c0_1, %c0_2] : memref<67x128xbf16, #tpu.memory_space<vmem>>, vector<67x128xbf16>
    %cst = arith.constant dense<0.000000e+00> : vector<16x128xf32>
    %2 = tpu.matmul %0, %1, %cst {dimension_numbers = #tpu.dot_dimension_numbers<[1], [0], [0], [1], [0, 0, 1, 1], [], []>} : vector<16x67xbf16>, vector<67x128xbf16>, vector<16x128xf32> -> vector<16x128xf32>
    %c0_3 = arith.constant 0 : index
    %c0_4 = arith.constant 0 : index
    %3 = vector.load %arg3[%c0_3, %c0_4] : memref<16x128xf32, #tpu.memory_space<vmem>>, vector<16x128xf32>
    tpu.vector_store %arg3[%c0_3, %c0_4], %2 {strides = array<i32>} : memref<16x128xf32, #tpu.memory_space<vmem>>, vector<16x128xf32>,
    %cst_5 = arith.constant dense<0.000000e+00> : vector<128xf32>
    %4 = vector.multi_reduction <add>, %2, %cst_5 [0] : vector<16x128xf32> to vector<128xf32>
    %5 = vector.shape_cast %4 : vector<128xf32> to vector<1x128xf32>
    %6 = arith.mulf %2, %2 : vector<16x128xf32>
    %cst_6 = arith.constant dense<0.000000e+00> : vector<128xf32>
    %7 = vector.multi_reduction <add>, %6, %cst_6 [0] : vector<16x128xf32> to vector<128xf32>
    %8 = vector.shape_cast %7 : vector<128xf32> to vector<1x128xf32>
    %9 = tpu.concatenate %5, %8 in 0 : vector<1x128xf32>, vector<1x128xf32> -> vector<2x128xf32>
    %c0_7 = arith.constant 0 : index
    %c0_8 = arith.constant 0 : index
    %c0_9 = arith.constant 0 : index
    %10 = vector.load %arg4[%c0_7, %c0_8, %c0_9] : memref<1x2x128xf32, #tpu.memory_space<vmem>>, vector<1x2x128xf32>
    %11 = vector.shape_cast %10 : vector<1x2x128xf32> to vector<2x128xf32>
    %12 = vector.shape_cast %9 : vector<2x128xf32> to vector<1x2x128xf32>
    tpu.vector_store %arg4[%c0_7, %c0_8, %c0_9], %12 {strides = array<i32>} : memref<1x2x128xf32, #tpu.memory_space<vmem>>, vector<1x2x128xf32>,
    return
  }
  func.func @transform_0(%arg0: i32) -> (i32, i32) {
    %c0_i32 = arith.constant 0 : i32
    %c0_i32_0 = arith.constant 0 : i32
    return %arg0, %c0_i32 : i32, i32
  }
  func.func @transform_1(%arg0: i32) -> (i32, i32) {
    %c0_i32 = arith.constant 0 : i32
    %c0_i32_0 = arith.constant 0 : i32
    %c0_i32_1 = arith.constant 0 : i32
    return %c0_i32, %c0_i32_0 : i32, i32
  }
  func.func @transform_2(%arg0: i32) -> (i32, i32) {
    %c0_i32 = arith.constant 0 : i32
    %c0_i32_0 = arith.constant 0 : i32
    return %arg0, %c0_i32 : i32, i32
  }
  func.func @transform_3(%arg0: i32) -> (i32, i32, i32) {
    %c0_i32 = arith.constant 0 : i32
    %c0_i32_0 = arith.constant 0 : i32
    %c0_i32_1 = arith.constant 0 : i32
    return %arg0, %c0_i32, %c0_i32_0 : i32, i32, i32
  }
}

module attributes {stable_mosaic.version = 11 : i64} {
  func.func @_bn_relu_kernel(%arg0: i32, %arg1: memref<16x128xf32, #tpu.memory_space<vmem>>, %arg2: memref<1x128xf32, #tpu.memory_space<vmem>>, %arg3: memref<1x128xf32, #tpu.memory_space<vmem>>, %arg4: memref<16x128xf32, #tpu.memory_space<vmem>>) attributes {dimension_semantics = [#tpu.dimension_semantics<parallel>], iteration_bounds = array<i64: 1>, scalar_prefetch = 0 : i64, scratch_operands = 0 : i64, tpu.core_type = #tpu.core_type<tc>, window_params = [{transform_indices = @transform_0, window_bounds = array<i64: 16, 128>}, {pipeline_mode = #tpu.pipeline_mode<synchronous>, transform_indices = @transform_1, window_bounds = array<i64: 1, 128>}, {pipeline_mode = #tpu.pipeline_mode<synchronous>, transform_indices = @transform_2, window_bounds = array<i64: 1, 128>}, {transform_indices = @transform_3, window_bounds = array<i64: 16, 128>}]} {
    %c0 = arith.constant 0 : index
    %c0_0 = arith.constant 0 : index
    %0 = vector.load %arg1[%c0, %c0_0] : memref<16x128xf32, #tpu.memory_space<vmem>>, vector<16x128xf32>
    %c0_1 = arith.constant 0 : index
    %c0_2 = arith.constant 0 : index
    %1 = vector.load %arg2[%c0_1, %c0_2] : memref<1x128xf32, #tpu.memory_space<vmem>>, vector<1x128xf32>
    %2 = vector.broadcast %1 : vector<1x128xf32> to vector<16x128xf32>
    %3 = arith.mulf %0, %2 : vector<16x128xf32>
    %c0_3 = arith.constant 0 : index
    %c0_4 = arith.constant 0 : index
    %4 = vector.load %arg3[%c0_3, %c0_4] : memref<1x128xf32, #tpu.memory_space<vmem>>, vector<1x128xf32>
    %5 = vector.broadcast %4 : vector<1x128xf32> to vector<16x128xf32>
    %6 = arith.addf %3, %5 : vector<16x128xf32>
    %cst = arith.constant 0.000000e+00 : f32
    %7 = vector.broadcast %cst : f32 to vector<16x128xf32>
    %8 = arith.maximumf %6, %7 : vector<16x128xf32>
    %c0_5 = arith.constant 0 : index
    %c0_6 = arith.constant 0 : index
    %9 = vector.load %arg4[%c0_5, %c0_6] : memref<16x128xf32, #tpu.memory_space<vmem>>, vector<16x128xf32>
    tpu.vector_store %arg4[%c0_5, %c0_6], %8 {strides = array<i32>} : memref<16x128xf32, #tpu.memory_space<vmem>>, vector<16x128xf32>,
    return
  }
  func.func @transform_0(%arg0: i32) -> (i32, i32) {
    %c0_i32 = arith.constant 0 : i32
    %c0_i32_0 = arith.constant 0 : i32
    return %arg0, %c0_i32 : i32, i32
  }
  func.func @transform_1(%arg0: i32) -> (i32, i32) {
    %c0_i32 = arith.constant 0 : i32
    %c0_i32_0 = arith.constant 0 : i32
    %c0_i32_1 = arith.constant 0 : i32
    return %c0_i32, %c0_i32_0 : i32, i32
  }
  func.func @transform_2(%arg0: i32) -> (i32, i32) {
    %c0_i32 = arith.constant 0 : i32
    %c0_i32_0 = arith.constant 0 : i32
    %c0_i32_1 = arith.constant 0 : i32
    return %c0_i32, %c0_i32_0 : i32, i32
  }
  func.func @transform_3(%arg0: i32) -> (i32, i32) {
    %c0_i32 = arith.constant 0 : i32
    %c0_i32_0 = arith.constant 0 : i32
    return %arg0, %c0_i32 : i32, i32
  }
}

</mosaic_0001>

<llo_original>
// kernel: _lambda_.15
$region0: #{_lambda_.15}
  #allocation0 [shape = 'u32[]', space=smem, size = 0x4, offset = 0x4, fixed_abs, tag = 'smem constant byte address 0x4 - core index']
  #allocation1 [shape = 'u32[144,128]{1,0:T(1,128)}', space=vmem, size = 0x12000, scoped, tag = 'internal scratch']
  #allocation2 [shape = 'f32[128,128]{1,0:T(8,128)}', space=vmem, size = 0x10000, scoped, tag = 'scratch operand']
  #allocation3 [shape = 's32[128,128]{1,0:T(8,128)}', space=vmem, size = 0x10000, scoped, tag = 'scratch operand']
  %s0 = inlined_call_operand.vmem [shape: f32[128,3], index: 0, kind: input, shape index: {}]
  %s1 = inlined_call_operand.vmem [shape: f32[128,3], index: 1, kind: input, shape index: {}]
  %s2 = inlined_call_operand.vmem [shape: s32[128,1], index: 2, kind: input, shape index: {}]
  %s3 = inlined_call_operand.vmem [shape: f32[3,128], index: 3, kind: input, shape index: {}]
  %s4 = inlined_call_operand.vmem [shape: s32[1,128], index: 4, kind: input, shape index: {}]
  %s5 = inlined_call_operand.vmem [shape: f32[128,3], index: 5, kind: output, shape index: {0}]
  %s6 = inlined_call_operand.vmem [shape: s32[128,3], index: 6, kind: output, shape index: {1}]
  %7 = xla_tuple %s5, %s6
  %s8 = sld [smem:[#allocation0]]
  $region46: #{_lambda_.15} parent=0
    _
  %s10 = ssub.s32 1, %s8
  %s11 = scalar_select 0, %s10, %s8
  // Predicated region
  $region2: #{_lambda_.15} parent=0 // pred_check
    _
  $region3: #{_lambda_.15} parent=0 // pred_check_branch
    %13 = sbr.rel (0) target = $region5
  $region4: #{_lambda_.15} parent=0 // pred_region
    _
  $region5: #{_lambda_.15} parent=0 // pred_fallthru
    _
  // Predicated region
  $region6: #{_lambda_.15} parent=0 // pred_check
    _
  $region7: #{_lambda_.15} parent=0 // pred_check_branch
    %15 = sbr.rel (0) target = $region9
  $region8: #{_lambda_.15} parent=0 // pred_region
    _
  $region9: #{_lambda_.15} parent=0 // pred_fallthru
    _
  // Predicated region
  $region10: #{_lambda_.15} parent=0 // pred_check
    _
  $region11: #{_lambda_.15} parent=0 // pred_check_branch
    %17 = sbr.rel (0) target = $region13
  $region12: #{_lambda_.15} parent=0 // pred_region
    _
  $region13: #{_lambda_.15} parent=0 // pred_fallthru
    _
  // Predicated region
  $region14: #{_lambda_.15} parent=0 // pred_check
    _
  $region15: #{_lambda_.15} parent=0 // pred_check_branch
    %19 = sbr.rel (0) target = $region17
  $region16: #{_lambda_.15} parent=0 // pred_region
    _
  $region17: #{_lambda_.15} parent=0 // pred_fallthru
    _
  // Predicated region
  $region18: #{_lambda_.15} parent=0 // pred_check
    _
  $region19: #{_lambda_.15} parent=0 // pred_check_branch
    %21 = sbr.rel (0) target = $region21
  $region20: #{_lambda_.15} parent=0 // pred_region
    _
  $region21: #{_lambda_.15} parent=0 // pred_fallthru
    _
  %p22 = scmp.eq.s32.totalorder 0, 0
  // Predicated region
  $region22: #{_lambda_.15} parent=0 // pred_check
    %p23 = pneg %p22
  $region23: #{_lambda_.15} parent=0 // pred_check_branch
    %25 = sbr.rel (%p23) target = $region25
  $region24: #{_lambda_.15} parent=0 // pred_region
    %v26 = vlaneseq
    %v27 = vand.u32 %v26, 127
    %28 = vst [vmem:[#allocation2] sm:$0xff] 1e+10
    %29 = vst [vmem:[#allocation2 + $0x8] sm:$0xff] 1e+10
    %30 = vst [vmem:[#allocation2 + $0x10] sm:$0xff] 1e+10
    %31 = vst [vmem:[#allocation2 + $0x18] sm:$0xff] 1e+10
    %32 = vst [vmem:[#allocation2 + $0x20] sm:$0xff] 1e+10
    %33 = vst [vmem:[#allocation2 + $0x28] sm:$0xff] 1e+10
    %34 = vst [vmem:[#allocation2 + $0x30] sm:$0xff] 1e+10
    %35 = vst [vmem:[#allocation2 + $0x38] sm:$0xff] 1e+10
    %36 = vst [vmem:[#allocation2 + $0x40] sm:$0xff] 1e+10
    %37 = vst [vmem:[#allocation2 + $0x48] sm:$0xff] 1e+10
    %38 = vst [vmem:[#allocation2 + $0x50] sm:$0xff] 1e+10
    %39 = vst [vmem:[#allocation2 + $0x58] sm:$0xff] 1e+10
    %40 = vst [vmem:[#allocation2 + $0x60] sm:$0xff] 1e+10
    %41 = vst [vmem:[#allocation2 + $0x68] sm:$0xff] 1e+10
    %42 = vst [vmem:[#allocation2 + $0x70] sm:$0xff] 1e+10
    %43 = vst [vmem:[#allocation2 + $0x78] sm:$0xff] 1e+10
    %v44 = vadd.s32 %v27, 128
    %45 = vst [vmem:[#allocation3] sm:$0xff] %v44
    %46 = vst [vmem:[#allocation3 + $0x8] sm:$0xff] %v44
    %47 = vst [vmem:[#allocation3 + $0x10] sm:$0xff] %v44
    %48 = vst [vmem:[#allocation3 + $0x18] sm:$0xff] %v44
    %49 = vst [vmem:[#allocation3 + $0x20] sm:$0xff] %v44
    %50 = vst [vmem:[#allocation3 + $0x28] sm:$0xff] %v44
    %51 = vst [vmem:[#allocation3 + $0x30] sm:$0xff] %v44
    %52 = vst [vmem:[#allocation3 + $0x38] sm:$0xff] %v44
    %53 = vst [vmem:[#allocation3 + $0x40] sm:$0xff] %v44
    %54 = vst [vmem:[#allocation3 + $0x48] sm:$0xff] %v44
    %55 = vst [vmem:[#allocation3 + $0x50] sm:$0xff] %v44
    %56 = vst [vmem:[#allocation3 + $0x58] sm:$0xff] %v44
    %57 = vst [vmem:[#allocation3 + $0x60] sm:$0xff] %v44
    %58 = vst [vmem:[#allocation3 + $0x68] sm:$0xff] %v44
    %59 = vst [vmem:[#allocation3 + $0x70] sm:$0xff] %v44
    %60 = vst [vmem:[#allocation3 + $0x78] sm:$0xff] %v44
  $region25: #{_lambda_.15} parent=0 // pred_fallthru
    _
  %v61 = vld [vmem:[%s0] sm:$0xff]
  %v62 = vld [vmem:[%s0 + $0x8] sm:$0xff]
  %v63 = vld [vmem:[%s0 + $0x10] sm:$0xff]
  %v64 = vld [vmem:[%s0 + $0x18] sm:$0xff]
  %v65 = vld [vmem:[%s0 + $0x20] sm:$0xff]
  %v66 = vld [vmem:[%s0 + $0x28] sm:$0xff]
  %v67 = vld [vmem:[%s0 + $0x30] sm:$0xff]
  %v68 = vld [vmem:[%s0 + $0x38] sm:$0xff]
  %v69 = vld [vmem:[%s0 + $0x40] sm:$0xff]
  %v70 = vld [vmem:[%s0 + $0x48] sm:$0xff]
  %v71 = vld [vmem:[%s0 + $0x50] sm:$0xff]
  %v72 = vld [vmem:[%s0 + $0x58] sm:$0xff]
  %v73 = vld [vmem:[%s0 + $0x60] sm:$0xff]
  %v74 = vld [vmem:[%s0 + $0x68] sm:$0xff]
  %v75 = vld [vmem:[%s0 + $0x70] sm:$0xff]
  %v76 = vld [vmem:[%s0 + $0x78] sm:$0xff]
  %v77 = vld [vmem:[%s1] sm:$0xff]
  %v78 = vld [vmem:[%s1 + $0x8] sm:$0xff]
  %v79 = vld [vmem:[%s1 + $0x10] sm:$0xff]
  %v80 = vld [vmem:[%s1 + $0x18] sm:$0xff]
  %v81 = vld [vmem:[%s1 + $0x20] sm:$0xff]
  %v82 = vld [vmem:[%s1 + $0x28] sm:$0xff]
  %v83 = vld [vmem:[%s1 + $0x30] sm:$0xff]
  %v84 = vld [vmem:[%s1 + $0x38] sm:$0xff]
  %v85 = vld [vmem:[%s1 + $0x40] sm:$0xff]
  %v86 = vld [vmem:[%s1 + $0x48] sm:$0xff]
  %v87 = vld [vmem:[%s1 + $0x50] sm:$0xff]
  %v88 = vld [vmem:[%s1 + $0x58] sm:$0xff]
  %v89 = vld [vmem:[%s1 + $0x60] sm:$0xff]
  %v90 = vld [vmem:[%s1 + $0x68] sm:$0xff]
  %v91 = vld [vmem:[%s1 + $0x70] sm:$0xff]
  %v92 = vld [vmem:[%s1 + $0x78] sm:$0xff]
  %v93 = vld [vmem:[%s2] sm:$0xff]
  %v94 = vld [vmem:[%s2 + $0x8] sm:$0xff]
  %v95 = vld [vmem:[%s2 + $0x10] sm:$0xff]
  %v96 = vld [vmem:[%s2 + $0x18] sm:$0xff]
  %v97 = vld [vmem:[%s2 + $0x20] sm:$0xff]
  %v98 = vld [vmem:[%s2 + $0x28] sm:$0xff]
  %v99 = vld [vmem:[%s2 + $0x30] sm:$0xff]
  %v100 = vld [vmem:[%s2 + $0x38] sm:$0xff]
  %v101 = vld [vmem:[%s2 + $0x40] sm:$0xff]
  %v102 = vld [vmem:[%s2 + $0x48] sm:$0xff]
  %v103 = vld [vmem:[%s2 + $0x50] sm:$0xff]
  %v104 = vld [vmem:[%s2 + $0x58] sm:$0xff]
  %v105 = vld [vmem:[%s2 + $0x60] sm:$0xff]
  %v106 = vld [vmem:[%s2 + $0x68] sm:$0xff]
  %v107 = vld [vmem:[%s2 + $0x70] sm:$0xff]
  %v108 = vld [vmem:[%s2 + $0x78] sm:$0xff]
  %v109 = vld [vmem:[%s3] sm:$0x1]
  %v110 = vld [vmem:[%s3 + $0x1] sm:$0x1]
  %v111 = vld [vmem:[%s3 + $0x2] sm:$0x1]
  %v112 = vld [vmem:[%s4] sm:$0x1]
  %114 = vset.pattern.permute.xlu0 0
  %115 = vperm.xlu0 %114, %v61
  %v116 = vpop.permute.xlu0 %115
  %119 = vset.pattern.permute.xlu0 0
  %120 = vperm.xlu0 %119, %v62
  %v121 = vpop.permute.xlu0 %120
  %124 = vset.pattern.permute.xlu0 0
  %125 = vperm.xlu0 %124, %v63
  %v126 = vpop.permute.xlu0 %125
  %129 = vset.pattern.permute.xlu0 0
  %130 = vperm.xlu0 %129, %v64
  %v131 = vpop.permute.xlu0 %130
  %134 = vset.pattern.permute.xlu0 0
  %135 = vperm.xlu0 %134, %v65
  %v136 = vpop.permute.xlu0 %135
  %139 = vset.pattern.permute.xlu0 0
  %140 = vperm.xlu0 %139, %v66
  %v141 = vpop.permute.xlu0 %140
  %144 = vset.pattern.permute.xlu0 0
  %145 = vperm.xlu0 %144, %v67
  %v146 = vpop.permute.xlu0 %145
  %149 = vset.pattern.permute.xlu0 0
  %150 = vperm.xlu0 %149, %v68
  %v151 = vpop.permute.xlu0 %150
  %154 = vset.pattern.permute.xlu0 0
  %155 = vperm.xlu0 %154, %v69
  %v156 = vpop.permute.xlu0 %155
  %159 = vset.pattern.permute.xlu0 0
  %160 = vperm.xlu0 %159, %v70
  %v161 = vpop.permute.xlu0 %160
  %164 = vset.pattern.permute.xlu0 0
  %165 = vperm.xlu0 %164, %v71
  %v166 = vpop.permute.xlu0 %165
  %169 = vset.pattern.permute.xlu0 0
  %170 = vperm.xlu0 %169, %v72
  %v171 = vpop.permute.xlu0 %170
  %174 = vset.pattern.permute.xlu0 0
  %175 = vperm.xlu0 %174, %v73
  %v176 = vpop.permute.xlu0 %175
  %179 = vset.pattern.permute.xlu0 0
  %180 = vperm.xlu0 %179, %v74
  %v181 = vpop.permute.xlu0 %180
  %184 = vset.pattern.permute.xlu0 0
  %185 = vperm.xlu0 %184, %v75
  %v186 = vpop.permute.xlu0 %185
  %189 = vset.pattern.permute.xlu0 0
  %190 = vperm.xlu0 %189, %v76
  %v191 = vpop.permute.xlu0 %190
  %v193 = vlaneseq
  %v194 = vshrl.u32 %v193, 7
  %v195 = vsub.s32 0, %v194
  %v196 = vrot.slane %v109, %v195
  %v197 = vsub.f32 %v116, %v196
  %v198 = vsub.f32 %v121, %v196
  %v199 = vsub.f32 %v126, %v196
  %v200 = vsub.f32 %v131, %v196
  %v201 = vsub.f32 %v136, %v196
  %v202 = vsub.f32 %v141, %v196
  %v203 = vsub.f32 %v146, %v196
  %v204 = vsub.f32 %v151, %v196
  %v205 = vsub.f32 %v156, %v196
  %v206 = vsub.f32 %v161, %v196
  %v207 = vsub.f32 %v166, %v196
  %v208 = vsub.f32 %v171, %v196
  %v209 = vsub.f32 %v176, %v196
  %v210 = vsub.f32 %v181, %v196
  %v211 = vsub.f32 %v186, %v196
  %v212 = vsub.f32 %v191, %v196
  %213 = vset.pattern.permute.xlu0 1
  %214 = vperm.xlu0 %213, %v61
  %v215 = vpop.permute.xlu0 %214
  %217 = vset.pattern.permute.xlu0 1
  %218 = vperm.xlu0 %217, %v62
  %v219 = vpop.permute.xlu0 %218
  %221 = vset.pattern.permute.xlu0 1
  %222 = vperm.xlu0 %221, %v63
  %v223 = vpop.permute.xlu0 %222
  %225 = vset.pattern.permute.xlu0 1
  %226 = vperm.xlu0 %225, %v64
  %v227 = vpop.permute.xlu0 %226
  %229 = vset.pattern.permute.xlu0 1
  %230 = vperm.xlu0 %229, %v65
  %v231 = vpop.permute.xlu0 %230
  %233 = vset.pattern.permute.xlu0 1
  %234 = vperm.xlu0 %233, %v66
  %v235 = vpop.permute.xlu0 %234
  %237 = vset.pattern.permute.xlu0 1
  %238 = vperm.xlu0 %237, %v67
  %v239 = vpop.permute.xlu0 %238
  %241 = vset.pattern.permute.xlu0 1
  %242 = vperm.xlu0 %241, %v68
  %v243 = vpop.permute.xlu0 %242
  %245 = vset.pattern.permute.xlu0 1
  %246 = vperm.xlu0 %245, %v69
  %v247 = vpop.permute.xlu0 %246
  %249 = vset.pattern.permute.xlu0 1
  %250 = vperm.xlu0 %249, %v70
  %v251 = vpop.permute.xlu0 %250
  %253 = vset.pattern.permute.xlu0 1
  %254 = vperm.xlu0 %253, %v71
  %v255 = vpop.permute.xlu0 %254
  %257 = vset.pattern.permute.xlu0 1
  %258 = vperm.xlu0 %257, %v72
  %v259 = vpop.permute.xlu0 %258
  %261 = vset.pattern.permute.xlu0 1
  %262 = vperm.xlu0 %261, %v73
  %v263 = vpop.permute.xlu0 %262
  %265 = vset.pattern.permute.xlu0 1
  %266 = vperm.xlu0 %265, %v74
  %v267 = vpop.permute.xlu0 %266
  %269 = vset.pattern.permute.xlu0 1
  %270 = vperm.xlu0 %269, %v75
  %v271 = vpop.permute.xlu0 %270
  %273 = vset.pattern.permute.xlu0 1
  %274 = vperm.xlu0 %273, %v76
  %v275 = vpop.permute.xlu0 %274
  %v277 = vlaneseq
  %v278 = vshrl.u32 %v277, 7
  %v279 = vsub.s32 0, %v278
  %v280 = vrot.slane %v110, %v279
  %v281 = vsub.f32 %v215, %v280
  %v282 = vsub.f32 %v219, %v280
  %v283 = vsub.f32 %v223, %v280
  %v284 = vsub.f32 %v227, %v280
  %v285 = vsub.f32 %v231, %v280
  %v286 = vsub.f32 %v235, %v280
  %v287 = vsub.f32 %v239, %v280
  %v288 = vsub.f32 %v243, %v280
  %v289 = vsub.f32 %v247, %v280
  %v290 = vsub.f32 %v251, %v280
  %v291 = vsub.f32 %v255, %v280
  %v292 = vsub.f32 %v259, %v280
  %v293 = vsub.f32 %v263, %v280
  %v294 = vsub.f32 %v267, %v280
  %v295 = vsub.f32 %v271, %v280
  %v296 = vsub.f32 %v275, %v280
  %297 = vset.pattern.permute.xlu0 2
  %298 = vperm.xlu0 %297, %v61
  %v299 = vpop.permute.xlu0 %298
  %301 = vset.pattern.permute.xlu0 2
  %302 = vperm.xlu0 %301, %v62
  %v303 = vpop.permute.xlu0 %302
  %305 = vset.pattern.permute.xlu0 2
  %306 = vperm.xlu0 %305, %v63
  %v307 = vpop.permute.xlu0 %306
  %309 = vset.pattern.permute.xlu0 2
  %310 = vperm.xlu0 %309, %v64
  %v311 = vpop.permute.xlu0 %310
  %313 = vset.pattern.permute.xlu0 2
  %314 = vperm.xlu0 %313, %v65
  %v315 = vpop.permute.xlu0 %314
  %317 = vset.pattern.permute.xlu0 2
  %318 = vperm.xlu0 %317, %v66
  %v319 = vpop.permute.xlu0 %318
  %321 = vset.pattern.permute.xlu0 2
  %322 = vperm.xlu0 %321, %v67
  %v323 = vpop.permute.xlu0 %322
  %325 = vset.pattern.permute.xlu0 2
  %326 = vperm.xlu0 %325, %v68
  %v327 = vpop.permute.xlu0 %326
  %329 = vset.pattern.permute.xlu0 2
  %330 = vperm.xlu0 %329, %v69
  %v331 = vpop.permute.xlu0 %330
  %333 = vset.pattern.permute.xlu0 2
  %334 = vperm.xlu0 %333, %v70
  %v335 = vpop.permute.xlu0 %334
  %337 = vset.pattern.permute.xlu0 2
  %338 = vperm.xlu0 %337, %v71
  %v339 = vpop.permute.xlu0 %338
  %341 = vset.pattern.permute.xlu0 2
  %342 = vperm.xlu0 %341, %v72
  %v343 = vpop.permute.xlu0 %342
  %345 = vset.pattern.permute.xlu0 2
  %346 = vperm.xlu0 %345, %v73
  %v347 = vpop.permute.xlu0 %346
  %349 = vset.pattern.permute.xlu0 2
  %350 = vperm.xlu0 %349, %v74
  %v351 = vpop.permute.xlu0 %350
  %353 = vset.pattern.permute.xlu0 2
  %354 = vperm.xlu0 %353, %v75
  %v355 = vpop.permute.xlu0 %354
  %357 = vset.pattern.permute.xlu0 2
  %358 = vperm.xlu0 %357, %v76
  %v359 = vpop.permute.xlu0 %358
  %v361 = vlaneseq
  %v362 = vshrl.u32 %v361, 7
  %v363 = vsub.s32 0, %v362
  %v364 = vrot.slane %v111, %v363
  %v365 = vsub.f32 %v299, %v364
  %v366 = vsub.f32 %v303, %v364
  %v367 = vsub.f32 %v307, %v364
  %v368 = vsub.f32 %v311, %v364
  %v369 = vsub.f32 %v315, %v364
  %v370 = vsub.f32 %v319, %v364
  %v371 = vsub.f32 %v323, %v364
  %v372 = vsub.f32 %v327, %v364
  %v373 = vsub.f32 %v331, %v364
  %v374 = vsub.f32 %v335, %v364
  %v375 = vsub.f32 %v339, %v364
  %v376 = vsub.f32 %v343, %v364
  %v377 = vsub.f32 %v347, %v364
  %v378 = vsub.f32 %v351, %v364
  %v379 = vsub.f32 %v355, %v364
  %v380 = vsub.f32 %v359, %v364
  %v381 = vmul.f32 %v197, %v197
  %v382 = vmul.f32 %v198, %v198
  %v383 = vmul.f32 %v199, %v199
  %v384 = vmul.f32 %v200, %v200
  %v385 = vmul.f32 %v201, %v201
  %v386 = vmul.f32 %v202, %v202
  %v387 = vmul.f32 %v203, %v203
  %v388 = vmul.f32 %v204, %v204
  %v389 = vmul.f32 %v205, %v205
  %v390 = vmul.f32 %v206, %v206
  %v391 = vmul.f32 %v207, %v207
  %v392 = vmul.f32 %v208, %v208
  %v393 = vmul.f32 %v209, %v209
  %v394 = vmul.f32 %v210, %v210
  %v395 = vmul.f32 %v211, %v211
  %v396 = vmul.f32 %v212, %v212
  %v397 = vmul.f32 %v281, %v281
  %v398 = vmul.f32 %v282, %v282
  %v399 = vmul.f32 %v283, %v283
  %v400 = vmul.f32 %v284, %v284
  %v401 = vmul.f32 %v285, %v285
  %v402 = vmul.f32 %v286, %v286
  %v403 = vmul.f32 %v287, %v287
  %v404 = vmul.f32 %v288, %v288
  %v405 = vmul.f32 %v289, %v289
  %v406 = vmul.f32 %v290, %v290
  %v407 = vmul.f32 %v291, %v291
  %v408 = vmul.f32 %v292, %v292
  %v409 = vmul.f32 %v293, %v293
  %v410 = vmul.f32 %v294, %v294
  %v411 = vmul.f32 %v295, %v295
  %v412 = vmul.f32 %v296, %v296
  %v413 = vadd.f32 %v381, %v397
  %v414 = vadd.f32 %v382, %v398
  %v415 = vadd.f32 %v383, %v399
  %v416 = vadd.f32 %v384, %v400
  %v417 = vadd.f32 %v385, %v401
  %v418 = vadd.f32 %v386, %v402
  %v419 = vadd.f32 %v387, %v403
  %v420 = vadd.f32 %v388, %v404
  %v421 = vadd.f32 %v389, %v405
  %v422 = vadd.f32 %v390, %v406
  %v423 = vadd.f32 %v391, %v407
  %v424 = vadd.f32 %v392, %v408
  %v425 = vadd.f32 %v393, %v409
  %v426 = vadd.f32 %v394, %v410
  %v427 = vadd.f32 %v395, %v411
  %v428 = vadd.f32 %v396, %v412
  %v429 = vmul.f32 %v365, %v365
  %v430 = vmul.f32 %v366, %v366
  %v431 = vmul.f32 %v367, %v367
  %v432 = vmul.f32 %v368, %v368
  %v433 = vmul.f32 %v369, %v369
  %v434 = vmul.f32 %v370, %v370
  %v435 = vmul.f32 %v371, %v371
  %v436 = vmul.f32 %v372, %v372
  %v437 = vmul.f32 %v373, %v373
  %v438 = vmul.f32 %v374, %v374
  %v439 = vmul.f32 %v375, %v375
  %v440 = vmul.f32 %v376, %v376
  %v441 = vmul.f32 %v377, %v377
  %v442 = vmul.f32 %v378, %v378
  %v443 = vmul.f32 %v379, %v379
  %v444 = vmul.f32 %v380, %v380
  %v445 = vadd.f32 %v413, %v429
  %v446 = vadd.f32 %v414, %v430
  %v447 = vadd.f32 %v415, %v431
  %v448 = vadd.f32 %v416, %v432
  %v449 = vadd.f32 %v417, %v433
  %v450 = vadd.f32 %v418, %v434
  %v451 = vadd.f32 %v419, %v435
  %v452 = vadd.f32 %v420, %v436
  %v453 = vadd.f32 %v421, %v437
  %v454 = vadd.f32 %v422, %v438
  %v455 = vadd.f32 %v423, %v439
  %v456 = vadd.f32 %v424, %v440
  %v457 = vadd.f32 %v425, %v441
  %v458 = vadd.f32 %v426, %v442
  %v459 = vadd.f32 %v427, %v443
  %v460 = vadd.f32 %v428, %v444
  %462 = vset.pattern.permute.xlu0 0
  %463 = vperm.xlu0 %462, %v77
  %v464 = vpop.permute.xlu0 %463
  %467 = vset.pattern.permute.xlu0 0
  %468 = vperm.xlu0 %467, %v78
  %v469 = vpop.permute.xlu0 %468
  %472 = vset.pattern.permute.xlu0 0
  %473 = vperm.xlu0 %472, %v79
  %v474 = vpop.permute.xlu0 %473
  %477 = vset.pattern.permute.xlu0 0
  %478 = vperm.xlu0 %477, %v80
  %v479 = vpop.permute.xlu0 %478
  %482 = vset.pattern.permute.xlu0 0
  %483 = vperm.xlu0 %482, %v81
  %v484 = vpop.permute.xlu0 %483
  %487 = vset.pattern.permute.xlu0 0
  %488 = vperm.xlu0 %487, %v82
  %v489 = vpop.permute.xlu0 %488
  %492 = vset.pattern.permute.xlu0 0
  %493 = vperm.xlu0 %492, %v83
  %v494 = vpop.permute.xlu0 %493
  %497 = vset.pattern.permute.xlu0 0
  %498 = vperm.xlu0 %497, %v84
  %v499 = vpop.permute.xlu0 %498
  %502 = vset.pattern.permute.xlu0 0
  %503 = vperm.xlu0 %502, %v85
  %v504 = vpop.permute.xlu0 %503
  %507 = vset.pattern.permute.xlu0 0
  %508 = vperm.xlu0 %507, %v86
  %v509 = vpop.permute.xlu0 %508
  %512 = vset.pattern.permute.xlu0 0
  %513 = vperm.xlu0 %512, %v87
  %v514 = vpop.permute.xlu0 %513
  %517 = vset.pattern.permute.xlu0 0
  %518 = vperm.xlu0 %517, %v88
  %v519 = vpop.permute.xlu0 %518
  %522 = vset.pattern.permute.xlu0 0
  %523 = vperm.xlu0 %522, %v89
  %v524 = vpop.permute.xlu0 %523
  %527 = vset.pattern.permute.xlu0 0
  %528 = vperm.xlu0 %527, %v90
  %v529 = vpop.permute.xlu0 %528
  %532 = vset.pattern.permute.xlu0 0
  %533 = vperm.xlu0 %532, %v91
  %v534 = vpop.permute.xlu0 %533
  %537 = vset.pattern.permute.xlu0 0
  %538 = vperm.xlu0 %537, %v92
  %v539 = vpop.permute.xlu0 %538
  %v541 = vsub.f32 %v464, %v196
  %v542 = vsub.f32 %v469, %v196
  %v543 = vsub.f32 %v474, %v196
  %v544 = vsub.f32 %v479, %v196
  %v545 = vsub.f32 %v484, %v196
  %v546 = vsub.f32 %v489, %v196
  %v547 = vsub.f32 %v494, %v196
  %v548 = vsub.f32 %v499, %v196
  %v549 = vsub.f32 %v504, %v196
  %v550 = vsub.f32 %v509, %v196
  %v551 = vsub.f32 %v514, %v196
  %v552 = vsub.f32 %v519, %v196
  %v553 = vsub.f32 %v524, %v196
  %v554 = vsub.f32 %v529, %v196
  %v555 = vsub.f32 %v534, %v196
  %v556 = vsub.f32 %v539, %v196
  %557 = vset.pattern.permute.xlu0 1
  %558 = vperm.xlu0 %557, %v77
  %v559 = vpop.permute.xlu0 %558
  %561 = vset.pattern.permute.xlu0 1
  %562 = vperm.xlu0 %561, %v78
  %v563 = vpop.permute.xlu0 %562
  %565 = vset.pattern.permute.xlu0 1
  %566 = vperm.xlu0 %565, %v79
  %v567 = vpop.permute.xlu0 %566
  %569 = vset.pattern.permute.xlu0 1
  %570 = vperm.xlu0 %569, %v80
  %v571 = vpop.permute.xlu0 %570
  %573 = vset.pattern.permute.xlu0 1
  %574 = vperm.xlu0 %573, %v81
  %v575 = vpop.permute.xlu0 %574
  %577 = vset.pattern.permute.xlu0 1
  %578 = vperm.xlu0 %577, %v82
  %v579 = vpop.permute.xlu0 %578
  %581 = vset.pattern.permute.xlu0 1
  %582 = vperm.xlu0 %581, %v83
  %v583 = vpop.permute.xlu0 %582
  %585 = vset.pattern.permute.xlu0 1
  %586 = vperm.xlu0 %585, %v84
  %v587 = vpop.permute.xlu0 %586
  %589 = vset.pattern.permute.xlu0 1
  %590 = vperm.xlu0 %589, %v85
  %v591 = vpop.permute.xlu0 %590
  %593 = vset.pattern.permute.xlu0 1
  %594 = vperm.xlu0 %593, %v86
  %v595 = vpop.permute.xlu0 %594
  %597 = vset.pattern.permute.xlu0 1
  %598 = vperm.xlu0 %597, %v87
  %v599 = vpop.permute.xlu0 %598
  %601 = vset.pattern.permute.xlu0 1
  %602 = vperm.xlu0 %601, %v88
  %v603 = vpop.permute.xlu0 %602
  %605 = vset.pattern.permute.xlu0 1
  %606 = vperm.xlu0 %605, %v89
  %v607 = vpop.permute.xlu0 %606
  %609 = vset.pattern.permute.xlu0 1
  %610 = vperm.xlu0 %609, %v90
  %v611 = vpop.permute.xlu0 %610
  %613 = vset.pattern.permute.xlu0 1
  %614 = vperm.xlu0 %613, %v91
  %v615 = vpop.permute.xlu0 %614
  %617 = vset.pattern.permute.xlu0 1
  %618 = vperm.xlu0 %617, %v92
  %v619 = vpop.permute.xlu0 %618
  %v621 = vsub.f32 %v559, %v280
  %v622 = vsub.f32 %v563, %v280
  %v623 = vsub.f32 %v567, %v280
  %v624 = vsub.f32 %v571, %v280
  %v625 = vsub.f32 %v575, %v280
  %v626 = vsub.f32 %v579, %v280
  %v627 = vsub.f32 %v583, %v280
  %v628 = vsub.f32 %v587, %v280
  %v629 = vsub.f32 %v591, %v280
  %v630 = vsub.f32 %v595, %v280
  %v631 = vsub.f32 %v599, %v280
  %v632 = vsub.f32 %v603, %v280
  %v633 = vsub.f32 %v607, %v280
  %v634 = vsub.f32 %v611, %v280
  %v635 = vsub.f32 %v615, %v280
  %v636 = vsub.f32 %v619, %v280
  %637 = vset.pattern.permute.xlu0 2
  %638 = vperm.xlu0 %637, %v77
  %v639 = vpop.permute.xlu0 %638
  %641 = vset.pattern.permute.xlu0 2
  %642 = vperm.xlu0 %641, %v78
  %v643 = vpop.permute.xlu0 %642
  %645 = vset.pattern.permute.xlu0 2
  %646 = vperm.xlu0 %645, %v79
  %v647 = vpop.permute.xlu0 %646
  %649 = vset.pattern.permute.xlu0 2
  %650 = vperm.xlu0 %649, %v80
  %v651 = vpop.permute.xlu0 %650
  %653 = vset.pattern.permute.xlu0 2
  %654 = vperm.xlu0 %653, %v81
  %v655 = vpop.permute.xlu0 %654
  %657 = vset.pattern.permute.xlu0 2
  %658 = vperm.xlu0 %657, %v82
  %v659 = vpop.permute.xlu0 %658
  %661 = vset.pattern.permute.xlu0 2
  %662 = vperm.xlu0 %661, %v83
  %v663 = vpop.permute.xlu0 %662
  %665 = vset.pattern.permute.xlu0 2
  %666 = vperm.xlu0 %665, %v84
  %v667 = vpop.permute.xlu0 %666
  %669 = vset.pattern.permute.xlu0 2
  %670 = vperm.xlu0 %669, %v85
  %v671 = vpop.permute.xlu0 %670
  %673 = vset.pattern.permute.xlu0 2
  %674 = vperm.xlu0 %673, %v86
  %v675 = vpop.permute.xlu0 %674
  %677 = vset.pattern.permute.xlu0 2
  %678 = vperm.xlu0 %677, %v87
  %v679 = vpop.permute.xlu0 %678
  %681 = vset.pattern.permute.xlu0 2
  %682 = vperm.xlu0 %681, %v88
  %v683 = vpop.permute.xlu0 %682
  %685 = vset.pattern.permute.xlu0 2
  %686 = vperm.xlu0 %685, %v89
  %v687 = vpop.permute.xlu0 %686
  %689 = vset.pattern.permute.xlu0 2
  %690 = vperm.xlu0 %689, %v90
  %v691 = vpop.permute.xlu0 %690
  %693 = vset.pattern.permute.xlu0 2
  %694 = vperm.xlu0 %693, %v91
  %v695 = vpop.permute.xlu0 %694
  %697 = vset.pattern.permute.xlu0 2
  %698 = vperm.xlu0 %697, %v92
  %v699 = vpop.permute.xlu0 %698
  %v701 = vsub.f32 %v639, %v364
  %v702 = vsub.f32 %v643, %v364
  %v703 = vsub.f32 %v647, %v364
  %v704 = vsub.f32 %v651, %v364
  %v705 = vsub.f32 %v655, %v364
  %v706 = vsub.f32 %v659, %v364
  %v707 = vsub.f32 %v663, %v364
  %v708 = vsub.f32 %v667, %v364
  %v709 = vsub.f32 %v671, %v364
  %v710 = vsub.f32 %v675, %v364
  %v711 = vsub.f32 %v679, %v364
  %v712 = vsub.f32 %v683, %v364
  %v713 = vsub.f32 %v687, %v364
  %v714 = vsub.f32 %v691, %v364
  %v715 = vsub.f32 %v695, %v364
  %v716 = vsub.f32 %v699, %v364
  %v717 = vand.u32 2147483647, %v541
  %v718 = vand.u32 2147483647, %v542
  %v719 = vand.u32 2147483647, %v543
  %v720 = vand.u32 2147483647, %v544
  %v721 = vand.u32 2147483647, %v545
  %v722 = vand.u32 2147483647, %v546
  %v723 = vand.u32 2147483647, %v547
  %v724 = vand.u32 2147483647, %v548
  %v725 = vand.u32 2147483647, %v549
  %v726 = vand.u32 2147483647, %v550
  %v727 = vand.u32 2147483647, %v551
  %v728 = vand.u32 2147483647, %v552
  %v729 = vand.u32 2147483647, %v553
  %v730 = vand.u32 2147483647, %v554
  %v731 = vand.u32 2147483647, %v555
  %v732 = vand.u32 2147483647, %v556
  %vm733 = vcmp.le.f32.partialorder %v717, 1.6
  %vm734 = vcmp.le.f32.partialorder %v718, 1.6
  %vm735 = vcmp.le.f32.partialorder %v719, 1.6
  %vm736 = vcmp.le.f32.partialorder %v720, 1.6
  %vm737 = vcmp.le.f32.partialorder %v721, 1.6
  %vm738 = vcmp.le.f32.partialorder %v722, 1.6
  %vm739 = vcmp.le.f32.partialorder %v723, 1.6
  %vm740 = vcmp.le.f32.partialorder %v724, 1.6
  %vm741 = vcmp.le.f32.partialorder %v725, 1.6
  %vm742 = vcmp.le.f32.partialorder %v726, 1.6
  %vm743 = vcmp.le.f32.partialorder %v727, 1.6
  %vm744 = vcmp.le.f32.partialorder %v728, 1.6
  %vm745 = vcmp.le.f32.partialorder %v729, 1.6
  %vm746 = vcmp.le.f32.partialorder %v730, 1.6
  %vm747 = vcmp.le.f32.partialorder %v731, 1.6
  %vm748 = vcmp.le.f32.partialorder %v732, 1.6
  %v749 = vand.u32 2147483647, %v621
  %v750 = vand.u32 2147483647, %v622
  %v751 = vand.u32 2147483647, %v623
  %v752 = vand.u32 2147483647, %v624
  %v753 = vand.u32 2147483647, %v625
  %v754 = vand.u32 2147483647, %v626
  %v755 = vand.u32 2147483647, %v627
  %v756 = vand.u32 2147483647, %v628
  %v757 = vand.u32 2147483647, %v629
  %v758 = vand.u32 2147483647, %v630
  %v759 = vand.u32 2147483647, %v631
  %v760 = vand.u32 2147483647, %v632
  %v761 = vand.u32 2147483647, %v633
  %v762 = vand.u32 2147483647, %v634
  %v763 = vand.u32 2147483647, %v635
  %v764 = vand.u32 2147483647, %v636
  %vm765 = vcmp.le.f32.partialorder %v749, 1.6
  %vm766 = vcmp.le.f32.partialorder %v750, 1.6
  %vm767 = vcmp.le.f32.partialorder %v751, 1.6
  %vm768 = vcmp.le.f32.partialorder %v752, 1.6
  %vm769 = vcmp.le.f32.partialorder %v753, 1.6
  %vm770 = vcmp.le.f32.partialorder %v754, 1.6
  %vm771 = vcmp.le.f32.partialorder %v755, 1.6
  %vm772 = vcmp.le.f32.partialorder %v756, 1.6
  %vm773 = vcmp.le.f32.partialorder %v757, 1.6
  %vm774 = vcmp.le.f32.partialorder %v758, 1.6
  %vm775 = vcmp.le.f32.partialorder %v759, 1.6
  %vm776 = vcmp.le.f32.partialorder %v760, 1.6
  %vm777 = vcmp.le.f32.partialorder %v761, 1.6
  %vm778 = vcmp.le.f32.partialorder %v762, 1.6
  %vm779 = vcmp.le.f32.partialorder %v763, 1.6
  %vm780 = vcmp.le.f32.partialorder %v764, 1.6
  %vm781 = vmand %vm733, %vm765
  %vm782 = vmand %vm734, %vm766
  %vm783 = vmand %vm735, %vm767
  %vm784 = vmand %vm736, %vm768
  %vm785 = vmand %vm737, %vm769
  %vm786 = vmand %vm738, %vm770
  %vm787 = vmand %vm739, %vm771
  %vm788 = vmand %vm740, %vm772
  %vm789 = vmand %vm741, %vm773
  %vm790 = vmand %vm742, %vm774
  %vm791 = vmand %vm743, %vm775
  %vm792 = vmand %vm744, %vm776
  %vm793 = vmand %vm745, %vm777
  %vm794 = vmand %vm746, %vm778
  %vm795 = vmand %vm747, %vm779
  %vm796 = vmand %vm748, %vm780
  %v797 = vand.u32 2147483647, %v701
  %v798 = vand.u32 2147483647, %v702
  %v799 = vand.u32 2147483647, %v703
  %v800 = vand.u32 2147483647, %v704
  %v801 = vand.u32 2147483647, %v705
  %v802 = vand.u32 2147483647, %v706
  %v803 = vand.u32 2147483647, %v707
  %v804 = vand.u32 2147483647, %v708
  %v805 = vand.u32 2147483647, %v709
  %v806 = vand.u32 2147483647, %v710
  %v807 = vand.u32 2147483647, %v711
  %v808 = vand.u32 2147483647, %v712
  %v809 = vand.u32 2147483647, %v713
  %v810 = vand.u32 2147483647, %v714
  %v811 = vand.u32 2147483647, %v715
  %v812 = vand.u32 2147483647, %v716
  %vm813 = vcmp.le.f32.partialorder %v797, 1.6
  %vm814 = vcmp.le.f32.partialorder %v798, 1.6
  %vm815 = vcmp.le.f32.partialorder %v799, 1.6
  %vm816 = vcmp.le.f32.partialorder %v800, 1.6
  %vm817 = vcmp.le.f32.partialorder %v801, 1.6
  %vm818 = vcmp.le.f32.partialorder %v802, 1.6
  %vm819 = vcmp.le.f32.partialorder %v803, 1.6
  %vm820 = vcmp.le.f32.partialorder %v804, 1.6
  %vm821 = vcmp.le.f32.partialorder %v805, 1.6
  %vm822 = vcmp.le.f32.partialorder %v806, 1.6
  %vm823 = vcmp.le.f32.partialorder %v807, 1.6
  %vm824 = vcmp.le.f32.partialorder %v808, 1.6
  %vm825 = vcmp.le.f32.partialorder %v809, 1.6
  %vm826 = vcmp.le.f32.partialorder %v810, 1.6
  %vm827 = vcmp.le.f32.partialorder %v811, 1.6
  %vm828 = vcmp.le.f32.partialorder %v812, 1.6
  %vm829 = vmand %vm781, %vm813
  %vm830 = vmand %vm782, %vm814
  %vm831 = vmand %vm783, %vm815
  %vm832 = vmand %vm784, %vm816
  %vm833 = vmand %vm785, %vm817
  %vm834 = vmand %vm786, %vm818
  %vm835 = vmand %vm787, %vm819
  %vm836 = vmand %vm788, %vm820
  %vm837 = vmand %vm789, %vm821
  %vm838 = vmand %vm790, %vm822
  %vm839 = vmand %vm791, %vm823
  %vm840 = vmand %vm792, %vm824
  %vm841 = vmand %vm793, %vm825
  %vm842 = vmand %vm794, %vm826
  %vm843 = vmand %vm795, %vm827
  %vm844 = vmand %vm796, %vm828
  %845 = vset.pattern.permute.xlu0 0
  %846 = vperm.xlu0 %845, %v93
  %v847 = vpop.permute.xlu0 %846
  %848 = vset.pattern.permute.xlu0 0
  %849 = vperm.xlu0 %848, %v94
  %v850 = vpop.permute.xlu0 %849
  %851 = vset.pattern.permute.xlu0 0
  %852 = vperm.xlu0 %851, %v95
  %v853 = vpop.permute.xlu0 %852
  %854 = vset.pattern.permute.xlu0 0
  %855 = vperm.xlu0 %854, %v96
  %v856 = vpop.permute.xlu0 %855
  %857 = vset.pattern.permute.xlu0 0
  %858 = vperm.xlu0 %857, %v97
  %v859 = vpop.permute.xlu0 %858
  %860 = vset.pattern.permute.xlu0 0
  %861 = vperm.xlu0 %860, %v98
  %v862 = vpop.permute.xlu0 %861
  %863 = vset.pattern.permute.xlu0 0
  %864 = vperm.xlu0 %863, %v99
  %v865 = vpop.permute.xlu0 %864
  %866 = vset.pattern.permute.xlu0 0
  %867 = vperm.xlu0 %866, %v100
  %v868 = vpop.permute.xlu0 %867
  %869 = vset.pattern.permute.xlu0 0
  %870 = vperm.xlu0 %869, %v101
  %v871 = vpop.permute.xlu0 %870
  %872 = vset.pattern.permute.xlu0 0
  %873 = vperm.xlu0 %872, %v102
  %v874 = vpop.permute.xlu0 %873
  %875 = vset.pattern.permute.xlu0 0
  %876 = vperm.xlu0 %875, %v103
  %v877 = vpop.permute.xlu0 %876
  %878 = vset.pattern.permute.xlu0 0
  %879 = vperm.xlu0 %878, %v104
  %v880 = vpop.permute.xlu0 %879
  %881 = vset.pattern.permute.xlu0 0
  %882 = vperm.xlu0 %881, %v105
  %v883 = vpop.permute.xlu0 %882
  %884 = vset.pattern.permute.xlu0 0
  %885 = vperm.xlu0 %884, %v106
  %v886 = vpop.permute.xlu0 %885
  %887 = vset.pattern.permute.xlu0 0
  %888 = vperm.xlu0 %887, %v107
  %v889 = vpop.permute.xlu0 %888
  %890 = vset.pattern.permute.xlu0 0
  %891 = vperm.xlu0 %890, %v108
  %v892 = vpop.permute.xlu0 %891
  %v893 = vlaneseq
  %v894 = vshrl.u32 %v893, 7
  %v895 = vsub.s32 0, %v894
  %v896 = vrot.slane %v112, %v895
  %vm897 = vcmp.eq.s32.totalorder %v847, %v896
  %vm898 = vcmp.eq.s32.totalorder %v850, %v896
  %vm899 = vcmp.eq.s32.totalorder %v853, %v896
  %vm900 = vcmp.eq.s32.totalorder %v856, %v896
  %vm901 = vcmp.eq.s32.totalorder %v859, %v896
  %vm902 = vcmp.eq.s32.totalorder %v862, %v896
  %vm903 = vcmp.eq.s32.totalorder %v865, %v896
  %vm904 = vcmp.eq.s32.totalorder %v868, %v896
  %vm905 = vcmp.eq.s32.totalorder %v871, %v896
  %vm906 = vcmp.eq.s32.totalorder %v874, %v896
  %vm907 = vcmp.eq.s32.totalorder %v877, %v896
  %vm908 = vcmp.eq.s32.totalorder %v880, %v896
  %vm909 = vcmp.eq.s32.totalorder %v883, %v896
  %vm910 = vcmp.eq.s32.totalorder %v886, %v896
  %vm911 = vcmp.eq.s32.totalorder %v889, %v896
  %vm912 = vcmp.eq.s32.totalorder %v892, %v896
  %vm913 = vmand %vm829, %vm897
  %vm914 = vmand %vm830, %vm898
  %vm915 = vmand %vm831, %vm899
  %vm916 = vmand %vm832, %vm900
  %vm917 = vmand %vm833, %vm901
  %vm918 = vmand %vm834, %vm902
  %vm919 = vmand %vm835, %vm903
  %vm920 = vmand %vm836, %vm904
  %vm921 = vmand %vm837, %vm905
  %vm922 = vmand %vm838, %vm906
  %vm923 = vmand %vm839, %vm907
  %vm924 = vmand %vm840, %vm908
  %vm925 = vmand %vm841, %vm909
  %vm926 = vmand %vm842, %vm910
  %vm927 = vmand %vm843, %vm911
  %vm928 = vmand %vm844, %vm912
  %v929 = vsel %vm913, %v445, 1e+10
  %v930 = vsel %vm914, %v446, 1e+10
  %v931 = vsel %vm915, %v447, 1e+10
  %v932 = vsel %vm916, %v448, 1e+10
  %v933 = vsel %vm917, %v449, 1e+10
  %v934 = vsel %vm918, %v450, 1e+10
  %v935 = vsel %vm919, %v451, 1e+10
  %v936 = vsel %vm920, %v452, 1e+10
  %v937 = vsel %vm921, %v453, 1e+10
  %v938 = vsel %vm922, %v454, 1e+10
  %v939 = vsel %vm923, %v455, 1e+10
  %v940 = vsel %vm924, %v456, 1e+10
  %v941 = vsel %vm925, %v457, 1e+10
  %v942 = vsel %vm926, %v458, 1e+10
  %v943 = vsel %vm927, %v459, 1e+10
  %v944 = vsel %vm928, %v460, 1e+10
  %s945 = smul.u32 0, 128
  %v946 = vlaneseq
  %v947 = vand.u32 %v946, 127
  %v948 = vstv %s945
  %v949 = vadd.s32 %v948, %v947
  %v950 = vld [vmem:[#allocation2] sm:$0xff]
  %v951 = vld [vmem:[#allocation2 + $0x8] sm:$0xff]
  %v952 = vld [vmem:[#allocation2 + $0x10] sm:$0xff]
  %v953 = vld [vmem:[#allocation2 + $0x18] sm:$0xff]
  %v954 = vld [vmem:[#allocation2 + $0x20] sm:$0xff]
  %v955 = vld [vmem:[#allocation2 + $0x28] sm:$0xff]
  %v956 = vld [vmem:[#allocation2 + $0x30] sm:$0xff]
  %v957 = vld [vmem:[#allocation2 + $0x38] sm:$0xff]
  %v958 = vld [vmem:[#allocation2 + $0x40] sm:$0xff]
  %v959 = vld [vmem:[#allocation2 + $0x48] sm:$0xff]
  %v960 = vld [vmem:[#allocation2 + $0x50] sm:$0xff]
  %v961 = vld [vmem:[#allocation2 + $0x58] sm:$0xff]
  %v962 = vld [vmem:[#allocation2 + $0x60] sm:$0xff]
  %v963 = vld [vmem:[#allocation2 + $0x68] sm:$0xff]
  %v964 = vld [vmem:[#allocation2 + $0x70] sm:$0xff]
  %v965 = vld [vmem:[#allocation2 + $0x78] sm:$0xff]
  %v966 = vld [vmem:[#allocation3] sm:$0xff]
  %v967 = vld [vmem:[#allocation3 + $0x8] sm:$0xff]
  %v968 = vld [vmem:[#allocation3 + $0x10] sm:$0xff]
  %v969 = vld [vmem:[#allocation3 + $0x18] sm:$0xff]
  %v970 = vld [vmem:[#allocation3 + $0x20] sm:$0xff]
  %v971 = vld [vmem:[#allocation3 + $0x28] sm:$0xff]
  %v972 = vld [vmem:[#allocation3 + $0x30] sm:$0xff]
  %v973 = vld [vmem:[#allocation3 + $0x38] sm:$0xff]
  %v974 = vld [vmem:[#allocation3 + $0x40] sm:$0xff]
  %v975 = vld [vmem:[#allocation3 + $0x48] sm:$0xff]
  %v976 = vld [vmem:[#allocation3 + $0x50] sm:$0xff]
  %v977 = vld [vmem:[#allocation3 + $0x58] sm:$0xff]
  %v978 = vld [vmem:[#allocation3 + $0x60] sm:$0xff]
  %v979 = vld [vmem:[#allocation3 + $0x68] sm:$0xff]
  %v980 = vld [vmem:[#allocation3 + $0x70] sm:$0xff]
  %v981 = vld [vmem:[#allocation3 + $0x78] sm:$0xff]
  %v982 = vmin.f32 %v950, %v929
  %983 = vmin.xlane.f32.xlu0 %v982
  %v984 = vpop.xlane.xlu0 %983
  %v985 = vmin.f32 %v951, %v930
  %986 = vmin.xlane.f32.xlu0 %v985
  %v987 = vpop.xlane.xlu0 %986
  %v988 = vmin.f32 %v952, %v931
  %989 = vmin.xlane.f32.xlu0 %v988
  %v990 = vpop.xlane.xlu0 %989
  %v991 = vmin.f32 %v953, %v932
  %992 = vmin.xlane.f32.xlu0 %v991
  %v993 = vpop.xlane.xlu0 %992
  %v994 = vmin.f32 %v954, %v933
  %995 = vmin.xlane.f32.xlu0 %v994
  %v996 = vpop.xlane.xlu0 %995
  %v997 = vmin.f32 %v955, %v934
  %998 = vmin.xlane.f32.xlu0 %v997
  %v999 = vpop.xlane.xlu0 %998
  %v1000 = vmin.f32 %v956, %v935
  %1001 = vmin.xlane.f32.xlu0 %v1000
  %v1002 = vpop.xlane.xlu0 %1001
  %v1003 = vmin.f32 %v957, %v936
  %1004 = vmin.xlane.f32.xlu0 %v1003
  %v1005 = vpop.xlane.xlu0 %1004
  %v1006 = vmin.f32 %v958, %v937
  %1007 = vmin.xlane.f32.xlu0 %v1006
  %v1008 = vpop.xlane.xlu0 %1007
  %v1009 = vmin.f32 %v959, %v938
  %1010 = vmin.xlane.f32.xlu0 %v1009
  %v1011 = vpop.xlane.xlu0 %1010
  %v1012 = vmin.f32 %v960, %v939
  %1013 = vmin.xlane.f32.xlu0 %v1012
  %v1014 = vpop.xlane.xlu0 %1013
  %v1015 = vmin.f32 %v961, %v940
  %1016 = vmin.xlane.f32.xlu0 %v1015
  %v1017 = vpop.xlane.xlu0 %1016
  %v1018 = vmin.f32 %v962, %v941
  %1019 = vmin.xlane.f32.xlu0 %v1018
  %v1020 = vpop.xlane.xlu0 %1019
  %v1021 = vmin.f32 %v963, %v942
  %1022 = vmin.xlane.f32.xlu0 %v1021
  %v1023 = vpop.xlane.xlu0 %1022
  %v1024 = vmin.f32 %v964, %v943
  %1025 = vmin.xlane.f32.xlu0 %v1024
  %v1026 = vpop.xlane.xlu0 %1025
  %v1027 = vmin.f32 %v965, %v944
  %1028 = vmin.xlane.f32.xlu0 %v1027
  %v1029 = vpop.xlane.xlu0 %1028
  %vm1030 = vcmp.eq.f32.partialorder %v950, %v984
  %vm1031 = vcmp.eq.f32.partialorder %v929, %v984
  %vm1032 = vcmp.eq.f32.partialorder %v951, %v987
  %vm1033 = vcmp.eq.f32.partialorder %v930, %v987
  %vm1034 = vcmp.eq.f32.partialorder %v952, %v990
  %vm1035 = vcmp.eq.f32.partialorder %v931, %v990
  %vm1036 = vcmp.eq.f32.partialorder %v953, %v993
  %vm1037 = vcmp.eq.f32.partialorder %v932, %v993
  %vm1038 = vcmp.eq.f32.partialorder %v954, %v996
  %vm1039 = vcmp.eq.f32.partialorder %v933, %v996
  %vm1040 = vcmp.eq.f32.partialorder %v955, %v999
  %vm1041 = vcmp.eq.f32.partialorder %v934, %v999
  %vm1042 = vcmp.eq.f32.partialorder %v956, %v1002
  %vm1043 = vcmp.eq.f32.partialorder %v935, %v1002
  %vm1044 = vcmp.eq.f32.partialorder %v957, %v1005
  %vm1045 = vcmp.eq.f32.partialorder %v936, %v1005
  %vm1046 = vcmp.eq.f32.partialorder %v958, %v1008
  %vm1047 = vcmp.eq.f32.partialorder %v937, %v1008
  %vm1048 = vcmp.eq.f32.partialorder %v959, %v1011
  %vm1049 = vcmp.eq.f32.partialorder %v938, %v1011
  %vm1050 = vcmp.eq.f32.partialorder %v960, %v1014
  %vm1051 = vcmp.eq.f32.partialorder %v939, %v1014
  %vm1052 = vcmp.eq.f32.partialorder %v961, %v1017
  %vm1053 = vcmp.eq.f32.partialorder %v940, %v1017
  %vm1054 = vcmp.eq.f32.partialorder %v962, %v1020
  %vm1055 = vcmp.eq.f32.partialorder %v941, %v1020
  %vm1056 = vcmp.eq.f32.partialorder %v963, %v1023
  %vm1057 = vcmp.eq.f32.partialorder %v942, %v1023
  %vm1058 = vcmp.eq.f32.partialorder %v964, %v1026
  %vm1059 = vcmp.eq.f32.partialorder %v943, %v1026
  %vm1060 = vcmp.eq.f32.partialorder %v965, %v1029
  %vm1061 = vcmp.eq.f32.partialorder %v944, %v1029
  %v1062 = vcvt.s32.f32 %v966
  %v1063 = vcvt.s32.f32 %v949
  %v1064 = vcvt.s32.f32 %v967
  %v1065 = vcvt.s32.f32 %v968
  %v1066 = vcvt.s32.f32 %v969
  %v1067 = vcvt.s32.f32 %v970
  %v1068 = vcvt.s32.f32 %v971
  %v1069 = vcvt.s32.f32 %v972
  %v1070 = vcvt.s32.f32 %v973
  %v1071 = vcvt.s32.f32 %v974
  %v1072 = vcvt.s32.f32 %v975
  %v1073 = vcvt.s32.f32 %v976
  %v1074 = vcvt.s32.f32 %v977
  %v1075 = vcvt.s32.f32 %v978
  %v1076 = vcvt.s32.f32 %v979
  %v1077 = vcvt.s32.f32 %v980
  %v1078 = vcvt.s32.f32 %v981
  %v1079 = vsel %vm1030, %v1062, 1e+09
  %v1080 = vsel %vm1031, %v1063, 1e+09
  %v1081 = vsel %vm1032, %v1064, 1e+09
  %v1082 = vsel %vm1033, %v1063, 1e+09
  %v1083 = vsel %vm1034, %v1065, 1e+09
  %v1084 = vsel %vm1035, %v1063, 1e+09
  %v1085 = vsel %vm1036, %v1066, 1e+09
  %v1086 = vsel %vm1037, %v1063, 1e+09
  %v1087 = vsel %vm1038, %v1067, 1e+09
  %v1088 = vsel %vm1039, %v1063, 1e+09
  %v1089 = vsel %vm1040, %v1068, 1e+09
  %v1090 = vsel %vm1041, %v1063, 1e+09
  %v1091 = vsel %vm1042, %v1069, 1e+09
  %v1092 = vsel %vm1043, %v1063, 1e+09
  %v1093 = vsel %vm1044, %v1070, 1e+09
  %v1094 = vsel %vm1045, %v1063, 1e+09
  %v1095 = vsel %vm1046, %v1071, 1e+09
  %v1096 = vsel %vm1047, %v1063, 1e+09
  %v1097 = vsel %vm1048, %v1072, 1e+09
  %v1098 = vsel %vm1049, %v1063, 1e+09
  %v1099 = vsel %vm1050, %v1073, 1e+09
  %v1100 = vsel %vm1051, %v1063, 1e+09
  %v1101 = vsel %vm1052, %v1074, 1e+09
  %v1102 = vsel %vm1053, %v1063, 1e+09
  %v1103 = vsel %vm1054, %v1075, 1e+09
  %v1104 = vsel %vm1055, %v1063, 1e+09
  %v1105 = vsel %vm1056, %v1076, 1e+09
  %v1106 = vsel %vm1057, %v1063, 1e+09
  %v1107 = vsel %vm1058, %v1077, 1e+09
  %v1108 = vsel %vm1059, %v1063, 1e+09
  %v1109 = vsel %vm1060, %v1078, 1e+09
  %v1110 = vsel %vm1061, %v1063, 1e+09
  %v1111 = vmin.f32 %v1079, %v1080
  %1112 = vmin.xlane.f32.xlu0 %v1111
  %v1113 = vpop.xlane.xlu0 %1112
  %v1114 = vmin.f32 %v1081, %v1082
  %1115 = vmin.xlane.f32.xlu0 %v1114
  %v1116 = vpop.xlane.xlu0 %1115
  %v1117 = vmin.f32 %v1083, %v1084
  %1118 = vmin.xlane.f32.xlu0 %v1117
  %v1119 = vpop.xlane.xlu0 %1118
  %v1120 = vmin.f32 %v1085, %v1086
  %1121 = vmin.xlane.f32.xlu0 %v1120
  %v1122 = vpop.xlane.xlu0 %1121
  %v1123 = vmin.f32 %v1087, %v1088
  %1124 = vmin.xlane.f32.xlu0 %v1123
  %v1125 = vpop.xlane.xlu0 %1124
  %v1126 = vmin.f32 %v1089, %v1090
  %1127 = vmin.xlane.f32.xlu0 %v1126
  %v1128 = vpop.xlane.xlu0 %1127
  %v1129 = vmin.f32 %v1091, %v1092
  %1130 = vmin.xlane.f32.xlu0 %v1129
  %v1131 = vpop.xlane.xlu0 %1130
  %v1132 = vmin.f32 %v1093, %v1094
  %1133 = vmin.xlane.f32.xlu0 %v1132
  %v1134 = vpop.xlane.xlu0 %1133
  %v1135 = vmin.f32 %v1095, %v1096
  %1136 = vmin.xlane.f32.xlu0 %v1135
  %v1137 = vpop.xlane.xlu0 %1136
  %v1138 = vmin.f32 %v1097, %v1098
  %1139 = vmin.xlane.f32.xlu0 %v1138
  %v1140 = vpop.xlane.xlu0 %1139
  %v1141 = vmin.f32 %v1099, %v1100
  %1142 = vmin.xlane.f32.xlu0 %v1141
  %v1143 = vpop.xlane.xlu0 %1142
  %v1144 = vmin.f32 %v1101, %v1102
  %1145 = vmin.xlane.f32.xlu0 %v1144
  %v1146 = vpop.xlane.xlu0 %1145
  %v1147 = vmin.f32 %v1103, %v1104
  %1148 = vmin.xlane.f32.xlu0 %v1147
  %v1149 = vpop.xlane.xlu0 %1148
  %v1150 = vmin.f32 %v1105, %v1106
  %1151 = vmin.xlane.f32.xlu0 %v1150
  %v1152 = vpop.xlane.xlu0 %1151
  %v1153 = vmin.f32 %v1107, %v1108
  %1154 = vmin.xlane.f32.xlu0 %v1153
  %v1155 = vpop.xlane.xlu0 %1154
  %v1156 = vmin.f32 %v1109, %v1110
  %1157 = vmin.xlane.f32.xlu0 %v1156
  %v1158 = vpop.xlane.xlu0 %1157
  %v1159 = vcvt.f32.s32.to.zero.pseudo %v1113
  %v1160 = vcvt.f32.s32.to.zero.pseudo %v1116
  %v1161 = vcvt.f32.s32.to.zero.pseudo %v1119
  %v1162 = vcvt.f32.s32.to.zero.pseudo %v1122
  %v1163 = vcvt.f32.s32.to.zero.pseudo %v1125
  %v1164 = vcvt.f32.s32.to.zero.pseudo %v1128
  %v1165 = vcvt.f32.s32.to.zero.pseudo %v1131
  %v1166 = vcvt.f32.s32.to.zero.pseudo %v1134
  %v1167 = vcvt.f32.s32.to.zero.pseudo %v1137
  %v1168 = vcvt.f32.s32.to.zero.pseudo %v1140
  %v1169 = vcvt.f32.s32.to.zero.pseudo %v1143
  %v1170 = vcvt.f32.s32.to.zero.pseudo %v1146
  %v1171 = vcvt.f32.s32.to.zero.pseudo %v1149
  %v1172 = vcvt.f32.s32.to.zero.pseudo %v1152
  %v1173 = vcvt.f32.s32.to.zero.pseudo %v1155
  %v1174 = vcvt.f32.s32.to.zero.pseudo %v1158
  %vm1175 = vcmp.eq.s32.totalorder %v966, %v1159
  %vm1176 = vcmp.eq.s32.totalorder %v949, %v1159
  %vm1177 = vcmp.eq.s32.totalorder %v967, %v1160
  %vm1178 = vcmp.eq.s32.totalorder %v949, %v1160
  %vm1179 = vcmp.eq.s32.totalorder %v968, %v1161
  %vm1180 = vcmp.eq.s32.totalorder %v949, %v1161
  %vm1181 = vcmp.eq.s32.totalorder %v969, %v1162
  %vm1182 = vcmp.eq.s32.totalorder %v949, %v1162
  %vm1183 = vcmp.eq.s32.totalorder %v970, %v1163
  %vm1184 = vcmp.eq.s32.totalorder %v949, %v1163
  %vm1185 = vcmp.eq.s32.totalorder %v971, %v1164
  %vm1186 = vcmp.eq.s32.totalorder %v949, %v1164
  %vm1187 = vcmp.eq.s32.totalorder %v972, %v1165
  %vm1188 = vcmp.eq.s32.totalorder %v949, %v1165
  %vm1189 = vcmp.eq.s32.totalorder %v973, %v1166
  %vm1190 = vcmp.eq.s32.totalorder %v949, %v1166
  %vm1191 = vcmp.eq.s32.totalorder %v974, %v1167
  %vm1192 = vcmp.eq.s32.totalorder %v949, %v1167
  %vm1193 = vcmp.eq.s32.totalorder %v975, %v1168
  %vm1194 = vcmp.eq.s32.totalorder %v949, %v1168
  %vm1195 = vcmp.eq.s32.totalorder %v976, %v1169
  %vm1196 = vcmp.eq.s32.totalorder %v949, %v1169
  %vm1197 = vcmp.eq.s32.totalorder %v977, %v1170
  %vm1198 = vcmp.eq.s32.totalorder %v949, %v1170
  %vm1199 = vcmp.eq.s32.totalorder %v978, %v1171
  %vm1200 = vcmp.eq.s32.totalorder %v949, %v1171
  %vm1201 = vcmp.eq.s32.totalorder %v979, %v1172
  %vm1202 = vcmp.eq.s32.totalorder %v949, %v1172
  %vm1203 = vcmp.eq.s32.totalorder %v980, %v1173
  %vm1204 = vcmp.eq.s32.totalorder %v949, %v1173
  %vm1205 = vcmp.eq.s32.totalorder %v981, %v1174
  %vm1206 = vcmp.eq.s32.totalorder %v949, %v1174
  %v1207 = vsel %vm1175, 1e+10, %v950
  %v1208 = vsel %vm1176, 1e+10, %v929
  %v1209 = vsel %vm1177, 1e+10, %v951
  %v1210 = vsel %vm1178, 1e+10, %v930
  %v1211 = vsel %vm1179, 1e+10, %v952
  %v1212 = vsel %vm1180, 1e+10, %v931
  %v1213 = vsel %vm1181, 1e+10, %v953
  %v1214 = vsel %vm1182, 1e+10, %v932
  %v1215 = vsel %vm1183, 1e+10, %v954
  %v1216 = vsel %vm1184, 1e+10, %v933
  %v1217 = vsel %vm1185, 1e+10, %v955
  %v1218 = vsel %vm1186, 1e+10, %v934
  %v1219 = vsel %vm1187, 1e+10, %v956
  %v1220 = vsel %vm1188, 1e+10, %v935
  %v1221 = vsel %vm1189, 1e+10, %v957
  %v1222 = vsel %vm1190, 1e+10, %v936
  %v1223 = vsel %vm1191, 1e+10, %v958
  %v1224 = vsel %vm1192, 1e+10, %v937
  %v1225 = vsel %vm1193, 1e+10, %v959
  %v1226 = vsel %vm1194, 1e+10, %v938
  %v1227 = vsel %vm1195, 1e+10, %v960
  %v1228 = vsel %vm1196, 1e+10, %v939
  %v1229 = vsel %vm1197, 1e+10, %v961
  %v1230 = vsel %vm1198, 1e+10, %v940
  %v1231 = vsel %vm1199, 1e+10, %v962
  %v1232 = vsel %vm1200, 1e+10, %v941
  %v1233 = vsel %vm1201, 1e+10, %v963
  %v1234 = vsel %vm1202, 1e+10, %v942
  %v1235 = vsel %vm1203, 1e+10, %v964
  %v1236 = vsel %vm1204, 1e+10, %v943
  %v1237 = vsel %vm1205, 1e+10, %v965
  %v1238 = vsel %vm1206, 1e+10, %v944
  %v1239 = vmin.f32 %v1207, %v1208
  %1240 = vmin.xlane.f32.xlu0 %v1239
  %v1241 = vpop.xlane.xlu0 %1240
  %v1242 = vmin.f32 %v1209, %v1210
  %1243 = vmin.xlane.f32.xlu0 %v1242
  %v1244 = vpop.xlane.xlu0 %1243
  %v1245 = vmin.f32 %v1211, %v1212
  %1246 = vmin.xlane.f32.xlu0 %v1245
  %v1247 = vpop.xlane.xlu0 %1246
  %v1248 = vmin.f32 %v1213, %v1214
  %1249 = vmin.xlane.f32.xlu0 %v1248
  %v1250 = vpop.xlane.xlu0 %1249
  %v1251 = vmin.f32 %v1215, %v1216
  %1252 = vmin.xlane.f32.xlu0 %v1251
  %v1253 = vpop.xlane.xlu0 %1252
  %v1254 = vmin.f32 %v1217, %v1218
  %1255 = vmin.xlane.f32.xlu0 %v1254
  %v1256 = vpop.xlane.xlu0 %1255
  %v1257 = vmin.f32 %v1219, %v1220
  %1258 = vmin.xlane.f32.xlu0 %v1257
  %v1259 = vpop.xlane.xlu0 %1258
  %v1260 = vmin.f32 %v1221, %v1222
  %1261 = vmin.xlane.f32.xlu0 %v1260
  %v1262 = vpop.xlane.xlu0 %1261
  %v1263 = vmin.f32 %v1223, %v1224
  %1264 = vmin.xlane.f32.xlu0 %v1263
  %v1265 = vpop.xlane.xlu0 %1264
  %v1266 = vmin.f32 %v1225, %v1226
  %1267 = vmin.xlane.f32.xlu0 %v1266
  %v1268 = vpop.xlane.xlu0 %1267
  %v1269 = vmin.f32 %v1227, %v1228
  %1270 = vmin.xlane.f32.xlu0 %v1269
  %v1271 = vpop.xlane.xlu0 %1270
  %v1272 = vmin.f32 %v1229, %v1230
  %1273 = vmin.xlane.f32.xlu0 %v1272
  %v1274 = vpop.xlane.xlu0 %1273
  %v1275 = vmin.f32 %v1231, %v1232
  %1276 = vmin.xlane.f32.xlu0 %v1275
  %v1277 = vpop.xlane.xlu0 %1276
  %v1278 = vmin.f32 %v1233, %v1234
  %1279 = vmin.xlane.f32.xlu0 %v1278
  %v1280 = vpop.xlane.xlu0 %1279
  %v1281 = vmin.f32 %v1235, %v1236
  %1282 = vmin.xlane.f32.xlu0 %v1281
  %v1283 = vpop.xlane.xlu0 %1282
  %v1284 = vmin.f32 %v1237, %v1238
  %1285 = vmin.xlane.f32.xlu0 %v1284
  %v1286 = vpop.xlane.xlu0 %1285
  %vm1287 = vcmp.eq.f32.partialorder %v1207, %v1241
  %vm1288 = vcmp.eq.f32.partialorder %v1208, %v1241
  %vm1289 = vcmp.eq.f32.partialorder %v1209, %v1244
  %vm1290 = vcmp.eq.f32.partialorder %v1210, %v1244
  %vm1291 = vcmp.eq.f32.partialorder %v1211, %v1247
  %vm1292 = vcmp.eq.f32.partialorder %v1212, %v1247
  %vm1293 = vcmp.eq.f32.partialorder %v1213, %v1250
  %vm1294 = vcmp.eq.f32.partialorder %v1214, %v1250
  %vm1295 = vcmp.eq.f32.partialorder %v1215, %v1253
  %vm1296 = vcmp.eq.f32.partialorder %v1216, %v1253
  %vm1297 = vcmp.eq.f32.partialorder %v1217, %v1256
  %vm1298 = vcmp.eq.f32.partialorder %v1218, %v1256
  %vm1299 = vcmp.eq.f32.partialorder %v1219, %v1259
  %vm1300 = vcmp.eq.f32.partialorder %v1220, %v1259
  %vm1301 = vcmp.eq.f32.partialorder %v1221, %v1262
  %vm1302 = vcmp.eq.f32.partialorder %v1222, %v1262
  %vm1303 = vcmp.eq.f32.partialorder %v1223, %v1265
  %vm1304 = vcmp.eq.f32.partialorder %v1224, %v1265
  %vm1305 = vcmp.eq.f32.partialorder %v1225, %v1268
  %vm1306 = vcmp.eq.f32.partialorder %v1226, %v1268
  %vm1307 = vcmp.eq.f32.partialorder %v1227, %v1271
  %vm1308 = vcmp.eq.f32.partialorder %v1228, %v1271
  %vm1309 = vcmp.eq.f32.partialorder %v1229, %v1274
  %vm1310 = vcmp.eq.f32.partialorder %v1230, %v1274
  %vm1311 = vcmp.eq.f32.partialorder %v1231, %v1277
  %vm1312 = vcmp.eq.f32.partialorder %v1232, %v1277
  %vm1313 = vcmp.eq.f32.partialorder %v1233, %v1280
  %vm1314 = vcmp.eq.f32.partialorder %v1234, %v1280
  %vm1315 = vcmp.eq.f32.partialorder %v1235, %v1283
  %vm1316 = vcmp.eq.f32.partialorder %v1236, %v1283
  %vm1317 = vcmp.eq.f32.partialorder %v1237, %v1286
  %vm1318 = vcmp.eq.f32.partialorder %v1238, %v1286
  %v1319 = vsel %vm1287, %v1062, 1e+09
  %v1320 = vsel %vm1288, %v1063, 1e+09
  %v1321 = vsel %vm1289, %v1064, 1e+09
  %v1322 = vsel %vm1290, %v1063, 1e+09
  %v1323 = vsel %vm1291, %v1065, 1e+09
  %v1324 = vsel %vm1292, %v1063, 1e+09
  %v1325 = vsel %vm1293, %v1066, 1e+09
  %v1326 = vsel %vm1294, %v1063, 1e+09
  %v1327 = vsel %vm1295, %v1067, 1e+09
  %v1328 = vsel %vm1296, %v1063, 1e+09
  %v1329 = vsel %vm1297, %v1068, 1e+09
  %v1330 = vsel %vm1298, %v1063, 1e+09
  %v1331 = vsel %vm1299, %v1069, 1e+09
  %v1332 = vsel %vm1300, %v1063, 1e+09
  %v1333 = vsel %vm1301, %v1070, 1e+09
  %v1334 = vsel %vm1302, %v1063, 1e+09
  %v1335 = vsel %vm1303, %v1071, 1e+09
  %v1336 = vsel %vm1304, %v1063, 1e+09
  %v1337 = vsel %vm1305, %v1072, 1e+09
  %v1338 = vsel %vm1306, %v1063, 1e+09
  %v1339 = vsel %vm1307, %v1073, 1e+09
  %v1340 = vsel %vm1308, %v1063, 1e+09
  %v1341 = vsel %vm1309, %v1074, 1e+09
  %v1342 = vsel %vm1310, %v1063, 1e+09
  %v1343 = vsel %vm1311, %v1075, 1e+09
  %v1344 = vsel %vm1312, %v1063, 1e+09
  %v1345 = vsel %vm1313, %v1076, 1e+09
  %v1346 = vsel %vm1314, %v1063, 1e+09
  %v1347 = vsel %vm1315, %v1077, 1e+09
  %v1348 = vsel %vm1316, %v1063, 1e+09
  %v1349 = vsel %vm1317, %v1078, 1e+09
  %v1350 = vsel %vm1318, %v1063, 1e+09
  %v1351 = vmin.f32 %v1319, %v1320
  %1352 = vmin.xlane.f32.xlu0 %v1351
  %v1353 = vpop.xlane.xlu0 %1352
  %v1354 = vmin.f32 %v1321, %v1322
  %1355 = vmin.xlane.f32.xlu0 %v1354
  %v1356 = vpop.xlane.xlu0 %1355
  %v1357 = vmin.f32 %v1323, %v1324
  %1358 = vmin.xlane.f32.xlu0 %v1357
  %v1359 = vpop.xlane.xlu0 %1358
  %v1360 = vmin.f32 %v1325, %v1326
  %1361 = vmin.xlane.f32.xlu0 %v1360
  %v1362 = vpop.xlane.xlu0 %1361
  %v1363 = vmin.f32 %v1327, %v1328
  %1364 = vmin.xlane.f32.xlu0 %v1363
  %v1365 = vpop.xlane.xlu0 %1364
  %v1366 = vmin.f32 %v1329, %v1330
  %1367 = vmin.xlane.f32.xlu0 %v1366
  %v1368 = vpop.xlane.xlu0 %1367
  %v1369 = vmin.f32 %v1331, %v1332
  %1370 = vmin.xlane.f32.xlu0 %v1369
  %v1371 = vpop.xlane.xlu0 %1370
  %v1372 = vmin.f32 %v1333, %v1334
  %1373 = vmin.xlane.f32.xlu0 %v1372
  %v1374 = vpop.xlane.xlu0 %1373
  %v1375 = vmin.f32 %v1335, %v1336
  %1376 = vmin.xlane.f32.xlu0 %v1375
  %v1377 = vpop.xlane.xlu0 %1376
  %v1378 = vmin.f32 %v1337, %v1338
  %1379 = vmin.xlane.f32.xlu0 %v1378
  %v1380 = vpop.xlane.xlu0 %1379
  %v1381 = vmin.f32 %v1339, %v1340
  %1382 = vmin.xlane.f32.xlu0 %v1381
  %v1383 = vpop.xlane.xlu0 %1382
  %v1384 = vmin.f32 %v1341, %v1342
  %1385 = vmin.xlane.f32.xlu0 %v1384
  %v1386 = vpop.xlane.xlu0 %1385
  %v1387 = vmin.f32 %v1343, %v1344
  %1388 = vmin.xlane.f32.xlu0 %v1387
  %v1389 = vpop.xlane.xlu0 %1388
  %v1390 = vmin.f32 %v1345, %v1346
  %1391 = vmin.xlane.f32.xlu0 %v1390
  %v1392 = vpop.xlane.xlu0 %1391
  %v1393 = vmin.f32 %v1347, %v1348
  %1394 = vmin.xlane.f32.xlu0 %v1393
  %v1395 = vpop.xlane.xlu0 %1394
  %v1396 = vmin.f32 %v1349, %v1350
  %1397 = vmin.xlane.f32.xlu0 %v1396
  %v1398 = vpop.xlane.xlu0 %1397
  %v1399 = vcvt.f32.s32.to.zero.pseudo %v1353
  %v1400 = vcvt.f32.s32.to.zero.pseudo %v1356
  %v1401 = vcvt.f32.s32.to.zero.pseudo %v1359
  %v1402 = vcvt.f32.s32.to.zero.pseudo %v1362
  %v1403 = vcvt.f32.s32.to.zero.pseudo %v1365
  %v1404 = vcvt.f32.s32.to.zero.pseudo %v1368
  %v1405 = vcvt.f32.s32.to.zero.pseudo %v1371
  %v1406 = vcvt.f32.s32.to.zero.pseudo %v1374
  %v1407 = vcvt.f32.s32.to.zero.pseudo %v1377
  %v1408 = vcvt.f32.s32.to.zero.pseudo %v1380
  %v1409 = vcvt.f32.s32.to.zero.pseudo %v1383
  %v1410 = vcvt.f32.s32.to.zero.pseudo %v1386
  %v1411 = vcvt.f32.s32.to.zero.pseudo %v1389
  %v1412 = vcvt.f32.s32.to.zero.pseudo %v1392
  %v1413 = vcvt.f32.s32.to.zero.pseudo %v1395
  %v1414 = vcvt.f32.s32.to.zero.pseudo %v1398
  %vm1415 = vcmp.eq.s32.totalorder %v966, %v1399
  %vm1416 = vcmp.eq.s32.totalorder %v949, %v1399
  %vm1417 = vcmp.eq.s32.totalorder %v967, %v1400
  %vm1418 = vcmp.eq.s32.totalorder %v949, %v1400
  %vm1419 = vcmp.eq.s32.totalorder %v968, %v1401
  %vm1420 = vcmp.eq.s32.totalorder %v949, %v1401
  %vm1421 = vcmp.eq.s32.totalorder %v969, %v1402
  %vm1422 = vcmp.eq.s32.totalorder %v949, %v1402
  %vm1423 = vcmp.eq.s32.totalorder %v970, %v1403
  %vm1424 = vcmp.eq.s32.totalorder %v949, %v1403
  %vm1425 = vcmp.eq.s32.totalorder %v971, %v1404
  %vm1426 = vcmp.eq.s32.totalorder %v949, %v1404
  %vm1427 = vcmp.eq.s32.totalorder %v972, %v1405
  %vm1428 = vcmp.eq.s32.totalorder %v949, %v1405
  %vm1429 = vcmp.eq.s32.totalorder %v973, %v1406
  %vm1430 = vcmp.eq.s32.totalorder %v949, %v1406
  %vm1431 = vcmp.eq.s32.totalorder %v974, %v1407
  %vm1432 = vcmp.eq.s32.totalorder %v949, %v1407
  %vm1433 = vcmp.eq.s32.totalorder %v975, %v1408
  %vm1434 = vcmp.eq.s32.totalorder %v949, %v1408
  %vm1435 = vcmp.eq.s32.totalorder %v976, %v1409
  %vm1436 = vcmp.eq.s32.totalorder %v949, %v1409
  %vm1437 = vcmp.eq.s32.totalorder %v977, %v1410
  %vm1438 = vcmp.eq.s32.totalorder %v949, %v1410
  %vm1439 = vcmp.eq.s32.totalorder %v978, %v1411
  %vm1440 = vcmp.eq.s32.totalorder %v949, %v1411
  %vm1441 = vcmp.eq.s32.totalorder %v979, %v1412
  %vm1442 = vcmp.eq.s32.totalorder %v949, %v1412
  %vm1443 = vcmp.eq.s32.totalorder %v980, %v1413
  %vm1444 = vcmp.eq.s32.totalorder %v949, %v1413
  %vm1445 = vcmp.eq.s32.totalorder %v981, %v1414
  %vm1446 = vcmp.eq.s32.totalorder %v949, %v1414
  %v1447 = vsel %vm1415, 1e+10, %v1207
  %v1448 = vsel %vm1416, 1e+10, %v1208
  %v1449 = vsel %vm1417, 1e+10, %v1209
  %v1450 = vsel %vm1418, 1e+10, %v1210
  %v1451 = vsel %vm1419, 1e+10, %v1211
  %v1452 = vsel %vm1420, 1e+10, %v1212
  %v1453 = vsel %vm1421, 1e+10, %v1213
  %v1454 = vsel %vm1422, 1e+10, %v1214
  %v1455 = vsel %vm1423, 1e+10, %v1215
  %v1456 = vsel %vm1424, 1e+10, %v1216
  %v1457 = vsel %vm1425, 1e+10, %v1217
  %v1458 = vsel %vm1426, 1e+10, %v1218
  %v1459 = vsel %vm1427, 1e+10, %v1219
  %v1460 = vsel %vm1428, 1e+10, %v1220
  %v1461 = vsel %vm1429, 1e+10, %v1221
  %v1462 = vsel %vm1430, 1e+10, %v1222
  %v1463 = vsel %vm1431, 1e+10, %v1223
  %v1464 = vsel %vm1432, 1e+10, %v1224
  %v1465 = vsel %vm1433, 1e+10, %v1225
  %v1466 = vsel %vm1434, 1e+10, %v1226
  %v1467 = vsel %vm1435, 1e+10, %v1227
  %v1468 = vsel %vm1436, 1e+10, %v1228
  %v1469 = vsel %vm1437, 1e+10, %v1229
  %v1470 = vsel %vm1438, 1e+10, %v1230
  %v1471 = vsel %vm1439, 1e+10, %v1231
  %v1472 = vsel %vm1440, 1e+10, %v1232
  %v1473 = vsel %vm1441, 1e+10, %v1233
  %v1474 = vsel %vm1442, 1e+10, %v1234
  %v1475 = vsel %vm1443, 1e+10, %v1235
  %v1476 = vsel %vm1444, 1e+10, %v1236
  %v1477 = vsel %vm1445, 1e+10, %v1237
  %v1478 = vsel %vm1446, 1e+10, %v1238
  %v1479 = vmin.f32 %v1447, %v1448
  %1480 = vmin.xlane.f32.xlu0 %v1479
  %v1481 = vpop.xlane.xlu0 %1480
  %v1482 = vmin.f32 %v1449, %v1450
  %1483 = vmin.xlane.f32.xlu0 %v1482
  %v1484 = vpop.xlane.xlu0 %1483
  %v1485 = vmin.f32 %v1451, %v1452
  %1486 = vmin.xlane.f32.xlu0 %v1485
  %v1487 = vpop.xlane.xlu0 %1486
  %v1488 = vmin.f32 %v1453, %v1454
  %1489 = vmin.xlane.f32.xlu0 %v1488
  %v1490 = vpop.xlane.xlu0 %1489
  %v1491 = vmin.f32 %v1455, %v1456
  %1492 = vmin.xlane.f32.xlu0 %v1491
  %v1493 = vpop.xlane.xlu0 %1492
  %v1494 = vmin.f32 %v1457, %v1458
  %1495 = vmin.xlane.f32.xlu0 %v1494
  %v1496 = vpop.xlane.xlu0 %1495
  %v1497 = vmin.f32 %v1459, %v1460
  %1498 = vmin.xlane.f32.xlu0 %v1497
  %v1499 = vpop.xlane.xlu0 %1498
  %v1500 = vmin.f32 %v1461, %v1462
  %1501 = vmin.xlane.f32.xlu0 %v1500
  %v1502 = vpop.xlane.xlu0 %1501
  %v1503 = vmin.f32 %v1463, %v1464
  %1504 = vmin.xlane.f32.xlu0 %v1503
  %v1505 = vpop.xlane.xlu0 %1504
  %v1506 = vmin.f32 %v1465, %v1466
  %1507 = vmin.xlane.f32.xlu0 %v1506
  %v1508 = vpop.xlane.xlu0 %1507
  %v1509 = vmin.f32 %v1467, %v1468
  %1510 = vmin.xlane.f32.xlu0 %v1509
  %v1511 = vpop.xlane.xlu0 %1510
  %v1512 = vmin.f32 %v1469, %v1470
  %1513 = vmin.xlane.f32.xlu0 %v1512
  %v1514 = vpop.xlane.xlu0 %1513
  %v1515 = vmin.f32 %v1471, %v1472
  %1516 = vmin.xlane.f32.xlu0 %v1515
  %v1517 = vpop.xlane.xlu0 %1516
  %v1518 = vmin.f32 %v1473, %v1474
  %1519 = vmin.xlane.f32.xlu0 %v1518
  %v1520 = vpop.xlane.xlu0 %1519
  %v1521 = vmin.f32 %v1475, %v1476
  %1522 = vmin.xlane.f32.xlu0 %v1521
  %v1523 = vpop.xlane.xlu0 %1522
  %v1524 = vmin.f32 %v1477, %v1478
  %1525 = vmin.xlane.f32.xlu0 %v1524
  %v1526 = vpop.xlane.xlu0 %1525
  %vm1527 = vcmp.eq.f32.partialorder %v1447, %v1481
  %vm1528 = vcmp.eq.f32.partialorder %v1448, %v1481
  %vm1529 = vcmp.eq.f32.partialorder %v1449, %v1484
  %vm1530 = vcmp.eq.f32.partialorder %v1450, %v1484
  %vm1531 = vcmp.eq.f32.partialorder %v1451, %v1487
  %vm1532 = vcmp.eq.f32.partialorder %v1452, %v1487
  %vm1533 = vcmp.eq.f32.partialorder %v1453, %v1490
  %vm1534 = vcmp.eq.f32.partialorder %v1454, %v1490
  %vm1535 = vcmp.eq.f32.partialorder %v1455, %v1493
  %vm1536 = vcmp.eq.f32.partialorder %v1456, %v1493
  %vm1537 = vcmp.eq.f32.partialorder %v1457, %v1496
  %vm1538 = vcmp.eq.f32.partialorder %v1458, %v1496
  %vm1539 = vcmp.eq.f32.partialorder %v1459, %v1499
  %vm1540 = vcmp.eq.f32.partialorder %v1460, %v1499
  %vm1541 = vcmp.eq.f32.partialorder %v1461, %v1502
  %vm1542 = vcmp.eq.f32.partialorder %v1462, %v1502
  %vm1543 = vcmp.eq.f32.partialorder %v1463, %v1505
  %vm1544 = vcmp.eq.f32.partialorder %v1464, %v1505
  %vm1545 = vcmp.eq.f32.partialorder %v1465, %v1508
  %vm1546 = vcmp.eq.f32.partialorder %v1466, %v1508
  %vm1547 = vcmp.eq.f32.partialorder %v1467, %v1511
  %vm1548 = vcmp.eq.f32.partialorder %v1468, %v1511
  %vm1549 = vcmp.eq.f32.partialorder %v1469, %v1514
  %vm1550 = vcmp.eq.f32.partialorder %v1470, %v1514
  %vm1551 = vcmp.eq.f32.partialorder %v1471, %v1517
  %vm1552 = vcmp.eq.f32.partialorder %v1472, %v1517
  %vm1553 = vcmp.eq.f32.partialorder %v1473, %v1520
  %vm1554 = vcmp.eq.f32.partialorder %v1474, %v1520
  %vm1555 = vcmp.eq.f32.partialorder %v1475, %v1523
  %vm1556 = vcmp.eq.f32.partialorder %v1476, %v1523
  %vm1557 = vcmp.eq.f32.partialorder %v1477, %v1526
  %vm1558 = vcmp.eq.f32.partialorder %v1478, %v1526
  %v1559 = vsel %vm1527, %v1062, 1e+09
  %v1560 = vsel %vm1528, %v1063, 1e+09
  %v1561 = vsel %vm1529, %v1064, 1e+09
  %v1562 = vsel %vm1530, %v1063, 1e+09
  %v1563 = vsel %vm1531, %v1065, 1e+09
  %v1564 = vsel %vm1532, %v1063, 1e+09
  %v1565 = vsel %vm1533, %v1066, 1e+09
  %v1566 = vsel %vm1534, %v1063, 1e+09
  %v1567 = vsel %vm1535, %v1067, 1e+09
  %v1568 = vsel %vm1536, %v1063, 1e+09
  %v1569 = vsel %vm1537, %v1068, 1e+09
  %v1570 = vsel %vm1538, %v1063, 1e+09
  %v1571 = vsel %vm1539, %v1069, 1e+09
  %v1572 = vsel %vm1540, %v1063, 1e+09
  %v1573 = vsel %vm1541, %v1070, 1e+09
  %v1574 = vsel %vm1542, %v1063, 1e+09
  %v1575 = vsel %vm1543, %v1071, 1e+09
  %v1576 = vsel %vm1544, %v1063, 1e+09
  %v1577 = vsel %vm1545, %v1072, 1e+09
  %v1578 = vsel %vm1546, %v1063, 1e+09
  %v1579 = vsel %vm1547, %v1073, 1e+09
  %v1580 = vsel %vm1548, %v1063, 1e+09
  %v1581 = vsel %vm1549, %v1074, 1e+09
  %v1582 = vsel %vm1550, %v1063, 1e+09
  %v1583 = vsel %vm1551, %v1075, 1e+09
  %v1584 = vsel %vm1552, %v1063, 1e+09
  %v1585 = vsel %vm1553, %v1076, 1e+09
  %v1586 = vsel %vm1554, %v1063, 1e+09
  %v1587 = vsel %vm1555, %v1077, 1e+09
  %v1588 = vsel %vm1556, %v1063, 1e+09
  %v1589 = vsel %vm1557, %v1078, 1e+09
  %v1590 = vsel %vm1558, %v1063, 1e+09
  %v1591 = vmin.f32 %v1559, %v1560
  %1592 = vmin.xlane.f32.xlu0 %v1591
  %v1593 = vpop.xlane.xlu0 %1592
  %v1594 = vmin.f32 %v1561, %v1562
  %1595 = vmin.xlane.f32.xlu0 %v1594
  %v1596 = vpop.xlane.xlu0 %1595
  %v1597 = vmin.f32 %v1563, %v1564
  %1598 = vmin.xlane.f32.xlu0 %v1597
  %v1599 = vpop.xlane.xlu0 %1598
  %v1600 = vmin.f32 %v1565, %v1566
  %1601 = vmin.xlane.f32.xlu0 %v1600
  %v1602 = vpop.xlane.xlu0 %1601
  %v1603 = vmin.f32 %v1567, %v1568
  %1604 = vmin.xlane.f32.xlu0 %v1603
  %v1605 = vpop.xlane.xlu0 %1604
  %v1606 = vmin.f32 %v1569, %v1570
  %1607 = vmin.xlane.f32.xlu0 %v1606
  %v1608 = vpop.xlane.xlu0 %1607
  %v1609 = vmin.f32 %v1571, %v1572
  %1610 = vmin.xlane.f32.xlu0 %v1609
  %v1611 = vpop.xlane.xlu0 %1610
  %v1612 = vmin.f32 %v1573, %v1574
  %1613 = vmin.xlane.f32.xlu0 %v1612
  %v1614 = vpop.xlane.xlu0 %1613
  %v1615 = vmin.f32 %v1575, %v1576
  %1616 = vmin.xlane.f32.xlu0 %v1615
  %v1617 = vpop.xlane.xlu0 %1616
  %v1618 = vmin.f32 %v1577, %v1578
  %1619 = vmin.xlane.f32.xlu0 %v1618
  %v1620 = vpop.xlane.xlu0 %1619
  %v1621 = vmin.f32 %v1579, %v1580
  %1622 = vmin.xlane.f32.xlu0 %v1621
  %v1623 = vpop.xlane.xlu0 %1622
  %v1624 = vmin.f32 %v1581, %v1582
  %1625 = vmin.xlane.f32.xlu0 %v1624
  %v1626 = vpop.xlane.xlu0 %1625
  %v1627 = vmin.f32 %v1583, %v1584
  %1628 = vmin.xlane.f32.xlu0 %v1627
  %v1629 = vpop.xlane.xlu0 %1628
  %v1630 = vmin.f32 %v1585, %v1586
  %1631 = vmin.xlane.f32.xlu0 %v1630
  %v1632 = vpop.xlane.xlu0 %1631
  %v1633 = vmin.f32 %v1587, %v1588
  %1634 = vmin.xlane.f32.xlu0 %v1633
  %v1635 = vpop.xlane.xlu0 %1634
  %v1636 = vmin.f32 %v1589, %v1590
  %1637 = vmin.xlane.f32.xlu0 %v1636
  %v1638 = vpop.xlane.xlu0 %1637
  %v1639 = vcvt.f32.s32.to.zero.pseudo %v1593
  %v1640 = vcvt.f32.s32.to.zero.pseudo %v1596
  %v1641 = vcvt.f32.s32.to.zero.pseudo %v1599
  %v1642 = vcvt.f32.s32.to.zero.pseudo %v1602
  %v1643 = vcvt.f32.s32.to.zero.pseudo %v1605
  %v1644 = vcvt.f32.s32.to.zero.pseudo %v1608
  %v1645 = vcvt.f32.s32.to.zero.pseudo %v1611
  %v1646 = vcvt.f32.s32.to.zero.pseudo %v1614
  %v1647 = vcvt.f32.s32.to.zero.pseudo %v1617
  %v1648 = vcvt.f32.s32.to.zero.pseudo %v1620
  %v1649 = vcvt.f32.s32.to.zero.pseudo %v1623
  %v1650 = vcvt.f32.s32.to.zero.pseudo %v1626
  %v1651 = vcvt.f32.s32.to.zero.pseudo %v1629
  %v1652 = vcvt.f32.s32.to.zero.pseudo %v1632
  %v1653 = vcvt.f32.s32.to.zero.pseudo %v1635
  %v1654 = vcvt.f32.s32.to.zero.pseudo %v1638
  %vm1655 = vcmp.eq.s32.totalorder %v947, 0
  %vm1656 = vcmp.eq.s32.totalorder %v947, 1
  %vm1657 = vcmp.eq.s32.totalorder %v947, 2
  %v1658 = vsel %vm1657, %v1481, 1e+10
  %v1659 = vsel %vm1657, %v1484, 1e+10
  %v1660 = vsel %vm1657, %v1487, 1e+10
  %v1661 = vsel %vm1657, %v1490, 1e+10
  %v1662 = vsel %vm1657, %v1493, 1e+10
  %v1663 = vsel %vm1657, %v1496, 1e+10
  %v1664 = vsel %vm1657, %v1499, 1e+10
  %v1665 = vsel %vm1657, %v1502, 1e+10
  %v1666 = vsel %vm1657, %v1505, 1e+10
  %v1667 = vsel %vm1657, %v1508, 1e+10
  %v1668 = vsel %vm1657, %v1511, 1e+10
  %v1669 = vsel %vm1657, %v1514, 1e+10
  %v1670 = vsel %vm1657, %v1517, 1e+10
  %v1671 = vsel %vm1657, %v1520, 1e+10
  %v1672 = vsel %vm1657, %v1523, 1e+10
  %v1673 = vsel %vm1657, %v1526, 1e+10
  %v1674 = vsel %vm1656, %v1241, %v1658
  %v1675 = vsel %vm1656, %v1244, %v1659
  %v1676 = vsel %vm1656, %v1247, %v1660
  %v1677 = vsel %vm1656, %v1250, %v1661
  %v1678 = vsel %vm1656, %v1253, %v1662
  %v1679 = vsel %vm1656, %v1256, %v1663
  %v1680 = vsel %vm1656, %v1259, %v1664
  %v1681 = vsel %vm1656, %v1262, %v1665
  %v1682 = vsel %vm1656, %v1265, %v1666
  %v1683 = vsel %vm1656, %v1268, %v1667
  %v1684 = vsel %vm1656, %v1271, %v1668
  %v1685 = vsel %vm1656, %v1274, %v1669
  %v1686 = vsel %vm1656, %v1277, %v1670
  %v1687 = vsel %vm1656, %v1280, %v1671
  %v1688 = vsel %vm1656, %v1283, %v1672
  %v1689 = vsel %vm1656, %v1286, %v1673
  %v1690 = vsel %vm1655, %v984, %v1674
  %v1691 = vsel %vm1655, %v987, %v1675
  %v1692 = vsel %vm1655, %v990, %v1676
  %v1693 = vsel %vm1655, %v993, %v1677
  %v1694 = vsel %vm1655, %v996, %v1678
  %v1695 = vsel %vm1655, %v999, %v1679
  %v1696 = vsel %vm1655, %v1002, %v1680
  %v1697 = vsel %vm1655, %v1005, %v1681
  %v1698 = vsel %vm1655, %v1008, %v1682
  %v1699 = vsel %vm1655, %v1011, %v1683
  %v1700 = vsel %vm1655, %v1014, %v1684
  %v1701 = vsel %vm1655, %v1017, %v1685
  %v1702 = vsel %vm1655, %v1020, %v1686
  %v1703 = vsel %vm1655, %v1023, %v1687
  %v1704 = vsel %vm1655, %v1026, %v1688
  %v1705 = vsel %vm1655, %v1029, %v1689
  %1706 = vst [vmem:[#allocation2] sm:$0xff] %v1690
  %1707 = vst [vmem:[#allocation2 + $0x8] sm:$0xff] %v1691
  %1708 = vst [vmem:[#allocation2 + $0x10] sm:$0xff] %v1692
  %1709 = vst [vmem:[#allocation2 + $0x18] sm:$0xff] %v1693
  %1710 = vst [vmem:[#allocation2 + $0x20] sm:$0xff] %v1694
  %1711 = vst [vmem:[#allocation2 + $0x28] sm:$0xff] %v1695
  %1712 = vst [vmem:[#allocation2 + $0x30] sm:$0xff] %v1696
  %1713 = vst [vmem:[#allocation2 + $0x38] sm:$0xff] %v1697
  %1714 = vst [vmem:[#allocation2 + $0x40] sm:$0xff] %v1698
  %1715 = vst [vmem:[#allocation2 + $0x48] sm:$0xff] %v1699
  %1716 = vst [vmem:[#allocation2 + $0x50] sm:$0xff] %v1700
  %1717 = vst [vmem:[#allocation2 + $0x58] sm:$0xff] %v1701
  %1718 = vst [vmem:[#allocation2 + $0x60] sm:$0xff] %v1702
  %1719 = vst [vmem:[#allocation2 + $0x68] sm:$0xff] %v1703
  %1720 = vst [vmem:[#allocation2 + $0x70] sm:$0xff] %v1704
  %1721 = vst [vmem:[#allocation2 + $0x78] sm:$0xff] %v1705
  %v1722 = vadd.s32 %v947, 128
  %v1723 = vsel %vm1657, %v1639, %v1722
  %v1724 = vsel %vm1657, %v1640, %v1722
  %v1725 = vsel %vm1657, %v1641, %v1722
  %v1726 = vsel %vm1657, %v1642, %v1722
  %v1727 = vsel %vm1657, %v1643, %v1722
  %v1728 = vsel %vm1657, %v1644, %v1722
  %v1729 = vsel %vm1657, %v1645, %v1722
  %v1730 = vsel %vm1657, %v1646, %v1722
  %v1731 = vsel %vm1657, %v1647, %v1722
  %v1732 = vsel %vm1657, %v1648, %v1722
  %v1733 = vsel %vm1657, %v1649, %v1722
  %v1734 = vsel %vm1657, %v1650, %v1722
  %v1735 = vsel %vm1657, %v1651, %v1722
  %v1736 = vsel %vm1657, %v1652, %v1722
  %v1737 = vsel %vm1657, %v1653, %v1722
  %v1738 = vsel %vm1657, %v1654, %v1722
  %v1739 = vsel %vm1656, %v1399, %v1723
  %v1740 = vsel %vm1656, %v1400, %v1724
  %v1741 = vsel %vm1656, %v1401, %v1725
  %v1742 = vsel %vm1656, %v1402, %v1726
  %v1743 = vsel %vm1656, %v1403, %v1727
  %v1744 = vsel %vm1656, %v1404, %v1728
  %v1745 = vsel %vm1656, %v1405, %v1729
  %v1746 = vsel %vm1656, %v1406, %v1730
  %v1747 = vsel %vm1656, %v1407, %v1731
  %v1748 = vsel %vm1656, %v1408, %v1732
  %v1749 = vsel %vm1656, %v1409, %v1733
  %v1750 = vsel %vm1656, %v1410, %v1734
  %v1751 = vsel %vm1656, %v1411, %v1735
  %v1752 = vsel %vm1656, %v1412, %v1736
  %v1753 = vsel %vm1656, %v1413, %v1737
  %v1754 = vsel %vm1656, %v1414, %v1738
  %v1755 = vsel %vm1655, %v1159, %v1739
  %v1756 = vsel %vm1655, %v1160, %v1740
  %v1757 = vsel %vm1655, %v1161, %v1741
  %v1758 = vsel %vm1655, %v1162, %v1742
  %v1759 = vsel %vm1655, %v1163, %v1743
  %v1760 = vsel %vm1655, %v1164, %v1744
  %v1761 = vsel %vm1655, %v1165, %v1745
  %v1762 = vsel %vm1655, %v1166, %v1746
  %v1763 = vsel %vm1655, %v1167, %v1747
  %v1764 = vsel %vm1655, %v1168, %v1748
  %v1765 = vsel %vm1655, %v1169, %v1749
  %v1766 = vsel %vm1655, %v1170, %v1750
  %v1767 = vsel %vm1655, %v1171, %v1751
  %v1768 = vsel %vm1655, %v1172, %v1752
  %v1769 = vsel %vm1655, %v1173, %v1753
  %v1770 = vsel %vm1655, %v1174, %v1754
  %1771 = vst [vmem:[#allocation3] sm:$0xff] %v1755
  %1772 = vst [vmem:[#allocation3 + $0x8] sm:$0xff] %v1756
  %1773 = vst [vmem:[#allocation3 + $0x10] sm:$0xff] %v1757
  %1774 = vst [vmem:[#allocation3 + $0x18] sm:$0xff] %v1758
  %1775 = vst [vmem:[#allocation3 + $0x20] sm:$0xff] %v1759
  %1776 = vst [vmem:[#allocation3 + $0x28] sm:$0xff] %v1760
  %1777 = vst [vmem:[#allocation3 + $0x30] sm:$0xff] %v1761
  %1778 = vst [vmem:[#allocation3 + $0x38] sm:$0xff] %v1762
  %1779 = vst [vmem:[#allocation3 + $0x40] sm:$0xff] %v1763
  %1780 = vst [vmem:[#allocation3 + $0x48] sm:$0xff] %v1764
  %1781 = vst [vmem:[#allocation3 + $0x50] sm:$0xff] %v1765
  %1782 = vst [vmem:[#allocation3 + $0x58] sm:$0xff] %v1766
  %1783 = vst [vmem:[#allocation3 + $0x60] sm:$0xff] %v1767
  %1784 = vst [vmem:[#allocation3 + $0x68] sm:$0xff] %v1768
  %1785 = vst [vmem:[#allocation3 + $0x70] sm:$0xff] %v1769
  %1786 = vst [vmem:[#allocation3 + $0x78] sm:$0xff] %v1770
  // Predicated region
  $region26: #{_lambda_.15} parent=0 // pred_check
    %p1787 = pneg %p22
  $region27: #{_lambda_.15} parent=0 // pred_check_branch
    %1789 = sbr.rel (%p1787) target = $region29
  $region28: #{_lambda_.15} parent=0 // pred_region
    %vm1790 = vcmask 7168
    %v1791 = vsel %vm1790, %v984, %v1241
    %v1792 = vsel %vm1790, %v987, %v1244
    %v1793 = vsel %vm1790, %v990, %v1247
    %v1794 = vsel %vm1790, %v993, %v1250
    %v1795 = vsel %vm1790, %v996, %v1253
    %v1796 = vsel %vm1790, %v999, %v1256
    %v1797 = vsel %vm1790, %v1002, %v1259
    %v1798 = vsel %vm1790, %v1005, %v1262
    %v1799 = vsel %vm1790, %v1008, %v1265
    %v1800 = vsel %vm1790, %v1011, %v1268
    %v1801 = vsel %vm1790, %v1014, %v1271
    %v1802 = vsel %vm1790, %v1017, %v1274
    %v1803 = vsel %vm1790, %v1020, %v1277
    %v1804 = vsel %vm1790, %v1023, %v1280
    %v1805 = vsel %vm1790, %v1026, %v1283
    %v1806 = vsel %vm1790, %v1029, %v1286
    %vm1807 = vcmask 15360
    %v1808 = vsel %vm1807, %v1791, %v1481
    %v1809 = vsel %vm1807, %v1792, %v1484
    %v1810 = vsel %vm1807, %v1793, %v1487
    %v1811 = vsel %vm1807, %v1794, %v1490
    %v1812 = vsel %vm1807, %v1795, %v1493
    %v1813 = vsel %vm1807, %v1796, %v1496
    %v1814 = vsel %vm1807, %v1797, %v1499
    %v1815 = vsel %vm1807, %v1798, %v1502
    %v1816 = vsel %vm1807, %v1799, %v1505
    %v1817 = vsel %vm1807, %v1800, %v1508
    %v1818 = vsel %vm1807, %v1801, %v1511
    %v1819 = vsel %vm1807, %v1802, %v1514
    %v1820 = vsel %vm1807, %v1803, %v1517
    %v1821 = vsel %vm1807, %v1804, %v1520
    %v1822 = vsel %vm1807, %v1805, %v1523
    %v1823 = vsel %vm1807, %v1806, %v1526
    %vm1824 = vcmask 23552
    %1825 = vst.msk [vmem:[%s5] sm:$0xff] %vm1824, %v1808
    %1826 = vst.msk [vmem:[%s5 + $0x8] sm:$0xff] %vm1824, %v1809
    %1827 = vst.msk [vmem:[%s5 + $0x10] sm:$0xff] %vm1824, %v1810
    %1828 = vst.msk [vmem:[%s5 + $0x18] sm:$0xff] %vm1824, %v1811
    %1829 = vst.msk [vmem:[%s5 + $0x20] sm:$0xff] %vm1824, %v1812
    %1830 = vst.msk [vmem:[%s5 + $0x28] sm:$0xff] %vm1824, %v1813
    %1831 = vst.msk [vmem:[%s5 + $0x30] sm:$0xff] %vm1824, %v1814
    %1832 = vst.msk [vmem:[%s5 + $0x38] sm:$0xff] %vm1824, %v1815
    %1833 = vst.msk [vmem:[%s5 + $0x40] sm:$0xff] %vm1824, %v1816
    %1834 = vst.msk [vmem:[%s5 + $0x48] sm:$0xff] %vm1824, %v1817
    %1835 = vst.msk [vmem:[%s5 + $0x50] sm:$0xff] %vm1824, %v1818
    %1836 = vst.msk [vmem:[%s5 + $0x58] sm:$0xff] %vm1824, %v1819
    %1837 = vst.msk [vmem:[%s5 + $0x60] sm:$0xff] %vm1824, %v1820
    %1838 = vst.msk [vmem:[%s5 + $0x68] sm:$0xff] %vm1824, %v1821
    %1839 = vst.msk [vmem:[%s5 + $0x70] sm:$0xff] %vm1824, %v1822
    %1840 = vst.msk [vmem:[%s5 + $0x78] sm:$0xff] %vm1824, %v1823
    %v1841 = vsel %vm1790, %v1159, %v1399
    %v1842 = vsel %vm1790, %v1160, %v1400
    %v1843 = vsel %vm1790, %v1161, %v1401
    %v1844 = vsel %vm1790, %v1162, %v1402
    %v1845 = vsel %vm1790, %v1163, %v1403
    %v1846 = vsel %vm1790, %v1164, %v1404
    %v1847 = vsel %vm1790, %v1165, %v1405
    %v1848 = vsel %vm1790, %v1166, %v1406
    %v1849 = vsel %vm1790, %v1167, %v1407
    %v1850 = vsel %vm1790, %v1168, %v1408
    %v1851 = vsel %vm1790, %v1169, %v1409
    %v1852 = vsel %vm1790, %v1170, %v1410
    %v1853 = vsel %vm1790, %v1171, %v1411
    %v1854 = vsel %vm1790, %v1172, %v1412
    %v1855 = vsel %vm1790, %v1173, %v1413
    %v1856 = vsel %vm1790, %v1174, %v1414
    %v1857 = vsel %vm1807, %v1841, %v1639
    %v1858 = vsel %vm1807, %v1842, %v1640
    %v1859 = vsel %vm1807, %v1843, %v1641
    %v1860 = vsel %vm1807, %v1844, %v1642
    %v1861 = vsel %vm1807, %v1845, %v1643
    %v1862 = vsel %vm1807, %v1846, %v1644
    %v1863 = vsel %vm1807, %v1847, %v1645
    %v1864 = vsel %vm1807, %v1848, %v1646
    %v1865 = vsel %vm1807, %v1849, %v1647
    %v1866 = vsel %vm1807, %v1850, %v1648
    %v1867 = vsel %vm1807, %v1851, %v1649
    %v1868 = vsel %vm1807, %v1852, %v1650
    %v1869 = vsel %vm1807, %v1853, %v1651
    %v1870 = vsel %vm1807, %v1854, %v1652
    %v1871 = vsel %vm1807, %v1855, %v1653
    %v1872 = vsel %vm1807, %v1856, %v1654
    %1873 = vst.msk [vmem:[%s6] sm:$0xff] %vm1824, %v1857
    %1874 = vst.msk [vmem:[%s6 + $0x8] sm:$0xff] %vm1824, %v1858
    %1875 = vst.msk [vmem:[%s6 + $0x10] sm:$0xff] %vm1824, %v1859
    %1876 = vst.msk [vmem:[%s6 + $0x18] sm:$0xff] %vm1824, %v1860
    %1877 = vst.msk [vmem:[%s6 + $0x20] sm:$0xff] %vm1824, %v1861
    %1878 = vst.msk [vmem:[%s6 + $0x28] sm:$0xff] %vm1824, %v1862
    %1879 = vst.msk [vmem:[%s6 + $0x30] sm:$0xff] %vm1824, %v1863
    %1880 = vst.msk [vmem:[%s6 + $0x38] sm:$0xff] %vm1824, %v1864
    %1881 = vst.msk [vmem:[%s6 + $0x40] sm:$0xff] %vm1824, %v1865
    %1882 = vst.msk [vmem:[%s6 + $0x48] sm:$0xff] %vm1824, %v1866
    %1883 = vst.msk [vmem:[%s6 + $0x50] sm:$0xff] %vm1824, %v1867
    %1884 = vst.msk [vmem:[%s6 + $0x58] sm:$0xff] %vm1824, %v1868
    %1885 = vst.msk [vmem:[%s6 + $0x60] sm:$0xff] %vm1824, %v1869
    %1886 = vst.msk [vmem:[%s6 + $0x68] sm:$0xff] %vm1824, %v1870
    %1887 = vst.msk [vmem:[%s6 + $0x70] sm:$0xff] %vm1824, %v1871
    %1888 = vst.msk [vmem:[%s6 + $0x78] sm:$0xff] %vm1824, %v1872
  $region29: #{_lambda_.15} parent=0 // pred_fallthru
    _
  // Predicated region
  $region30: #{_lambda_.15} parent=0 // pred_check
    _
  $region31: #{_lambda_.15} parent=0 // pred_check_branch
    %1890 = sbr.rel (0) target = $region33
  $region32: #{_lambda_.15} parent=0 // pred_region
    _
  $region33: #{_lambda_.15} parent=0 // pred_fallthru
    _
  // Predicated region
  $region34: #{_lambda_.15} parent=0 // pred_check
    _
  $region35: #{_lambda_.15} parent=0 // pred_check_branch
    %1892 = sbr.rel (0) target = $region37
  $region36: #{_lambda_.15} parent=0 // pred_region
    _
  $region37: #{_lambda_.15} parent=0 // pred_fallthru
    _
  // Predicated region
  $region38: #{_lambda_.15} parent=0 // pred_check
    _
  $region39: #{_lambda_.15} parent=0 // pred_check_branch
    %1894 = sbr.rel (0) target = $region41
  $region40: #{_lambda_.15} parent=0 // pred_region
    _
  $region41: #{_lambda_.15} parent=0 // pred_fallthru
    _
  // Predicated region
  $region42: #{_lambda_.15} parent=0 // pred_check
    _
  $region43: #{_lambda_.15} parent=0 // pred_check_branch
    %1896 = sbr.rel (0) target = $region45
  $region44: #{_lambda_.15} parent=0 // pred_region
    _
  $region45: #{_lambda_.15} parent=0 // pred_fallthru
    _

// kernel: _lambda_.11
$region0: #{_lambda_.11}
  #allocation0 [shape = 'u32[]', space=smem, size = 0x4, offset = 0x4, fixed_abs, tag = 'smem constant byte address 0x4 - core index']
  #allocation1 [shape = 'u32[144,128]{1,0:T(1,128)}', space=vmem, size = 0x12000, scoped, tag = 'internal scratch']
  #allocation2 [shape = 'f32[128,128]{1,0:T(8,128)}', space=vmem, size = 0x10000, scoped, tag = 'scratch operand']
  #allocation3 [shape = 's32[128,128]{1,0:T(8,128)}', space=vmem, size = 0x10000, scoped, tag = 'scratch operand']
  %s0 = inlined_call_operand.vmem [shape: f32[128,3], index: 0, kind: input, shape index: {}]
  %s1 = inlined_call_operand.vmem [shape: f32[128,3], index: 1, kind: input, shape index: {}]
  %s2 = inlined_call_operand.vmem [shape: s32[128,1], index: 2, kind: input, shape index: {}]
  %s3 = inlined_call_operand.vmem [shape: f32[3,128], index: 3, kind: input, shape index: {}]
  %s4 = inlined_call_operand.vmem [shape: s32[1,128], index: 4, kind: input, shape index: {}]
  %s5 = inlined_call_operand.vmem [shape: f32[128,3], index: 5, kind: output, shape index: {0}]
  %s6 = inlined_call_operand.vmem [shape: s32[128,3], index: 6, kind: output, shape index: {1}]
  %7 = xla_tuple %s5, %s6
  %s8 = sld [smem:[#allocation0]]
  $region46: #{_lambda_.11} parent=0
    _
  %s10 = ssub.s32 1, %s8
  %s11 = scalar_select 0, %s10, %s8
  // Predicated region
  $region2: #{_lambda_.11} parent=0 // pred_check
    _
  $region3: #{_lambda_.11} parent=0 // pred_check_branch
    %13 = sbr.rel (0) target = $region5
  $region4: #{_lambda_.11} parent=0 // pred_region
    _
  $region5: #{_lambda_.11} parent=0 // pred_fallthru
    _
  // Predicated region
  $region6: #{_lambda_.11} parent=0 // pred_check
    _
  $region7: #{_lambda_.11} parent=0 // pred_check_branch
    %15 = sbr.rel (0) target = $region9
  $region8: #{_lambda_.11} parent=0 // pred_region
    _
  $region9: #{_lambda_.11} parent=0 // pred_fallthru
    _
  // Predicated region
  $region10: #{_lambda_.11} parent=0 // pred_check
    _
  $region11: #{_lambda_.11} parent=0 // pred_check_branch
    %17 = sbr.rel (0) target = $region13
  $region12: #{_lambda_.11} parent=0 // pred_region
    _
  $region13: #{_lambda_.11} parent=0 // pred_fallthru
    _
  // Predicated region
  $region14: #{_lambda_.11} parent=0 // pred_check
    _
  $region15: #{_lambda_.11} parent=0 // pred_check_branch
    %19 = sbr.rel (0) target = $region17
  $region16: #{_lambda_.11} parent=0 // pred_region
    _
  $region17: #{_lambda_.11} parent=0 // pred_fallthru
    _
  // Predicated region
  $region18: #{_lambda_.11} parent=0 // pred_check
    _
  $region19: #{_lambda_.11} parent=0 // pred_check_branch
    %21 = sbr.rel (0) target = $region21
  $region20: #{_lambda_.11} parent=0 // pred_region
    _
  $region21: #{_lambda_.11} parent=0 // pred_fallthru
    _
  %p22 = scmp.eq.s32.totalorder 0, 0
  // Predicated region
  $region22: #{_lambda_.11} parent=0 // pred_check
    %p23 = pneg %p22
  $region23: #{_lambda_.11} parent=0 // pred_check_branch
    %25 = sbr.rel (%p23) target = $region25
  $region24: #{_lambda_.11} parent=0 // pred_region
    %v26 = vlaneseq
    %v27 = vand.u32 %v26, 127
    %28 = vst [vmem:[#allocation2] sm:$0xff] 1e+10
    %29 = vst [vmem:[#allocation2 + $0x8] sm:$0xff] 1e+10
    %30 = vst [vmem:[#allocation2 + $0x10] sm:$0xff] 1e+10
    %31 = vst [vmem:[#allocation2 + $0x18] sm:$0xff] 1e+10
    %32 = vst [vmem:[#allocation2 + $0x20] sm:$0xff] 1e+10
    %33 = vst [vmem:[#allocation2 + $0x28] sm:$0xff] 1e+10
    %34 = vst [vmem:[#allocation2 + $0x30] sm:$0xff] 1e+10
    %35 = vst [vmem:[#allocation2 + $0x38] sm:$0xff] 1e+10
    %36 = vst [vmem:[#allocation2 + $0x40] sm:$0xff] 1e+10
    %37 = vst [vmem:[#allocation2 + $0x48] sm:$0xff] 1e+10
    %38 = vst [vmem:[#allocation2 + $0x50] sm:$0xff] 1e+10
    %39 = vst [vmem:[#allocation2 + $0x58] sm:$0xff] 1e+10
    %40 = vst [vmem:[#allocation2 + $0x60] sm:$0xff] 1e+10
    %41 = vst [vmem:[#allocation2 + $0x68] sm:$0xff] 1e+10
    %42 = vst [vmem:[#allocation2 + $0x70] sm:$0xff] 1e+10
    %43 = vst [vmem:[#allocation2 + $0x78] sm:$0xff] 1e+10
    %v44 = vadd.s32 %v27, 128
    %45 = vst [vmem:[#allocation3] sm:$0xff] %v44
    %46 = vst [vmem:[#allocation3 + $0x8] sm:$0xff] %v44
    %47 = vst [vmem:[#allocation3 + $0x10] sm:$0xff] %v44
    %48 = vst [vmem:[#allocation3 + $0x18] sm:$0xff] %v44
    %49 = vst [vmem:[#allocation3 + $0x20] sm:$0xff] %v44
    %50 = vst [vmem:[#allocation3 + $0x28] sm:$0xff] %v44
    %51 = vst [vmem:[#allocation3 + $0x30] sm:$0xff] %v44
    %52 = vst [vmem:[#allocation3 + $0x38] sm:$0xff] %v44
    %53 = vst [vmem:[#allocation3 + $0x40] sm:$0xff] %v44
    %54 = vst [vmem:[#allocation3 + $0x48] sm:$0xff] %v44
    %55 = vst [vmem:[#allocation3 + $0x50] sm:$0xff] %v44
    %56 = vst [vmem:[#allocation3 + $0x58] sm:$0xff] %v44
    %57 = vst [vmem:[#allocation3 + $0x60] sm:$0xff] %v44
    %58 = vst [vmem:[#allocation3 + $0x68] sm:$0xff] %v44
    %59 = vst [vmem:[#allocation3 + $0x70] sm:$0xff] %v44
    %60 = vst [vmem:[#allocation3 + $0x78] sm:$0xff] %v44
  $region25: #{_lambda_.11} parent=0 // pred_fallthru
    _
  %v61 = vld [vmem:[%s0] sm:$0xff]
  %v62 = vld [vmem:[%s0 + $0x8] sm:$0xff]
  %v63 = vld [vmem:[%s0 + $0x10] sm:$0xff]
  %v64 = vld [vmem:[%s0 + $0x18] sm:$0xff]
  %v65 = vld [vmem:[%s0 + $0x20] sm:$0xff]
  %v66 = vld [vmem:[%s0 + $0x28] sm:$0xff]
  %v67 = vld [vmem:[%s0 + $0x30] sm:$0xff]
  %v68 = vld [vmem:[%s0 + $0x38] sm:$0xff]
  %v69 = vld [vmem:[%s0 + $0x40] sm:$0xff]
  %v70 = vld [vmem:[%s0 + $0x48] sm:$0xff]
  %v71 = vld [vmem:[%s0 + $0x50] sm:$0xff]
  %v72 = vld [vmem:[%s0 + $0x58] sm:$0xff]
  %v73 = vld [vmem:[%s0 + $0x60] sm:$0xff]
  %v74 = vld [vmem:[%s0 + $0x68] sm:$0xff]
  %v75 = vld [vmem:[%s0 + $0x70] sm:$0xff]
  %v76 = vld [vmem:[%s0 + $0x78] sm:$0xff]
  %v77 = vld [vmem:[%s1] sm:$0xff]
  %v78 = vld [vmem:[%s1 + $0x8] sm:$0xff]
  %v79 = vld [vmem:[%s1 + $0x10] sm:$0xff]
  %v80 = vld [vmem:[%s1 + $0x18] sm:$0xff]
  %v81 = vld [vmem:[%s1 + $0x20] sm:$0xff]
  %v82 = vld [vmem:[%s1 + $0x28] sm:$0xff]
  %v83 = vld [vmem:[%s1 + $0x30] sm:$0xff]
  %v84 = vld [vmem:[%s1 + $0x38] sm:$0xff]
  %v85 = vld [vmem:[%s1 + $0x40] sm:$0xff]
  %v86 = vld [vmem:[%s1 + $0x48] sm:$0xff]
  %v87 = vld [vmem:[%s1 + $0x50] sm:$0xff]
  %v88 = vld [vmem:[%s1 + $0x58] sm:$0xff]
  %v89 = vld [vmem:[%s1 + $0x60] sm:$0xff]
  %v90 = vld [vmem:[%s1 + $0x68] sm:$0xff]
  %v91 = vld [vmem:[%s1 + $0x70] sm:$0xff]
  %v92 = vld [vmem:[%s1 + $0x78] sm:$0xff]
  %v93 = vld [vmem:[%s2] sm:$0xff]
  %v94 = vld [vmem:[%s2 + $0x8] sm:$0xff]
  %v95 = vld [vmem:[%s2 + $0x10] sm:$0xff]
  %v96 = vld [vmem:[%s2 + $0x18] sm:$0xff]
  %v97 = vld [vmem:[%s2 + $0x20] sm:$0xff]
  %v98 = vld [vmem:[%s2 + $0x28] sm:$0xff]
  %v99 = vld [vmem:[%s2 + $0x30] sm:$0xff]
  %v100 = vld [vmem:[%s2 + $0x38] sm:$0xff]
  %v101 = vld [vmem:[%s2 + $0x40] sm:$0xff]
  %v102 = vld [vmem:[%s2 + $0x48] sm:$0xff]
  %v103 = vld [vmem:[%s2 + $0x50] sm:$0xff]
  %v104 = vld [vmem:[%s2 + $0x58] sm:$0xff]
  %v105 = vld [vmem:[%s2 + $0x60] sm:$0xff]
  %v106 = vld [vmem:[%s2 + $0x68] sm:$0xff]
  %v107 = vld [vmem:[%s2 + $0x70] sm:$0xff]
  %v108 = vld [vmem:[%s2 + $0x78] sm:$0xff]
  %v109 = vld [vmem:[%s3] sm:$0x1]
  %v110 = vld [vmem:[%s3 + $0x1] sm:$0x1]
  %v111 = vld [vmem:[%s3 + $0x2] sm:$0x1]
  %v112 = vld [vmem:[%s4] sm:$0x1]
  %114 = vset.pattern.permute.xlu0 0
  %115 = vperm.xlu0 %114, %v61
  %v116 = vpop.permute.xlu0 %115
  %119 = vset.pattern.permute.xlu0 0
  %120 = vperm.xlu0 %119, %v62
  %v121 = vpop.permute.xlu0 %120
  %124 = vset.pattern.permute.xlu0 0
  %125 = vperm.xlu0 %124, %v63
  %v126 = vpop.permute.xlu0 %125
  %129 = vset.pattern.permute.xlu0 0
  %130 = vperm.xlu0 %129, %v64
  %v131 = vpop.permute.xlu0 %130
  %134 = vset.pattern.permute.xlu0 0
  %135 = vperm.xlu0 %134, %v65
  %v136 = vpop.permute.xlu0 %135
  %139 = vset.pattern.permute.xlu0 0
  %140 = vperm.xlu0 %139, %v66
  %v141 = vpop.permute.xlu0 %140
  %144 = vset.pattern.permute.xlu0 0
  %145 = vperm.xlu0 %144, %v67
  %v146 = vpop.permute.xlu0 %145
  %149 = vset.pattern.permute.xlu0 0
  %150 = vperm.xlu0 %149, %v68
  %v151 = vpop.permute.xlu0 %150
  %154 = vset.pattern.permute.xlu0 0
  %155 = vperm.xlu0 %154, %v69
  %v156 = vpop.permute.xlu0 %155
  %159 = vset.pattern.permute.xlu0 0
  %160 = vperm.xlu0 %159, %v70
  %v161 = vpop.permute.xlu0 %160
  %164 = vset.pattern.permute.xlu0 0
  %165 = vperm.xlu0 %164, %v71
  %v166 = vpop.permute.xlu0 %165
  %169 = vset.pattern.permute.xlu0 0
  %170 = vperm.xlu0 %169, %v72
  %v171 = vpop.permute.xlu0 %170
  %174 = vset.pattern.permute.xlu0 0
  %175 = vperm.xlu0 %174, %v73
  %v176 = vpop.permute.xlu0 %175
  %179 = vset.pattern.permute.xlu0 0
  %180 = vperm.xlu0 %179, %v74
  %v181 = vpop.permute.xlu0 %180
  %184 = vset.pattern.permute.xlu0 0
  %185 = vperm.xlu0 %184, %v75
  %v186 = vpop.permute.xlu0 %185
  %189 = vset.pattern.permute.xlu0 0
  %190 = vperm.xlu0 %189, %v76
  %v191 = vpop.permute.xlu0 %190
  %v193 = vlaneseq
  %v194 = vshrl.u32 %v193, 7
  %v195 = vsub.s32 0, %v194
  %v196 = vrot.slane %v109, %v195
  %v197 = vsub.f32 %v116, %v196
  %v198 = vsub.f32 %v121, %v196
  %v199 = vsub.f32 %v126, %v196
  %v200 = vsub.f32 %v131, %v196
  %v201 = vsub.f32 %v136, %v196
  %v202 = vsub.f32 %v141, %v196
  %v203 = vsub.f32 %v146, %v196
  %v204 = vsub.f32 %v151, %v196
  %v205 = vsub.f32 %v156, %v196
  %v206 = vsub.f32 %v161, %v196
  %v207 = vsub.f32 %v166, %v196
  %v208 = vsub.f32 %v171, %v196
  %v209 = vsub.f32 %v176, %v196
  %v210 = vsub.f32 %v181, %v196
  %v211 = vsub.f32 %v186, %v196
  %v212 = vsub.f32 %v191, %v196
  %213 = vset.pattern.permute.xlu0 1
  %214 = vperm.xlu0 %213, %v61
  %v215 = vpop.permute.xlu0 %214
  %217 = vset.pattern.permute.xlu0 1
  %218 = vperm.xlu0 %217, %v62
  %v219 = vpop.permute.xlu0 %218
  %221 = vset.pattern.permute.xlu0 1
  %222 = vperm.xlu0 %221, %v63
  %v223 = vpop.permute.xlu0 %222
  %225 = vset.pattern.permute.xlu0 1
  %226 = vperm.xlu0 %225, %v64
  %v227 = vpop.permute.xlu0 %226
  %229 = vset.pattern.permute.xlu0 1
  %230 = vperm.xlu0 %229, %v65
  %v231 = vpop.permute.xlu0 %230
  %233 = vset.pattern.permute.xlu0 1
  %234 = vperm.xlu0 %233, %v66
  %v235 = vpop.permute.xlu0 %234
  %237 = vset.pattern.permute.xlu0 1
  %238 = vperm.xlu0 %237, %v67
  %v239 = vpop.permute.xlu0 %238
  %241 = vset.pattern.permute.xlu0 1
  %242 = vperm.xlu0 %241, %v68
  %v243 = vpop.permute.xlu0 %242
  %245 = vset.pattern.permute.xlu0 1
  %246 = vperm.xlu0 %245, %v69
  %v247 = vpop.permute.xlu0 %246
  %249 = vset.pattern.permute.xlu0 1
  %250 = vperm.xlu0 %249, %v70
  %v251 = vpop.permute.xlu0 %250
  %253 = vset.pattern.permute.xlu0 1
  %254 = vperm.xlu0 %253, %v71
  %v255 = vpop.permute.xlu0 %254
  %257 = vset.pattern.permute.xlu0 1
  %258 = vperm.xlu0 %257, %v72
  %v259 = vpop.permute.xlu0 %258
  %261 = vset.pattern.permute.xlu0 1
  %262 = vperm.xlu0 %261, %v73
  %v263 = vpop.permute.xlu0 %262
  %265 = vset.pattern.permute.xlu0 1
  %266 = vperm.xlu0 %265, %v74
  %v267 = vpop.permute.xlu0 %266
  %269 = vset.pattern.permute.xlu0 1
  %270 = vperm.xlu0 %269, %v75
  %v271 = vpop.permute.xlu0 %270
  %273 = vset.pattern.permute.xlu0 1
  %274 = vperm.xlu0 %273, %v76
  %v275 = vpop.permute.xlu0 %274
  %v277 = vlaneseq
  %v278 = vshrl.u32 %v277, 7
  %v279 = vsub.s32 0, %v278
  %v280 = vrot.slane %v110, %v279
  %v281 = vsub.f32 %v215, %v280
  %v282 = vsub.f32 %v219, %v280
  %v283 = vsub.f32 %v223, %v280
  %v284 = vsub.f32 %v227, %v280
  %v285 = vsub.f32 %v231, %v280
  %v286 = vsub.f32 %v235, %v280
  %v287 = vsub.f32 %v239, %v280
  %v288 = vsub.f32 %v243, %v280
  %v289 = vsub.f32 %v247, %v280
  %v290 = vsub.f32 %v251, %v280
  %v291 = vsub.f32 %v255, %v280
  %v292 = vsub.f32 %v259, %v280
  %v293 = vsub.f32 %v263, %v280
  %v294 = vsub.f32 %v267, %v280
  %v295 = vsub.f32 %v271, %v280
  %v296 = vsub.f32 %v275, %v280
  %297 = vset.pattern.permute.xlu0 2
  %298 = vperm.xlu0 %297, %v61
  %v299 = vpop.permute.xlu0 %298
  %301 = vset.pattern.permute.xlu0 2
  %302 = vperm.xlu0 %301, %v62
  %v303 = vpop.permute.xlu0 %302
  %305 = vset.pattern.permute.xlu0 2
  %306 = vperm.xlu0 %305, %v63
  %v307 = vpop.permute.xlu0 %306
  %309 = vset.pattern.permute.xlu0 2
  %310 = vperm.xlu0 %309, %v64
  %v311 = vpop.permute.xlu0 %310
  %313 = vset.pattern.permute.xlu0 2
  %314 = vperm.xlu0 %313, %v65
  %v315 = vpop.permute.xlu0 %314
  %317 = vset.pattern.permute.xlu0 2
  %318 = vperm.xlu0 %317, %v66
  %v319 = vpop.permute.xlu0 %318
  %321 = vset.pattern.permute.xlu0 2
  %322 = vperm.xlu0 %321, %v67
  %v323 = vpop.permute.xlu0 %322
  %325 = vset.pattern.permute.xlu0 2
  %326 = vperm.xlu0 %325, %v68
  %v327 = vpop.permute.xlu0 %326
  %329 = vset.pattern.permute.xlu0 2
  %330 = vperm.xlu0 %329, %v69
  %v331 = vpop.permute.xlu0 %330
  %333 = vset.pattern.permute.xlu0 2
  %334 = vperm.xlu0 %333, %v70
  %v335 = vpop.permute.xlu0 %334
  %337 = vset.pattern.permute.xlu0 2
  %338 = vperm.xlu0 %337, %v71
  %v339 = vpop.permute.xlu0 %338
  %341 = vset.pattern.permute.xlu0 2
  %342 = vperm.xlu0 %341, %v72
  %v343 = vpop.permute.xlu0 %342
  %345 = vset.pattern.permute.xlu0 2
  %346 = vperm.xlu0 %345, %v73
  %v347 = vpop.permute.xlu0 %346
  %349 = vset.pattern.permute.xlu0 2
  %350 = vperm.xlu0 %349, %v74
  %v351 = vpop.permute.xlu0 %350
  %353 = vset.pattern.permute.xlu0 2
  %354 = vperm.xlu0 %353, %v75
  %v355 = vpop.permute.xlu0 %354
  %357 = vset.pattern.permute.xlu0 2
  %358 = vperm.xlu0 %357, %v76
  %v359 = vpop.permute.xlu0 %358
  %v361 = vlaneseq
  %v362 = vshrl.u32 %v361, 7
  %v363 = vsub.s32 0, %v362
  %v364 = vrot.slane %v111, %v363
  %v365 = vsub.f32 %v299, %v364
  %v366 = vsub.f32 %v303, %v364
  %v367 = vsub.f32 %v307, %v364
  %v368 = vsub.f32 %v311, %v364
  %v369 = vsub.f32 %v315, %v364
  %v370 = vsub.f32 %v319, %v364
  %v371 = vsub.f32 %v323, %v364
  %v372 = vsub.f32 %v327, %v364
  %v373 = vsub.f32 %v331, %v364
  %v374 = vsub.f32 %v335, %v364
  %v375 = vsub.f32 %v339, %v364
  %v376 = vsub.f32 %v343, %v364
  %v377 = vsub.f32 %v347, %v364
  %v378 = vsub.f32 %v351, %v364
  %v379 = vsub.f32 %v355, %v364
  %v380 = vsub.f32 %v359, %v364
  %v381 = vmul.f32 %v197, %v197
  %v382 = vmul.f32 %v198, %v198
  %v383 = vmul.f32 %v199, %v199
  %v384 = vmul.f32 %v200, %v200
  %v385 = vmul.f32 %v201, %v201
  %v386 = vmul.f32 %v202, %v202
  %v387 = vmul.f32 %v203, %v203
  %v388 = vmul.f32 %v204, %v204
  %v389 = vmul.f32 %v205, %v205
  %v390 = vmul.f32 %v206, %v206
  %v391 = vmul.f32 %v207, %v207
  %v392 = vmul.f32 %v208, %v208
  %v393 = vmul.f32 %v209, %v209
  %v394 = vmul.f32 %v210, %v210
  %v395 = vmul.f32 %v211, %v211
  %v396 = vmul.f32 %v212, %v212
  %v397 = vmul.f32 %v281, %v281
  %v398 = vmul.f32 %v282, %v282
  %v399 = vmul.f32 %v283, %v283
  %v400 = vmul.f32 %v284, %v284
  %v401 = vmul.f32 %v285, %v285
  %v402 = vmul.f32 %v286, %v286
  %v403 = vmul.f32 %v287, %v287
  %v404 = vmul.f32 %v288, %v288
  %v405 = vmul.f32 %v289, %v289
  %v406 = vmul.f32 %v290, %v290
  %v407 = vmul.f32 %v291, %v291
  %v408 = vmul.f32 %v292, %v292
  %v409 = vmul.f32 %v293, %v293
  %v410 = vmul.f32 %v294, %v294
  %v411 = vmul.f32 %v295, %v295
  %v412 = vmul.f32 %v296, %v296
  %v413 = vadd.f32 %v381, %v397
  %v414 = vadd.f32 %v382, %v398
  %v415 = vadd.f32 %v383, %v399
  %v416 = vadd.f32 %v384, %v400
  %v417 = vadd.f32 %v385, %v401
  %v418 = vadd.f32 %v386, %v402
  %v419 = vadd.f32 %v387, %v403
  %v420 = vadd.f32 %v388, %v404
  %v421 = vadd.f32 %v389, %v405
  %v422 = vadd.f32 %v390, %v406
  %v423 = vadd.f32 %v391, %v407
  %v424 = vadd.f32 %v392, %v408
  %v425 = vadd.f32 %v393, %v409
  %v426 = vadd.f32 %v394, %v410
  %v427 = vadd.f32 %v395, %v411
  %v428 = vadd.f32 %v396, %v412
  %v429 = vmul.f32 %v365, %v365
  %v430 = vmul.f32 %v366, %v366
  %v431 = vmul.f32 %v367, %v367
  %v432 = vmul.f32 %v368, %v368
  %v433 = vmul.f32 %v369, %v369
  %v434 = vmul.f32 %v370, %v370
  %v435 = vmul.f32 %v371, %v371
  %v436 = vmul.f32 %v372, %v372
  %v437 = vmul.f32 %v373, %v373
  %v438 = vmul.f32 %v374, %v374
  %v439 = vmul.f32 %v375, %v375
  %v440 = vmul.f32 %v376, %v376
  %v441 = vmul.f32 %v377, %v377
  %v442 = vmul.f32 %v378, %v378
  %v443 = vmul.f32 %v379, %v379
  %v444 = vmul.f32 %v380, %v380
  %v445 = vadd.f32 %v413, %v429
  %v446 = vadd.f32 %v414, %v430
  %v447 = vadd.f32 %v415, %v431
  %v448 = vadd.f32 %v416, %v432
  %v449 = vadd.f32 %v417, %v433
  %v450 = vadd.f32 %v418, %v434
  %v451 = vadd.f32 %v419, %v435
  %v452 = vadd.f32 %v420, %v436
  %v453 = vadd.f32 %v421, %v437
  %v454 = vadd.f32 %v422, %v438
  %v455 = vadd.f32 %v423, %v439
  %v456 = vadd.f32 %v424, %v440
  %v457 = vadd.f32 %v425, %v441
  %v458 = vadd.f32 %v426, %v442
  %v459 = vadd.f32 %v427, %v443
  %v460 = vadd.f32 %v428, %v444
  %462 = vset.pattern.permute.xlu0 0
  %463 = vperm.xlu0 %462, %v77
  %v464 = vpop.permute.xlu0 %463
  %467 = vset.pattern.permute.xlu0 0
  %468 = vperm.xlu0 %467, %v78
  %v469 = vpop.permute.xlu0 %468
  %472 = vset.pattern.permute.xlu0 0
  %473 = vperm.xlu0 %472, %v79
  %v474 = vpop.permute.xlu0 %473
  %477 = vset.pattern.permute.xlu0 0
  %478 = vperm.xlu0 %477, %v80
  %v479 = vpop.permute.xlu0 %478
  %482 = vset.pattern.permute.xlu0 0
  %483 = vperm.xlu0 %482, %v81
  %v484 = vpop.permute.xlu0 %483
  %487 = vset.pattern.permute.xlu0 0
  %488 = vperm.xlu0 %487, %v82
  %v489 = vpop.permute.xlu0 %488
  %492 = vset.pattern.permute.xlu0 0
  %493 = vperm.xlu0 %492, %v83
  %v494 = vpop.permute.xlu0 %493
  %497 = vset.pattern.permute.xlu0 0
  %498 = vperm.xlu0 %497, %v84
  %v499 = vpop.permute.xlu0 %498
  %502 = vset.pattern.permute.xlu0 0
  %503 = vperm.xlu0 %502, %v85
  %v504 = vpop.permute.xlu0 %503
  %507 = vset.pattern.permute.xlu0 0
  %508 = vperm.xlu0 %507, %v86
  %v509 = vpop.permute.xlu0 %508
  %512 = vset.pattern.permute.xlu0 0
  %513 = vperm.xlu0 %512, %v87
  %v514 = vpop.permute.xlu0 %513
  %517 = vset.pattern.permute.xlu0 0
  %518 = vperm.xlu0 %517, %v88
  %v519 = vpop.permute.xlu0 %518
  %522 = vset.pattern.permute.xlu0 0
  %523 = vperm.xlu0 %522, %v89
  %v524 = vpop.permute.xlu0 %523
  %527 = vset.pattern.permute.xlu0 0
  %528 = vperm.xlu0 %527, %v90
  %v529 = vpop.permute.xlu0 %528
  %532 = vset.pattern.permute.xlu0 0
  %533 = vperm.xlu0 %532, %v91
  %v534 = vpop.permute.xlu0 %533
  %537 = vset.pattern.permute.xlu0 0
  %538 = vperm.xlu0 %537, %v92
  %v539 = vpop.permute.xlu0 %538
  %v541 = vsub.f32 %v464, %v196
  %v542 = vsub.f32 %v469, %v196
  %v543 = vsub.f32 %v474, %v196
  %v544 = vsub.f32 %v479, %v196
  %v545 = vsub.f32 %v484, %v196
  %v546 = vsub.f32 %v489, %v196
  %v547 = vsub.f32 %v494, %v196
  %v548 = vsub.f32 %v499, %v196
  %v549 = vsub.f32 %v504, %v196
  %v550 = vsub.f32 %v509, %v196
  %v551 = vsub.f32 %v514, %v196
  %v552 = vsub.f32 %v519, %v196
  %v553 = vsub.f32 %v524, %v196
  %v554 = vsub.f32 %v529, %v196
  %v555 = vsub.f32 %v534, %v196
  %v556 = vsub.f32 %v539, %v196
  %557 = vset.pattern.permute.xlu0 1
  %558 = vperm.xlu0 %557, %v77
  %v559 = vpop.permute.xlu0 %558
  %561 = vset.pattern.permute.xlu0 1
  %562 = vperm.xlu0 %561, %v78
  %v563 = vpop.permute.xlu0 %562
  %565 = vset.pattern.permute.xlu0 1
  %566 = vperm.xlu0 %565, %v79
  %v567 = vpop.permute.xlu0 %566
  %569 = vset.pattern.permute.xlu0 1
  %570 = vperm.xlu0 %569, %v80
  %v571 = vpop.permute.xlu0 %570
  %573 = vset.pattern.permute.xlu0 1
  %574 = vperm.xlu0 %573, %v81
  %v575 = vpop.permute.xlu0 %574
  %577 = vset.pattern.permute.xlu0 1
  %578 = vperm.xlu0 %577, %v82
  %v579 = vpop.permute.xlu0 %578
  %581 = vset.pattern.permute.xlu0 1
  %582 = vperm.xlu0 %581, %v83
  %v583 = vpop.permute.xlu0 %582
  %585 = vset.pattern.permute.xlu0 1
  %586 = vperm.xlu0 %585, %v84
  %v587 = vpop.permute.xlu0 %586
  %589 = vset.pattern.permute.xlu0 1
  %590 = vperm.xlu0 %589, %v85
  %v591 = vpop.permute.xlu0 %590
  %593 = vset.pattern.permute.xlu0 1
  %594 = vperm.xlu0 %593, %v86
  %v595 = vpop.permute.xlu0 %594
  %597 = vset.pattern.permute.xlu0 1
  %598 = vperm.xlu0 %597, %v87
  %v599 = vpop.permute.xlu0 %598
  %601 = vset.pattern.permute.xlu0 1
  %602 = vperm.xlu0 %601, %v88
  %v603 = vpop.permute.xlu0 %602
  %605 = vset.pattern.permute.xlu0 1
  %606 = vperm.xlu0 %605, %v89
  %v607 = vpop.permute.xlu0 %606
  %609 = vset.pattern.permute.xlu0 1
  %610 = vperm.xlu0 %609, %v90
  %v611 = vpop.permute.xlu0 %610
  %613 = vset.pattern.permute.xlu0 1
  %614 = vperm.xlu0 %613, %v91
  %v615 = vpop.permute.xlu0 %614
  %617 = vset.pattern.permute.xlu0 1
  %618 = vperm.xlu0 %617, %v92
  %v619 = vpop.permute.xlu0 %618
  %v621 = vsub.f32 %v559, %v280
  %v622 = vsub.f32 %v563, %v280
  %v623 = vsub.f32 %v567, %v280
  %v624 = vsub.f32 %v571, %v280
  %v625 = vsub.f32 %v575, %v280
  %v626 = vsub.f32 %v579, %v280
  %v627 = vsub.f32 %v583, %v280
  %v628 = vsub.f32 %v587, %v280
  %v629 = vsub.f32 %v591, %v280
  %v630 = vsub.f32 %v595, %v280
  %v631 = vsub.f32 %v599, %v280
  %v632 = vsub.f32 %v603, %v280
  %v633 = vsub.f32 %v607, %v280
  %v634 = vsub.f32 %v611, %v280
  %v635 = vsub.f32 %v615, %v280
  %v636 = vsub.f32 %v619, %v280
  %637 = vset.pattern.permute.xlu0 2
  %638 = vperm.xlu0 %637, %v77
  %v639 = vpop.permute.xlu0 %638
  %641 = vset.pattern.permute.xlu0 2
  %642 = vperm.xlu0 %641, %v78
  %v643 = vpop.permute.xlu0 %642
  %645 = vset.pattern.permute.xlu0 2
  %646 = vperm.xlu0 %645, %v79
  %v647 = vpop.permute.xlu0 %646
  %649 = vset.pattern.permute.xlu0 2
  %650 = vperm.xlu0 %649, %v80
  %v651 = vpop.permute.xlu0 %650
  %653 = vset.pattern.permute.xlu0 2
  %654 = vperm.xlu0 %653, %v81
  %v655 = vpop.permute.xlu0 %654
  %657 = vset.pattern.permute.xlu0 2
  %658 = vperm.xlu0 %657, %v82
  %v659 = vpop.permute.xlu0 %658
  %661 = vset.pattern.permute.xlu0 2
  %662 = vperm.xlu0 %661, %v83
  %v663 = vpop.permute.xlu0 %662
  %665 = vset.pattern.permute.xlu0 2
  %666 = vperm.xlu0 %665, %v84
  %v667 = vpop.permute.xlu0 %666
  %669 = vset.pattern.permute.xlu0 2
  %670 = vperm.xlu0 %669, %v85
  %v671 = vpop.permute.xlu0 %670
  %673 = vset.pattern.permute.xlu0 2
  %674 = vperm.xlu0 %673, %v86
  %v675 = vpop.permute.xlu0 %674
  %677 = vset.pattern.permute.xlu0 2
  %678 = vperm.xlu0 %677, %v87
  %v679 = vpop.permute.xlu0 %678
  %681 = vset.pattern.permute.xlu0 2
  %682 = vperm.xlu0 %681, %v88
  %v683 = vpop.permute.xlu0 %682
  %685 = vset.pattern.permute.xlu0 2
  %686 = vperm.xlu0 %685, %v89
  %v687 = vpop.permute.xlu0 %686
  %689 = vset.pattern.permute.xlu0 2
  %690 = vperm.xlu0 %689, %v90
  %v691 = vpop.permute.xlu0 %690
  %693 = vset.pattern.permute.xlu0 2
  %694 = vperm.xlu0 %693, %v91
  %v695 = vpop.permute.xlu0 %694
  %697 = vset.pattern.permute.xlu0 2
  %698 = vperm.xlu0 %697, %v92
  %v699 = vpop.permute.xlu0 %698
  %v701 = vsub.f32 %v639, %v364
  %v702 = vsub.f32 %v643, %v364
  %v703 = vsub.f32 %v647, %v364
  %v704 = vsub.f32 %v651, %v364
  %v705 = vsub.f32 %v655, %v364
  %v706 = vsub.f32 %v659, %v364
  %v707 = vsub.f32 %v663, %v364
  %v708 = vsub.f32 %v667, %v364
  %v709 = vsub.f32 %v671, %v364
  %v710 = vsub.f32 %v675, %v364
  %v711 = vsub.f32 %v679, %v364
  %v712 = vsub.f32 %v683, %v364
  %v713 = vsub.f32 %v687, %v364
  %v714 = vsub.f32 %v691, %v364
  %v715 = vsub.f32 %v695, %v364
  %v716 = vsub.f32 %v699, %v364
  %v717 = vand.u32 2147483647, %v541
  %v718 = vand.u32 2147483647, %v542
  %v719 = vand.u32 2147483647, %v543
  %v720 = vand.u32 2147483647, %v544
  %v721 = vand.u32 2147483647, %v545
  %v722 = vand.u32 2147483647, %v546
  %v723 = vand.u32 2147483647, %v547
  %v724 = vand.u32 2147483647, %v548
  %v725 = vand.u32 2147483647, %v549
  %v726 = vand.u32 2147483647, %v550
  %v727 = vand.u32 2147483647, %v551
  %v728 = vand.u32 2147483647, %v552
  %v729 = vand.u32 2147483647, %v553
  %v730 = vand.u32 2147483647, %v554
  %v731 = vand.u32 2147483647, %v555
  %v732 = vand.u32 2147483647, %v556
  %vm733 = vcmp.le.f32.partialorder %v717, 0.8
  %vm734 = vcmp.le.f32.partialorder %v718, 0.8
  %vm735 = vcmp.le.f32.partialorder %v719, 0.8
  %vm736 = vcmp.le.f32.partialorder %v720, 0.8
  %vm737 = vcmp.le.f32.partialorder %v721, 0.8
  %vm738 = vcmp.le.f32.partialorder %v722, 0.8
  %vm739 = vcmp.le.f32.partialorder %v723, 0.8
  %vm740 = vcmp.le.f32.partialorder %v724, 0.8
  %vm741 = vcmp.le.f32.partialorder %v725, 0.8
  %vm742 = vcmp.le.f32.partialorder %v726, 0.8
  %vm743 = vcmp.le.f32.partialorder %v727, 0.8
  %vm744 = vcmp.le.f32.partialorder %v728, 0.8
  %vm745 = vcmp.le.f32.partialorder %v729, 0.8
  %vm746 = vcmp.le.f32.partialorder %v730, 0.8
  %vm747 = vcmp.le.f32.partialorder %v731, 0.8
  %vm748 = vcmp.le.f32.partialorder %v732, 0.8
  %v749 = vand.u32 2147483647, %v621
  %v750 = vand.u32 2147483647, %v622
  %v751 = vand.u32 2147483647, %v623
  %v752 = vand.u32 2147483647, %v624
  %v753 = vand.u32 2147483647, %v625
  %v754 = vand.u32 2147483647, %v626
  %v755 = vand.u32 2147483647, %v627
  %v756 = vand.u32 2147483647, %v628
  %v757 = vand.u32 2147483647, %v629
  %v758 = vand.u32 2147483647, %v630
  %v759 = vand.u32 2147483647, %v631
  %v760 = vand.u32 2147483647, %v632
  %v761 = vand.u32 2147483647, %v633
  %v762 = vand.u32 2147483647, %v634
  %v763 = vand.u32 2147483647, %v635
  %v764 = vand.u32 2147483647, %v636
  %vm765 = vcmp.le.f32.partialorder %v749, 0.8
  %vm766 = vcmp.le.f32.partialorder %v750, 0.8
  %vm767 = vcmp.le.f32.partialorder %v751, 0.8
  %vm768 = vcmp.le.f32.partialorder %v752, 0.8
  %vm769 = vcmp.le.f32.partialorder %v753, 0.8
  %vm770 = vcmp.le.f32.partialorder %v754, 0.8
  %vm771 = vcmp.le.f32.partialorder %v755, 0.8
  %vm772 = vcmp.le.f32.partialorder %v756, 0.8
  %vm773 = vcmp.le.f32.partialorder %v757, 0.8
  %vm774 = vcmp.le.f32.partialorder %v758, 0.8
  %vm775 = vcmp.le.f32.partialorder %v759, 0.8
  %vm776 = vcmp.le.f32.partialorder %v760, 0.8
  %vm777 = vcmp.le.f32.partialorder %v761, 0.8
  %vm778 = vcmp.le.f32.partialorder %v762, 0.8
  %vm779 = vcmp.le.f32.partialorder %v763, 0.8
  %vm780 = vcmp.le.f32.partialorder %v764, 0.8
  %vm781 = vmand %vm733, %vm765
  %vm782 = vmand %vm734, %vm766
  %vm783 = vmand %vm735, %vm767
  %vm784 = vmand %vm736, %vm768
  %vm785 = vmand %vm737, %vm769
  %vm786 = vmand %vm738, %vm770
  %vm787 = vmand %vm739, %vm771
  %vm788 = vmand %vm740, %vm772
  %vm789 = vmand %vm741, %vm773
  %vm790 = vmand %vm742, %vm774
  %vm791 = vmand %vm743, %vm775
  %vm792 = vmand %vm744, %vm776
  %vm793 = vmand %vm745, %vm777
  %vm794 = vmand %vm746, %vm778
  %vm795 = vmand %vm747, %vm779
  %vm796 = vmand %vm748, %vm780
  %v797 = vand.u32 2147483647, %v701
  %v798 = vand.u32 2147483647, %v702
  %v799 = vand.u32 2147483647, %v703
  %v800 = vand.u32 2147483647, %v704
  %v801 = vand.u32 2147483647, %v705
  %v802 = vand.u32 2147483647, %v706
  %v803 = vand.u32 2147483647, %v707
  %v804 = vand.u32 2147483647, %v708
  %v805 = vand.u32 2147483647, %v709
  %v806 = vand.u32 2147483647, %v710
  %v807 = vand.u32 2147483647, %v711
  %v808 = vand.u32 2147483647, %v712
  %v809 = vand.u32 2147483647, %v713
  %v810 = vand.u32 2147483647, %v714
  %v811 = vand.u32 2147483647, %v715
  %v812 = vand.u32 2147483647, %v716
  %vm813 = vcmp.le.f32.partialorder %v797, 0.8
  %vm814 = vcmp.le.f32.partialorder %v798, 0.8
  %vm815 = vcmp.le.f32.partialorder %v799, 0.8
  %vm816 = vcmp.le.f32.partialorder %v800, 0.8
  %vm817 = vcmp.le.f32.partialorder %v801, 0.8
  %vm818 = vcmp.le.f32.partialorder %v802, 0.8
  %vm819 = vcmp.le.f32.partialorder %v803, 0.8
  %vm820 = vcmp.le.f32.partialorder %v804, 0.8
  %vm821 = vcmp.le.f32.partialorder %v805, 0.8
  %vm822 = vcmp.le.f32.partialorder %v806, 0.8
  %vm823 = vcmp.le.f32.partialorder %v807, 0.8
  %vm824 = vcmp.le.f32.partialorder %v808, 0.8
  %vm825 = vcmp.le.f32.partialorder %v809, 0.8
  %vm826 = vcmp.le.f32.partialorder %v810, 0.8
  %vm827 = vcmp.le.f32.partialorder %v811, 0.8
  %vm828 = vcmp.le.f32.partialorder %v812, 0.8
  %vm829 = vmand %vm781, %vm813
  %vm830 = vmand %vm782, %vm814
  %vm831 = vmand %vm783, %vm815
  %vm832 = vmand %vm784, %vm816
  %vm833 = vmand %vm785, %vm817
  %vm834 = vmand %vm786, %vm818
  %vm835 = vmand %vm787, %vm819
  %vm836 = vmand %vm788, %vm820
  %vm837 = vmand %vm789, %vm821
  %vm838 = vmand %vm790, %vm822
  %vm839 = vmand %vm791, %vm823
  %vm840 = vmand %vm792, %vm824
  %vm841 = vmand %vm793, %vm825
  %vm842 = vmand %vm794, %vm826
  %vm843 = vmand %vm795, %vm827
  %vm844 = vmand %vm796, %vm828
  %845 = vset.pattern.permute.xlu0 0
  %846 = vperm.xlu0 %845, %v93
  %v847 = vpop.permute.xlu0 %846
  %848 = vset.pattern.permute.xlu0 0
  %849 = vperm.xlu0 %848, %v94
  %v850 = vpop.permute.xlu0 %849
  %851 = vset.pattern.permute.xlu0 0
  %852 = vperm.xlu0 %851, %v95
  %v853 = vpop.permute.xlu0 %852
  %854 = vset.pattern.permute.xlu0 0
  %855 = vperm.xlu0 %854, %v96
  %v856 = vpop.permute.xlu0 %855
  %857 = vset.pattern.permute.xlu0 0
  %858 = vperm.xlu0 %857, %v97
  %v859 = vpop.permute.xlu0 %858
  %860 = vset.pattern.permute.xlu0 0
  %861 = vperm.xlu0 %860, %v98
  %v862 = vpop.permute.xlu0 %861
  %863 = vset.pattern.permute.xlu0 0
  %864 = vperm.xlu0 %863, %v99
  %v865 = vpop.permute.xlu0 %864
  %866 = vset.pattern.permute.xlu0 0
  %867 = vperm.xlu0 %866, %v100
  %v868 = vpop.permute.xlu0 %867
  %869 = vset.pattern.permute.xlu0 0
  %870 = vperm.xlu0 %869, %v101
  %v871 = vpop.permute.xlu0 %870
  %872 = vset.pattern.permute.xlu0 0
  %873 = vperm.xlu0 %872, %v102
  %v874 = vpop.permute.xlu0 %873
  %875 = vset.pattern.permute.xlu0 0
  %876 = vperm.xlu0 %875, %v103
  %v877 = vpop.permute.xlu0 %876
  %878 = vset.pattern.permute.xlu0 0
  %879 = vperm.xlu0 %878, %v104
  %v880 = vpop.permute.xlu0 %879
  %881 = vset.pattern.permute.xlu0 0
  %882 = vperm.xlu0 %881, %v105
  %v883 = vpop.permute.xlu0 %882
  %884 = vset.pattern.permute.xlu0 0
  %885 = vperm.xlu0 %884, %v106
  %v886 = vpop.permute.xlu0 %885
  %887 = vset.pattern.permute.xlu0 0
  %888 = vperm.xlu0 %887, %v107
  %v889 = vpop.permute.xlu0 %888
  %890 = vset.pattern.permute.xlu0 0
  %891 = vperm.xlu0 %890, %v108
  %v892 = vpop.permute.xlu0 %891
  %v893 = vlaneseq
  %v894 = vshrl.u32 %v893, 7
  %v895 = vsub.s32 0, %v894
  %v896 = vrot.slane %v112, %v895
  %vm897 = vcmp.eq.s32.totalorder %v847, %v896
  %vm898 = vcmp.eq.s32.totalorder %v850, %v896
  %vm899 = vcmp.eq.s32.totalorder %v853, %v896
  %vm900 = vcmp.eq.s32.totalorder %v856, %v896
  %vm901 = vcmp.eq.s32.totalorder %v859, %v896
  %vm902 = vcmp.eq.s32.totalorder %v862, %v896
  %vm903 = vcmp.eq.s32.totalorder %v865, %v896
  %vm904 = vcmp.eq.s32.totalorder %v868, %v896
  %vm905 = vcmp.eq.s32.totalorder %v871, %v896
  %vm906 = vcmp.eq.s32.totalorder %v874, %v896
  %vm907 = vcmp.eq.s32.totalorder %v877, %v896
  %vm908 = vcmp.eq.s32.totalorder %v880, %v896
  %vm909 = vcmp.eq.s32.totalorder %v883, %v896
  %vm910 = vcmp.eq.s32.totalorder %v886, %v896
  %vm911 = vcmp.eq.s32.totalorder %v889, %v896
  %vm912 = vcmp.eq.s32.totalorder %v892, %v896
  %vm913 = vmand %vm829, %vm897
  %vm914 = vmand %vm830, %vm898
  %vm915 = vmand %vm831, %vm899
  %vm916 = vmand %vm832, %vm900
  %vm917 = vmand %vm833, %vm901
  %vm918 = vmand %vm834, %vm902
  %vm919 = vmand %vm835, %vm903
  %vm920 = vmand %vm836, %vm904
  %vm921 = vmand %vm837, %vm905
  %vm922 = vmand %vm838, %vm906
  %vm923 = vmand %vm839, %vm907
  %vm924 = vmand %vm840, %vm908
  %vm925 = vmand %vm841, %vm909
  %vm926 = vmand %vm842, %vm910
  %vm927 = vmand %vm843, %vm911
  %vm928 = vmand %vm844, %vm912
  %v929 = vsel %vm913, %v445, 1e+10
  %v930 = vsel %vm914, %v446, 1e+10
  %v931 = vsel %vm915, %v447, 1e+10
  %v932 = vsel %vm916, %v448, 1e+10
  %v933 = vsel %vm917, %v449, 1e+10
  %v934 = vsel %vm918, %v450, 1e+10
  %v935 = vsel %vm919, %v451, 1e+10
  %v936 = vsel %vm920, %v452, 1e+10
  %v937 = vsel %vm921, %v453, 1e+10
  %v938 = vsel %vm922, %v454, 1e+10
  %v939 = vsel %vm923, %v455, 1e+10
  %v940 = vsel %vm924, %v456, 1e+10
  %v941 = vsel %vm925, %v457, 1e+10
  %v942 = vsel %vm926, %v458, 1e+10
  %v943 = vsel %vm927, %v459, 1e+10
  %v944 = vsel %vm928, %v460, 1e+10
  %s945 = smul.u32 0, 128
  %v946 = vlaneseq
  %v947 = vand.u32 %v946, 127
  %v948 = vstv %s945
  %v949 = vadd.s32 %v948, %v947
  %v950 = vld [vmem:[#allocation2] sm:$0xff]
  %v951 = vld [vmem:[#allocation2 + $0x8] sm:$0xff]
  %v952 = vld [vmem:[#allocation2 + $0x10] sm:$0xff]
  %v953 = vld [vmem:[#allocation2 + $0x18] sm:$0xff]
  %v954 = vld [vmem:[#allocation2 + $0x20] sm:$0xff]
  %v955 = vld [vmem:[#allocation2 + $0x28] sm:$0xff]
  %v956 = vld [vmem:[#allocation2 + $0x30] sm:$0xff]
  %v957 = vld [vmem:[#allocation2 + $0x38] sm:$0xff]
  %v958 = vld [vmem:[#allocation2 + $0x40] sm:$0xff]
  %v959 = vld [vmem:[#allocation2 + $0x48] sm:$0xff]
  %v960 = vld [vmem:[#allocation2 + $0x50] sm:$0xff]
  %v961 = vld [vmem:[#allocation2 + $0x58] sm:$0xff]
  %v962 = vld [vmem:[#allocation2 + $0x60] sm:$0xff]
  %v963 = vld [vmem:[#allocation2 + $0x68] sm:$0xff]
  %v964 = vld [vmem:[#allocation2 + $0x70] sm:$0xff]
  %v965 = vld [vmem:[#allocation2 + $0x78] sm:$0xff]
  %v966 = vld [vmem:[#allocation3] sm:$0xff]
  %v967 = vld [vmem:[#allocation3 + $0x8] sm:$0xff]
  %v968 = vld [vmem:[#allocation3 + $0x10] sm:$0xff]
  %v969 = vld [vmem:[#allocation3 + $0x18] sm:$0xff]
  %v970 = vld [vmem:[#allocation3 + $0x20] sm:$0xff]
  %v971 = vld [vmem:[#allocation3 + $0x28] sm:$0xff]
  %v972 = vld [vmem:[#allocation3 + $0x30] sm:$0xff]
  %v973 = vld [vmem:[#allocation3 + $0x38] sm:$0xff]
  %v974 = vld [vmem:[#allocation3 + $0x40] sm:$0xff]
  %v975 = vld [vmem:[#allocation3 + $0x48] sm:$0xff]
  %v976 = vld [vmem:[#allocation3 + $0x50] sm:$0xff]
  %v977 = vld [vmem:[#allocation3 + $0x58] sm:$0xff]
  %v978 = vld [vmem:[#allocation3 + $0x60] sm:$0xff]
  %v979 = vld [vmem:[#allocation3 + $0x68] sm:$0xff]
  %v980 = vld [vmem:[#allocation3 + $0x70] sm:$0xff]
  %v981 = vld [vmem:[#allocation3 + $0x78] sm:$0xff]
  %v982 = vmin.f32 %v950, %v929
  %983 = vmin.xlane.f32.xlu0 %v982
  %v984 = vpop.xlane.xlu0 %983
  %v985 = vmin.f32 %v951, %v930
  %986 = vmin.xlane.f32.xlu0 %v985
  %v987 = vpop.xlane.xlu0 %986
  %v988 = vmin.f32 %v952, %v931
  %989 = vmin.xlane.f32.xlu0 %v988
  %v990 = vpop.xlane.xlu0 %989
  %v991 = vmin.f32 %v953, %v932
  %992 = vmin.xlane.f32.xlu0 %v991
  %v993 = vpop.xlane.xlu0 %992
  %v994 = vmin.f32 %v954, %v933
  %995 = vmin.xlane.f32.xlu0 %v994
  %v996 = vpop.xlane.xlu0 %995
  %v997 = vmin.f32 %v955, %v934
  %998 = vmin.xlane.f32.xlu0 %v997
  %v999 = vpop.xlane.xlu0 %998
  %v1000 = vmin.f32 %v956, %v935
  %1001 = vmin.xlane.f32.xlu0 %v1000
  %v1002 = vpop.xlane.xlu0 %1001
  %v1003 = vmin.f32 %v957, %v936
  %1004 = vmin.xlane.f32.xlu0 %v1003
  %v1005 = vpop.xlane.xlu0 %1004
  %v1006 = vmin.f32 %v958, %v937
  %1007 = vmin.xlane.f32.xlu0 %v1006
  %v1008 = vpop.xlane.xlu0 %1007
  %v1009 = vmin.f32 %v959, %v938
  %1010 = vmin.xlane.f32.xlu0 %v1009
  %v1011 = vpop.xlane.xlu0 %1010
  %v1012 = vmin.f32 %v960, %v939
  %1013 = vmin.xlane.f32.xlu0 %v1012
  %v1014 = vpop.xlane.xlu0 %1013
  %v1015 = vmin.f32 %v961, %v940
  %1016 = vmin.xlane.f32.xlu0 %v1015
  %v1017 = vpop.xlane.xlu0 %1016
  %v1018 = vmin.f32 %v962, %v941
  %1019 = vmin.xlane.f32.xlu0 %v1018
  %v1020 = vpop.xlane.xlu0 %1019
  %v1021 = vmin.f32 %v963, %v942
  %1022 = vmin.xlane.f32.xlu0 %v1021
  %v1023 = vpop.xlane.xlu0 %1022
  %v1024 = vmin.f32 %v964, %v943
  %1025 = vmin.xlane.f32.xlu0 %v1024
  %v1026 = vpop.xlane.xlu0 %1025
  %v1027 = vmin.f32 %v965, %v944
  %1028 = vmin.xlane.f32.xlu0 %v1027
  %v1029 = vpop.xlane.xlu0 %1028
  %vm1030 = vcmp.eq.f32.partialorder %v950, %v984
  %vm1031 = vcmp.eq.f32.partialorder %v929, %v984
  %vm1032 = vcmp.eq.f32.partialorder %v951, %v987
  %vm1033 = vcmp.eq.f32.partialorder %v930, %v987
  %vm1034 = vcmp.eq.f32.partialorder %v952, %v990
  %vm1035 = vcmp.eq.f32.partialorder %v931, %v990
  %vm1036 = vcmp.eq.f32.partialorder %v953, %v993
  %vm1037 = vcmp.eq.f32.partialorder %v932, %v993
  %vm1038 = vcmp.eq.f32.partialorder %v954, %v996
  %vm1039 = vcmp.eq.f32.partialorder %v933, %v996
  %vm1040 = vcmp.eq.f32.partialorder %v955, %v999
  %vm1041 = vcmp.eq.f32.partialorder %v934, %v999
  %vm1042 = vcmp.eq.f32.partialorder %v956, %v1002
  %vm1043 = vcmp.eq.f32.partialorder %v935, %v1002
  %vm1044 = vcmp.eq.f32.partialorder %v957, %v1005
  %vm1045 = vcmp.eq.f32.partialorder %v936, %v1005
  %vm1046 = vcmp.eq.f32.partialorder %v958, %v1008
  %vm1047 = vcmp.eq.f32.partialorder %v937, %v1008
  %vm1048 = vcmp.eq.f32.partialorder %v959, %v1011
  %vm1049 = vcmp.eq.f32.partialorder %v938, %v1011
  %vm1050 = vcmp.eq.f32.partialorder %v960, %v1014
  %vm1051 = vcmp.eq.f32.partialorder %v939, %v1014
  %vm1052 = vcmp.eq.f32.partialorder %v961, %v1017
  %vm1053 = vcmp.eq.f32.partialorder %v940, %v1017
  %vm1054 = vcmp.eq.f32.partialorder %v962, %v1020
  %vm1055 = vcmp.eq.f32.partialorder %v941, %v1020
  %vm1056 = vcmp.eq.f32.partialorder %v963, %v1023
  %vm1057 = vcmp.eq.f32.partialorder %v942, %v1023
  %vm1058 = vcmp.eq.f32.partialorder %v964, %v1026
  %vm1059 = vcmp.eq.f32.partialorder %v943, %v1026
  %vm1060 = vcmp.eq.f32.partialorder %v965, %v1029
  %vm1061 = vcmp.eq.f32.partialorder %v944, %v1029
  %v1062 = vcvt.s32.f32 %v966
  %v1063 = vcvt.s32.f32 %v949
  %v1064 = vcvt.s32.f32 %v967
  %v1065 = vcvt.s32.f32 %v968
  %v1066 = vcvt.s32.f32 %v969
  %v1067 = vcvt.s32.f32 %v970
  %v1068 = vcvt.s32.f32 %v971
  %v1069 = vcvt.s32.f32 %v972
  %v1070 = vcvt.s32.f32 %v973
  %v1071 = vcvt.s32.f32 %v974
  %v1072 = vcvt.s32.f32 %v975
  %v1073 = vcvt.s32.f32 %v976
  %v1074 = vcvt.s32.f32 %v977
  %v1075 = vcvt.s32.f32 %v978
  %v1076 = vcvt.s32.f32 %v979
  %v1077 = vcvt.s32.f32 %v980
  %v1078 = vcvt.s32.f32 %v981
  %v1079 = vsel %vm1030, %v1062, 1e+09
  %v1080 = vsel %vm1031, %v1063, 1e+09
  %v1081 = vsel %vm1032, %v1064, 1e+09
  %v1082 = vsel %vm1033, %v1063, 1e+09
  %v1083 = vsel %vm1034, %v1065, 1e+09
  %v1084 = vsel %vm1035, %v1063, 1e+09
  %v1085 = vsel %vm1036, %v1066, 1e+09
  %v1086 = vsel %vm1037, %v1063, 1e+09
  %v1087 = vsel %vm1038, %v1067, 1e+09
  %v1088 = vsel %vm1039, %v1063, 1e+09
  %v1089 = vsel %vm1040, %v1068, 1e+09
  %v1090 = vsel %vm1041, %v1063, 1e+09
  %v1091 = vsel %vm1042, %v1069, 1e+09
  %v1092 = vsel %vm1043, %v1063, 1e+09
  %v1093 = vsel %vm1044, %v1070, 1e+09
  %v1094 = vsel %vm1045, %v1063, 1e+09
  %v1095 = vsel %vm1046, %v1071, 1e+09
  %v1096 = vsel %vm1047, %v1063, 1e+09
  %v1097 = vsel %vm1048, %v1072, 1e+09
  %v1098 = vsel %vm1049, %v1063, 1e+09
  %v1099 = vsel %vm1050, %v1073, 1e+09
  %v1100 = vsel %vm1051, %v1063, 1e+09
  %v1101 = vsel %vm1052, %v1074, 1e+09
  %v1102 = vsel %vm1053, %v1063, 1e+09
  %v1103 = vsel %vm1054, %v1075, 1e+09
  %v1104 = vsel %vm1055, %v1063, 1e+09
  %v1105 = vsel %vm1056, %v1076, 1e+09
  %v1106 = vsel %vm1057, %v1063, 1e+09
  %v1107 = vsel %vm1058, %v1077, 1e+09
  %v1108 = vsel %vm1059, %v1063, 1e+09
  %v1109 = vsel %vm1060, %v1078, 1e+09
  %v1110 = vsel %vm1061, %v1063, 1e+09
  %v1111 = vmin.f32 %v1079, %v1080
  %1112 = vmin.xlane.f32.xlu0 %v1111
  %v1113 = vpop.xlane.xlu0 %1112
  %v1114 = vmin.f32 %v1081, %v1082
  %1115 = vmin.xlane.f32.xlu0 %v1114
  %v1116 = vpop.xlane.xlu0 %1115
  %v1117 = vmin.f32 %v1083, %v1084
  %1118 = vmin.xlane.f32.xlu0 %v1117
  %v1119 = vpop.xlane.xlu0 %1118
  %v1120 = vmin.f32 %v1085, %v1086
  %1121 = vmin.xlane.f32.xlu0 %v1120
  %v1122 = vpop.xlane.xlu0 %1121
  %v1123 = vmin.f32 %v1087, %v1088
  %1124 = vmin.xlane.f32.xlu0 %v1123
  %v1125 = vpop.xlane.xlu0 %1124
  %v1126 = vmin.f32 %v1089, %v1090
  %1127 = vmin.xlane.f32.xlu0 %v1126
  %v1128 = vpop.xlane.xlu0 %1127
  %v1129 = vmin.f32 %v1091, %v1092
  %1130 = vmin.xlane.f32.xlu0 %v1129
  %v1131 = vpop.xlane.xlu0 %1130
  %v1132 = vmin.f32 %v1093, %v1094
  %1133 = vmin.xlane.f32.xlu0 %v1132
  %v1134 = vpop.xlane.xlu0 %1133
  %v1135 = vmin.f32 %v1095, %v1096
  %1136 = vmin.xlane.f32.xlu0 %v1135
  %v1137 = vpop.xlane.xlu0 %1136
  %v1138 = vmin.f32 %v1097, %v1098
  %1139 = vmin.xlane.f32.xlu0 %v1138
  %v1140 = vpop.xlane.xlu0 %1139
  %v1141 = vmin.f32 %v1099, %v1100
  %1142 = vmin.xlane.f32.xlu0 %v1141
  %v1143 = vpop.xlane.xlu0 %1142
  %v1144 = vmin.f32 %v1101, %v1102
  %1145 = vmin.xlane.f32.xlu0 %v1144
  %v1146 = vpop.xlane.xlu0 %1145
  %v1147 = vmin.f32 %v1103, %v1104
  %1148 = vmin.xlane.f32.xlu0 %v1147
  %v1149 = vpop.xlane.xlu0 %1148
  %v1150 = vmin.f32 %v1105, %v1106
  %1151 = vmin.xlane.f32.xlu0 %v1150
  %v1152 = vpop.xlane.xlu0 %1151
  %v1153 = vmin.f32 %v1107, %v1108
  %1154 = vmin.xlane.f32.xlu0 %v1153
  %v1155 = vpop.xlane.xlu0 %1154
  %v1156 = vmin.f32 %v1109, %v1110
  %1157 = vmin.xlane.f32.xlu0 %v1156
  %v1158 = vpop.xlane.xlu0 %1157
  %v1159 = vcvt.f32.s32.to.zero.pseudo %v1113
  %v1160 = vcvt.f32.s32.to.zero.pseudo %v1116
  %v1161 = vcvt.f32.s32.to.zero.pseudo %v1119
  %v1162 = vcvt.f32.s32.to.zero.pseudo %v1122
  %v1163 = vcvt.f32.s32.to.zero.pseudo %v1125
  %v1164 = vcvt.f32.s32.to.zero.pseudo %v1128
  %v1165 = vcvt.f32.s32.to.zero.pseudo %v1131
  %v1166 = vcvt.f32.s32.to.zero.pseudo %v1134
  %v1167 = vcvt.f32.s32.to.zero.pseudo %v1137
  %v1168 = vcvt.f32.s32.to.zero.pseudo %v1140
  %v1169 = vcvt.f32.s32.to.zero.pseudo %v1143
  %v1170 = vcvt.f32.s32.to.zero.pseudo %v1146
  %v1171 = vcvt.f32.s32.to.zero.pseudo %v1149
  %v1172 = vcvt.f32.s32.to.zero.pseudo %v1152
  %v1173 = vcvt.f32.s32.to.zero.pseudo %v1155
  %v1174 = vcvt.f32.s32.to.zero.pseudo %v1158
  %vm1175 = vcmp.eq.s32.totalorder %v966, %v1159
  %vm1176 = vcmp.eq.s32.totalorder %v949, %v1159
  %vm1177 = vcmp.eq.s32.totalorder %v967, %v1160
  %vm1178 = vcmp.eq.s32.totalorder %v949, %v1160
  %vm1179 = vcmp.eq.s32.totalorder %v968, %v1161
  %vm1180 = vcmp.eq.s32.totalorder %v949, %v1161
  %vm1181 = vcmp.eq.s32.totalorder %v969, %v1162
  %vm1182 = vcmp.eq.s32.totalorder %v949, %v1162
  %vm1183 = vcmp.eq.s32.totalorder %v970, %v1163
  %vm1184 = vcmp.eq.s32.totalorder %v949, %v1163
  %vm1185 = vcmp.eq.s32.totalorder %v971, %v1164
  %vm1186 = vcmp.eq.s32.totalorder %v949, %v1164
  %vm1187 = vcmp.eq.s32.totalorder %v972, %v1165
  %vm1188 = vcmp.eq.s32.totalorder %v949, %v1165
  %vm1189 = vcmp.eq.s32.totalorder %v973, %v1166
  %vm1190 = vcmp.eq.s32.totalorder %v949, %v1166
  %vm1191 = vcmp.eq.s32.totalorder %v974, %v1167
  %vm1192 = vcmp.eq.s32.totalorder %v949, %v1167
  %vm1193 = vcmp.eq.s32.totalorder %v975, %v1168
  %vm1194 = vcmp.eq.s32.totalorder %v949, %v1168
  %vm1195 = vcmp.eq.s32.totalorder %v976, %v1169
  %vm1196 = vcmp.eq.s32.totalorder %v949, %v1169
  %vm1197 = vcmp.eq.s32.totalorder %v977, %v1170
  %vm1198 = vcmp.eq.s32.totalorder %v949, %v1170
  %vm1199 = vcmp.eq.s32.totalorder %v978, %v1171
  %vm1200 = vcmp.eq.s32.totalorder %v949, %v1171
  %vm1201 = vcmp.eq.s32.totalorder %v979, %v1172
  %vm1202 = vcmp.eq.s32.totalorder %v949, %v1172
  %vm1203 = vcmp.eq.s32.totalorder %v980, %v1173
  %vm1204 = vcmp.eq.s32.totalorder %v949, %v1173
  %vm1205 = vcmp.eq.s32.totalorder %v981, %v1174
  %vm1206 = vcmp.eq.s32.totalorder %v949, %v1174
  %v1207 = vsel %vm1175, 1e+10, %v950
  %v1208 = vsel %vm1176, 1e+10, %v929
  %v1209 = vsel %vm1177, 1e+10, %v951
  %v1210 = vsel %vm1178, 1e+10, %v930
  %v1211 = vsel %vm1179, 1e+10, %v952
  %v1212 = vsel %vm1180, 1e+10, %v931
  %v1213 = vsel %vm1181, 1e+10, %v953
  %v1214 = vsel %vm1182, 1e+10, %v932
  %v1215 = vsel %vm1183, 1e+10, %v954
  %v1216 = vsel %vm1184, 1e+10, %v933
  %v1217 = vsel %vm1185, 1e+10, %v955
  %v1218 = vsel %vm1186, 1e+10, %v934
  %v1219 = vsel %vm1187, 1e+10, %v956
  %v1220 = vsel %vm1188, 1e+10, %v935
  %v1221 = vsel %vm1189, 1e+10, %v957
  %v1222 = vsel %vm1190, 1e+10, %v936
  %v1223 = vsel %vm1191, 1e+10, %v958
  %v1224 = vsel %vm1192, 1e+10, %v937
  %v1225 = vsel %vm1193, 1e+10, %v959
  %v1226 = vsel %vm1194, 1e+10, %v938
  %v1227 = vsel %vm1195, 1e+10, %v960
  %v1228 = vsel %vm1196, 1e+10, %v939
  %v1229 = vsel %vm1197, 1e+10, %v961
  %v1230 = vsel %vm1198, 1e+10, %v940
  %v1231 = vsel %vm1199, 1e+10, %v962
  %v1232 = vsel %vm1200, 1e+10, %v941
  %v1233 = vsel %vm1201, 1e+10, %v963
  %v1234 = vsel %vm1202, 1e+10, %v942
  %v1235 = vsel %vm1203, 1e+10, %v964
  %v1236 = vsel %vm1204, 1e+10, %v943
  %v1237 = vsel %vm1205, 1e+10, %v965
  %v1238 = vsel %vm1206, 1e+10, %v944
  %v1239 = vmin.f32 %v1207, %v1208
  %1240 = vmin.xlane.f32.xlu0 %v1239
  %v1241 = vpop.xlane.xlu0 %1240
  %v1242 = vmin.f32 %v1209, %v1210
  %1243 = vmin.xlane.f32.xlu0 %v1242
  %v1244 = vpop.xlane.xlu0 %1243
  %v1245 = vmin.f32 %v1211, %v1212
  %1246 = vmin.xlane.f32.xlu0 %v1245
  %v1247 = vpop.xlane.xlu0 %1246
  %v1248 = vmin.f32 %v1213, %v1214
  %1249 = vmin.xlane.f32.xlu0 %v1248
  %v1250 = vpop.xlane.xlu0 %1249
  %v1251 = vmin.f32 %v1215, %v1216
  %1252 = vmin.xlane.f32.xlu0 %v1251
  %v1253 = vpop.xlane.xlu0 %1252
  %v1254 = vmin.f32 %v1217, %v1218
  %1255 = vmin.xlane.f32.xlu0 %v1254
  %v1256 = vpop.xlane.xlu0 %1255
  %v1257 = vmin.f32 %v1219, %v1220
  %1258 = vmin.xlane.f32.xlu0 %v1257
  %v1259 = vpop.xlane.xlu0 %1258
  %v1260 = vmin.f32 %v1221, %v1222
  %1261 = vmin.xlane.f32.xlu0 %v1260
  %v1262 = vpop.xlane.xlu0 %1261
  %v1263 = vmin.f32 %v1223, %v1224
  %1264 = vmin.xlane.f32.xlu0 %v1263
  %v1265 = vpop.xlane.xlu0 %1264
  %v1266 = vmin.f32 %v1225, %v1226
  %1267 = vmin.xlane.f32.xlu0 %v1266
  %v1268 = vpop.xlane.xlu0 %1267
  %v1269 = vmin.f32 %v1227, %v1228
  %1270 = vmin.xlane.f32.xlu0 %v1269
  %v1271 = vpop.xlane.xlu0 %1270
  %v1272 = vmin.f32 %v1229, %v1230
  %1273 = vmin.xlane.f32.xlu0 %v1272
  %v1274 = vpop.xlane.xlu0 %1273
  %v1275 = vmin.f32 %v1231, %v1232
  %1276 = vmin.xlane.f32.xlu0 %v1275
  %v1277 = vpop.xlane.xlu0 %1276
  %v1278 = vmin.f32 %v1233, %v1234
  %1279 = vmin.xlane.f32.xlu0 %v1278
  %v1280 = vpop.xlane.xlu0 %1279
  %v1281 = vmin.f32 %v1235, %v1236
  %1282 = vmin.xlane.f32.xlu0 %v1281
  %v1283 = vpop.xlane.xlu0 %1282
  %v1284 = vmin.f32 %v1237, %v1238
  %1285 = vmin.xlane.f32.xlu0 %v1284
  %v1286 = vpop.xlane.xlu0 %1285
  %vm1287 = vcmp.eq.f32.partialorder %v1207, %v1241
  %vm1288 = vcmp.eq.f32.partialorder %v1208, %v1241
  %vm1289 = vcmp.eq.f32.partialorder %v1209, %v1244
  %vm1290 = vcmp.eq.f32.partialorder %v1210, %v1244
  %vm1291 = vcmp.eq.f32.partialorder %v1211, %v1247
  %vm1292 = vcmp.eq.f32.partialorder %v1212, %v1247
  %vm1293 = vcmp.eq.f32.partialorder %v1213, %v1250
  %vm1294 = vcmp.eq.f32.partialorder %v1214, %v1250
  %vm1295 = vcmp.eq.f32.partialorder %v1215, %v1253
  %vm1296 = vcmp.eq.f32.partialorder %v1216, %v1253
  %vm1297 = vcmp.eq.f32.partialorder %v1217, %v1256
  %vm1298 = vcmp.eq.f32.partialorder %v1218, %v1256
  %vm1299 = vcmp.eq.f32.partialorder %v1219, %v1259
  %vm1300 = vcmp.eq.f32.partialorder %v1220, %v1259
  %vm1301 = vcmp.eq.f32.partialorder %v1221, %v1262
  %vm1302 = vcmp.eq.f32.partialorder %v1222, %v1262
  %vm1303 = vcmp.eq.f32.partialorder %v1223, %v1265
  %vm1304 = vcmp.eq.f32.partialorder %v1224, %v1265
  %vm1305 = vcmp.eq.f32.partialorder %v1225, %v1268
  %vm1306 = vcmp.eq.f32.partialorder %v1226, %v1268
  %vm1307 = vcmp.eq.f32.partialorder %v1227, %v1271
  %vm1308 = vcmp.eq.f32.partialorder %v1228, %v1271
  %vm1309 = vcmp.eq.f32.partialorder %v1229, %v1274
  %vm1310 = vcmp.eq.f32.partialorder %v1230, %v1274
  %vm1311 = vcmp.eq.f32.partialorder %v1231, %v1277
  %vm1312 = vcmp.eq.f32.partialorder %v1232, %v1277
  %vm1313 = vcmp.eq.f32.partialorder %v1233, %v1280
  %vm1314 = vcmp.eq.f32.partialorder %v1234, %v1280
  %vm1315 = vcmp.eq.f32.partialorder %v1235, %v1283
  %vm1316 = vcmp.eq.f32.partialorder %v1236, %v1283
  %vm1317 = vcmp.eq.f32.partialorder %v1237, %v1286
  %vm1318 = vcmp.eq.f32.partialorder %v1238, %v1286
  %v1319 = vsel %vm1287, %v1062, 1e+09
  %v1320 = vsel %vm1288, %v1063, 1e+09
  %v1321 = vsel %vm1289, %v1064, 1e+09
  %v1322 = vsel %vm1290, %v1063, 1e+09
  %v1323 = vsel %vm1291, %v1065, 1e+09
  %v1324 = vsel %vm1292, %v1063, 1e+09
  %v1325 = vsel %vm1293, %v1066, 1e+09
  %v1326 = vsel %vm1294, %v1063, 1e+09
  %v1327 = vsel %vm1295, %v1067, 1e+09
  %v1328 = vsel %vm1296, %v1063, 1e+09
  %v1329 = vsel %vm1297, %v1068, 1e+09
  %v1330 = vsel %vm1298, %v1063, 1e+09
  %v1331 = vsel %vm1299, %v1069, 1e+09
  %v1332 = vsel %vm1300, %v1063, 1e+09
  %v1333 = vsel %vm1301, %v1070, 1e+09
  %v1334 = vsel %vm1302, %v1063, 1e+09
  %v1335 = vsel %vm1303, %v1071, 1e+09
  %v1336 = vsel %vm1304, %v1063, 1e+09
  %v1337 = vsel %vm1305, %v1072, 1e+09
  %v1338 = vsel %vm1306, %v1063, 1e+09
  %v1339 = vsel %vm1307, %v1073, 1e+09
  %v1340 = vsel %vm1308, %v1063, 1e+09
  %v1341 = vsel %vm1309, %v1074, 1e+09
  %v1342 = vsel %vm1310, %v1063, 1e+09
  %v1343 = vsel %vm1311, %v1075, 1e+09
  %v1344 = vsel %vm1312, %v1063, 1e+09
  %v1345 = vsel %vm1313, %v1076, 1e+09
  %v1346 = vsel %vm1314, %v1063, 1e+09
  %v1347 = vsel %vm1315, %v1077, 1e+09
  %v1348 = vsel %vm1316, %v1063, 1e+09
  %v1349 = vsel %vm1317, %v1078, 1e+09
  %v1350 = vsel %vm1318, %v1063, 1e+09
  %v1351 = vmin.f32 %v1319, %v1320
  %1352 = vmin.xlane.f32.xlu0 %v1351
  %v1353 = vpop.xlane.xlu0 %1352
  %v1354 = vmin.f32 %v1321, %v1322
  %1355 = vmin.xlane.f32.xlu0 %v1354
  %v1356 = vpop.xlane.xlu0 %1355
  %v1357 = vmin.f32 %v1323, %v1324
  %1358 = vmin.xlane.f32.xlu0 %v1357
  %v1359 = vpop.xlane.xlu0 %1358
  %v1360 = vmin.f32 %v1325, %v1326
  %1361 = vmin.xlane.f32.xlu0 %v1360
  %v1362 = vpop.xlane.xlu0 %1361
  %v1363 = vmin.f32 %v1327, %v1328
  %1364 = vmin.xlane.f32.xlu0 %v1363
  %v1365 = vpop.xlane.xlu0 %1364
  %v1366 = vmin.f32 %v1329, %v1330
  %1367 = vmin.xlane.f32.xlu0 %v1366
  %v1368 = vpop.xlane.xlu0 %1367
  %v1369 = vmin.f32 %v1331, %v1332
  %1370 = vmin.xlane.f32.xlu0 %v1369
  %v1371 = vpop.xlane.xlu0 %1370
  %v1372 = vmin.f32 %v1333, %v1334
  %1373 = vmin.xlane.f32.xlu0 %v1372
  %v1374 = vpop.xlane.xlu0 %1373
  %v1375 = vmin.f32 %v1335, %v1336
  %1376 = vmin.xlane.f32.xlu0 %v1375
  %v1377 = vpop.xlane.xlu0 %1376
  %v1378 = vmin.f32 %v1337, %v1338
  %1379 = vmin.xlane.f32.xlu0 %v1378
  %v1380 = vpop.xlane.xlu0 %1379
  %v1381 = vmin.f32 %v1339, %v1340
  %1382 = vmin.xlane.f32.xlu0 %v1381
  %v1383 = vpop.xlane.xlu0 %1382
  %v1384 = vmin.f32 %v1341, %v1342
  %1385 = vmin.xlane.f32.xlu0 %v1384
  %v1386 = vpop.xlane.xlu0 %1385
  %v1387 = vmin.f32 %v1343, %v1344
  %1388 = vmin.xlane.f32.xlu0 %v1387
  %v1389 = vpop.xlane.xlu0 %1388
  %v1390 = vmin.f32 %v1345, %v1346
  %1391 = vmin.xlane.f32.xlu0 %v1390
  %v1392 = vpop.xlane.xlu0 %1391
  %v1393 = vmin.f32 %v1347, %v1348
  %1394 = vmin.xlane.f32.xlu0 %v1393
  %v1395 = vpop.xlane.xlu0 %1394
  %v1396 = vmin.f32 %v1349, %v1350
  %1397 = vmin.xlane.f32.xlu0 %v1396
  %v1398 = vpop.xlane.xlu0 %1397
  %v1399 = vcvt.f32.s32.to.zero.pseudo %v1353
  %v1400 = vcvt.f32.s32.to.zero.pseudo %v1356
  %v1401 = vcvt.f32.s32.to.zero.pseudo %v1359
  %v1402 = vcvt.f32.s32.to.zero.pseudo %v1362
  %v1403 = vcvt.f32.s32.to.zero.pseudo %v1365
  %v1404 = vcvt.f32.s32.to.zero.pseudo %v1368
  %v1405 = vcvt.f32.s32.to.zero.pseudo %v1371
  %v1406 = vcvt.f32.s32.to.zero.pseudo %v1374
  %v1407 = vcvt.f32.s32.to.zero.pseudo %v1377
  %v1408 = vcvt.f32.s32.to.zero.pseudo %v1380
  %v1409 = vcvt.f32.s32.to.zero.pseudo %v1383
  %v1410 = vcvt.f32.s32.to.zero.pseudo %v1386
  %v1411 = vcvt.f32.s32.to.zero.pseudo %v1389
  %v1412 = vcvt.f32.s32.to.zero.pseudo %v1392
  %v1413 = vcvt.f32.s32.to.zero.pseudo %v1395
  %v1414 = vcvt.f32.s32.to.zero.pseudo %v1398
  %vm1415 = vcmp.eq.s32.totalorder %v966, %v1399
  %vm1416 = vcmp.eq.s32.totalorder %v949, %v1399
  %vm1417 = vcmp.eq.s32.totalorder %v967, %v1400
  %vm1418 = vcmp.eq.s32.totalorder %v949, %v1400
  %vm1419 = vcmp.eq.s32.totalorder %v968, %v1401
  %vm1420 = vcmp.eq.s32.totalorder %v949, %v1401
  %vm1421 = vcmp.eq.s32.totalorder %v969, %v1402
  %vm1422 = vcmp.eq.s32.totalorder %v949, %v1402
  %vm1423 = vcmp.eq.s32.totalorder %v970, %v1403
  %vm1424 = vcmp.eq.s32.totalorder %v949, %v1403
  %vm1425 = vcmp.eq.s32.totalorder %v971, %v1404
  %vm1426 = vcmp.eq.s32.totalorder %v949, %v1404
  %vm1427 = vcmp.eq.s32.totalorder %v972, %v1405
  %vm1428 = vcmp.eq.s32.totalorder %v949, %v1405
  %vm1429 = vcmp.eq.s32.totalorder %v973, %v1406
  %vm1430 = vcmp.eq.s32.totalorder %v949, %v1406
  %vm1431 = vcmp.eq.s32.totalorder %v974, %v1407
  %vm1432 = vcmp.eq.s32.totalorder %v949, %v1407
  %vm1433 = vcmp.eq.s32.totalorder %v975, %v1408
  %vm1434 = vcmp.eq.s32.totalorder %v949, %v1408
  %vm1435 = vcmp.eq.s32.totalorder %v976, %v1409
  %vm1436 = vcmp.eq.s32.totalorder %v949, %v1409
  %vm1437 = vcmp.eq.s32.totalorder %v977, %v1410
  %vm1438 = vcmp.eq.s32.totalorder %v949, %v1410
  %vm1439 = vcmp.eq.s32.totalorder %v978, %v1411
  %vm1440 = vcmp.eq.s32.totalorder %v949, %v1411
  %vm1441 = vcmp.eq.s32.totalorder %v979, %v1412
  %vm1442 = vcmp.eq.s32.totalorder %v949, %v1412
  %vm1443 = vcmp.eq.s32.totalorder %v980, %v1413
  %vm1444 = vcmp.eq.s32.totalorder %v949, %v1413
  %vm1445 = vcmp.eq.s32.totalorder %v981, %v1414
  %vm1446 = vcmp.eq.s32.totalorder %v949, %v1414
  %v1447 = vsel %vm1415, 1e+10, %v1207
  %v1448 = vsel %vm1416, 1e+10, %v1208
  %v1449 = vsel %vm1417, 1e+10, %v1209
  %v1450 = vsel %vm1418, 1e+10, %v1210
  %v1451 = vsel %vm1419, 1e+10, %v1211
  %v1452 = vsel %vm1420, 1e+10, %v1212
  %v1453 = vsel %vm1421, 1e+10, %v1213
  %v1454 = vsel %vm1422, 1e+10, %v1214
  %v1455 = vsel %vm1423, 1e+10, %v1215
  %v1456 = vsel %vm1424, 1e+10, %v1216
  %v1457 = vsel %vm1425, 1e+10, %v1217
  %v1458 = vsel %vm1426, 1e+10, %v1218
  %v1459 = vsel %vm1427, 1e+10, %v1219
  %v1460 = vsel %vm1428, 1e+10, %v1220
  %v1461 = vsel %vm1429, 1e+10, %v1221
  %v1462 = vsel %vm1430, 1e+10, %v1222
  %v1463 = vsel %vm1431, 1e+10, %v1223
  %v1464 = vsel %vm1432, 1e+10, %v1224
  %v1465 = vsel %vm1433, 1e+10, %v1225
  %v1466 = vsel %vm1434, 1e+10, %v1226
  %v1467 = vsel %vm1435, 1e+10, %v1227
  %v1468 = vsel %vm1436, 1e+10, %v1228
  %v1469 = vsel %vm1437, 1e+10, %v1229
  %v1470 = vsel %vm1438, 1e+10, %v1230
  %v1471 = vsel %vm1439, 1e+10, %v1231
  %v1472 = vsel %vm1440, 1e+10, %v1232
  %v1473 = vsel %vm1441, 1e+10, %v1233
  %v1474 = vsel %vm1442, 1e+10, %v1234
  %v1475 = vsel %vm1443, 1e+10, %v1235
  %v1476 = vsel %vm1444, 1e+10, %v1236
  %v1477 = vsel %vm1445, 1e+10, %v1237
  %v1478 = vsel %vm1446, 1e+10, %v1238
  %v1479 = vmin.f32 %v1447, %v1448
  %1480 = vmin.xlane.f32.xlu0 %v1479
  %v1481 = vpop.xlane.xlu0 %1480
  %v1482 = vmin.f32 %v1449, %v1450
  %1483 = vmin.xlane.f32.xlu0 %v1482
  %v1484 = vpop.xlane.xlu0 %1483
  %v1485 = vmin.f32 %v1451, %v1452
  %1486 = vmin.xlane.f32.xlu0 %v1485
  %v1487 = vpop.xlane.xlu0 %1486
  %v1488 = vmin.f32 %v1453, %v1454
  %1489 = vmin.xlane.f32.xlu0 %v1488
  %v1490 = vpop.xlane.xlu0 %1489
  %v1491 = vmin.f32 %v1455, %v1456
  %1492 = vmin.xlane.f32.xlu0 %v1491
  %v1493 = vpop.xlane.xlu0 %1492
  %v1494 = vmin.f32 %v1457, %v1458
  %1495 = vmin.xlane.f32.xlu0 %v1494
  %v1496 = vpop.xlane.xlu0 %1495
  %v1497 = vmin.f32 %v1459, %v1460
  %1498 = vmin.xlane.f32.xlu0 %v1497
  %v1499 = vpop.xlane.xlu0 %1498
  %v1500 = vmin.f32 %v1461, %v1462
  %1501 = vmin.xlane.f32.xlu0 %v1500
  %v1502 = vpop.xlane.xlu0 %1501
  %v1503 = vmin.f32 %v1463, %v1464
  %1504 = vmin.xlane.f32.xlu0 %v1503
  %v1505 = vpop.xlane.xlu0 %1504
  %v1506 = vmin.f32 %v1465, %v1466
  %1507 = vmin.xlane.f32.xlu0 %v1506
  %v1508 = vpop.xlane.xlu0 %1507
  %v1509 = vmin.f32 %v1467, %v1468
  %1510 = vmin.xlane.f32.xlu0 %v1509
  %v1511 = vpop.xlane.xlu0 %1510
  %v1512 = vmin.f32 %v1469, %v1470
  %1513 = vmin.xlane.f32.xlu0 %v1512
  %v1514 = vpop.xlane.xlu0 %1513
  %v1515 = vmin.f32 %v1471, %v1472
  %1516 = vmin.xlane.f32.xlu0 %v1515
  %v1517 = vpop.xlane.xlu0 %1516
  %v1518 = vmin.f32 %v1473, %v1474
  %1519 = vmin.xlane.f32.xlu0 %v1518
  %v1520 = vpop.xlane.xlu0 %1519
  %v1521 = vmin.f32 %v1475, %v1476
  %1522 = vmin.xlane.f32.xlu0 %v1521
  %v1523 = vpop.xlane.xlu0 %1522
  %v1524 = vmin.f32 %v1477, %v1478
  %1525 = vmin.xlane.f32.xlu0 %v1524
  %v1526 = vpop.xlane.xlu0 %1525
  %vm1527 = vcmp.eq.f32.partialorder %v1447, %v1481
  %vm1528 = vcmp.eq.f32.partialorder %v1448, %v1481
  %vm1529 = vcmp.eq.f32.partialorder %v1449, %v1484
  %vm1530 = vcmp.eq.f32.partialorder %v1450, %v1484
  %vm1531 = vcmp.eq.f32.partialorder %v1451, %v1487
  %vm1532 = vcmp.eq.f32.partialorder %v1452, %v1487
  %vm1533 = vcmp.eq.f32.partialorder %v1453, %v1490
  %vm1534 = vcmp.eq.f32.partialorder %v1454, %v1490
  %vm1535 = vcmp.eq.f32.partialorder %v1455, %v1493
  %vm1536 = vcmp.eq.f32.partialorder %v1456, %v1493
  %vm1537 = vcmp.eq.f32.partialorder %v1457, %v1496
  %vm1538 = vcmp.eq.f32.partialorder %v1458, %v1496
  %vm1539 = vcmp.eq.f32.partialorder %v1459, %v1499
  %vm1540 = vcmp.eq.f32.partialorder %v1460, %v1499
  %vm1541 = vcmp.eq.f32.partialorder %v1461, %v1502
  %vm1542 = vcmp.eq.f32.partialorder %v1462, %v1502
  %vm1543 = vcmp.eq.f32.partialorder %v1463, %v1505
  %vm1544 = vcmp.eq.f32.partialorder %v1464, %v1505
  %vm1545 = vcmp.eq.f32.partialorder %v1465, %v1508
  %vm1546 = vcmp.eq.f32.partialorder %v1466, %v1508
  %vm1547 = vcmp.eq.f32.partialorder %v1467, %v1511
  %vm1548 = vcmp.eq.f32.partialorder %v1468, %v1511
  %vm1549 = vcmp.eq.f32.partialorder %v1469, %v1514
  %vm1550 = vcmp.eq.f32.partialorder %v1470, %v1514
  %vm1551 = vcmp.eq.f32.partialorder %v1471, %v1517
  %vm1552 = vcmp.eq.f32.partialorder %v1472, %v1517
  %vm1553 = vcmp.eq.f32.partialorder %v1473, %v1520
  %vm1554 = vcmp.eq.f32.partialorder %v1474, %v1520
  %vm1555 = vcmp.eq.f32.partialorder %v1475, %v1523
  %vm1556 = vcmp.eq.f32.partialorder %v1476, %v1523
  %vm1557 = vcmp.eq.f32.partialorder %v1477, %v1526
  %vm1558 = vcmp.eq.f32.partialorder %v1478, %v1526
  %v1559 = vsel %vm1527, %v1062, 1e+09
  %v1560 = vsel %vm1528, %v1063, 1e+09
  %v1561 = vsel %vm1529, %v1064, 1e+09
  %v1562 = vsel %vm1530, %v1063, 1e+09
  %v1563 = vsel %vm1531, %v1065, 1e+09
  %v1564 = vsel %vm1532, %v1063, 1e+09
  %v1565 = vsel %vm1533, %v1066, 1e+09
  %v1566 = vsel %vm1534, %v1063, 1e+09
  %v1567 = vsel %vm1535, %v1067, 1e+09
  %v1568 = vsel %vm1536, %v1063, 1e+09
  %v1569 = vsel %vm1537, %v1068, 1e+09
  %v1570 = vsel %vm1538, %v1063, 1e+09
  %v1571 = vsel %vm1539, %v1069, 1e+09
  %v1572 = vsel %vm1540, %v1063, 1e+09
  %v1573 = vsel %vm1541, %v1070, 1e+09
  %v1574 = vsel %vm1542, %v1063, 1e+09
  %v1575 = vsel %vm1543, %v1071, 1e+09
  %v1576 = vsel %vm1544, %v1063, 1e+09
  %v1577 = vsel %vm1545, %v1072, 1e+09
  %v1578 = vsel %vm1546, %v1063, 1e+09
  %v1579 = vsel %vm1547, %v1073, 1e+09
  %v1580 = vsel %vm1548, %v1063, 1e+09
  %v1581 = vsel %vm1549, %v1074, 1e+09
  %v1582 = vsel %vm1550, %v1063, 1e+09
  %v1583 = vsel %vm1551, %v1075, 1e+09
  %v1584 = vsel %vm1552, %v1063, 1e+09
  %v1585 = vsel %vm1553, %v1076, 1e+09
  %v1586 = vsel %vm1554, %v1063, 1e+09
  %v1587 = vsel %vm1555, %v1077, 1e+09
  %v1588 = vsel %vm1556, %v1063, 1e+09
  %v1589 = vsel %vm1557, %v1078, 1e+09
  %v1590 = vsel %vm1558, %v1063, 1e+09
  %v1591 = vmin.f32 %v1559, %v1560
  %1592 = vmin.xlane.f32.xlu0 %v1591
  %v1593 = vpop.xlane.xlu0 %1592
  %v1594 = vmin.f32 %v1561, %v1562
  %1595 = vmin.xlane.f32.xlu0 %v1594
  %v1596 = vpop.xlane.xlu0 %1595
  %v1597 = vmin.f32 %v1563, %v1564
  %1598 = vmin.xlane.f32.xlu0 %v1597
  %v1599 = vpop.xlane.xlu0 %1598
  %v1600 = vmin.f32 %v1565, %v1566
  %1601 = vmin.xlane.f32.xlu0 %v1600
  %v1602 = vpop.xlane.xlu0 %1601
  %v1603 = vmin.f32 %v1567, %v1568
  %1604 = vmin.xlane.f32.xlu0 %v1603
  %v1605 = vpop.xlane.xlu0 %1604
  %v1606 = vmin.f32 %v1569, %v1570
  %1607 = vmin.xlane.f32.xlu0 %v1606
  %v1608 = vpop.xlane.xlu0 %1607
  %v1609 = vmin.f32 %v1571, %v1572
  %1610 = vmin.xlane.f32.xlu0 %v1609
  %v1611 = vpop.xlane.xlu0 %1610
  %v1612 = vmin.f32 %v1573, %v1574
  %1613 = vmin.xlane.f32.xlu0 %v1612
  %v1614 = vpop.xlane.xlu0 %1613
  %v1615 = vmin.f32 %v1575, %v1576
  %1616 = vmin.xlane.f32.xlu0 %v1615
  %v1617 = vpop.xlane.xlu0 %1616
  %v1618 = vmin.f32 %v1577, %v1578
  %1619 = vmin.xlane.f32.xlu0 %v1618
  %v1620 = vpop.xlane.xlu0 %1619
  %v1621 = vmin.f32 %v1579, %v1580
  %1622 = vmin.xlane.f32.xlu0 %v1621
  %v1623 = vpop.xlane.xlu0 %1622
  %v1624 = vmin.f32 %v1581, %v1582
  %1625 = vmin.xlane.f32.xlu0 %v1624
  %v1626 = vpop.xlane.xlu0 %1625
  %v1627 = vmin.f32 %v1583, %v1584
  %1628 = vmin.xlane.f32.xlu0 %v1627
  %v1629 = vpop.xlane.xlu0 %1628
  %v1630 = vmin.f32 %v1585, %v1586
  %1631 = vmin.xlane.f32.xlu0 %v1630
  %v1632 = vpop.xlane.xlu0 %1631
  %v1633 = vmin.f32 %v1587, %v1588
  %1634 = vmin.xlane.f32.xlu0 %v1633
  %v1635 = vpop.xlane.xlu0 %1634
  %v1636 = vmin.f32 %v1589, %v1590
  %1637 = vmin.xlane.f32.xlu0 %v1636
  %v1638 = vpop.xlane.xlu0 %1637
  %v1639 = vcvt.f32.s32.to.zero.pseudo %v1593
  %v1640 = vcvt.f32.s32.to.zero.pseudo %v1596
  %v1641 = vcvt.f32.s32.to.zero.pseudo %v1599
  %v1642 = vcvt.f32.s32.to.zero.pseudo %v1602
  %v1643 = vcvt.f32.s32.to.zero.pseudo %v1605
  %v1644 = vcvt.f32.s32.to.zero.pseudo %v1608
  %v1645 = vcvt.f32.s32.to.zero.pseudo %v1611
  %v1646 = vcvt.f32.s32.to.zero.pseudo %v1614
  %v1647 = vcvt.f32.s32.to.zero.pseudo %v1617
  %v1648 = vcvt.f32.s32.to.zero.pseudo %v1620
  %v1649 = vcvt.f32.s32.to.zero.pseudo %v1623
  %v1650 = vcvt.f32.s32.to.zero.pseudo %v1626
  %v1651 = vcvt.f32.s32.to.zero.pseudo %v1629
  %v1652 = vcvt.f32.s32.to.zero.pseudo %v1632
  %v1653 = vcvt.f32.s32.to.zero.pseudo %v1635
  %v1654 = vcvt.f32.s32.to.zero.pseudo %v1638
  %vm1655 = vcmp.eq.s32.totalorder %v947, 0
  %vm1656 = vcmp.eq.s32.totalorder %v947, 1
  %vm1657 = vcmp.eq.s32.totalorder %v947, 2
  %v1658 = vsel %vm1657, %v1481, 1e+10
  %v1659 = vsel %vm1657, %v1484, 1e+10
  %v1660 = vsel %vm1657, %v1487, 1e+10
  %v1661 = vsel %vm1657, %v1490, 1e+10
  %v1662 = vsel %vm1657, %v1493, 1e+10
  %v1663 = vsel %vm1657, %v1496, 1e+10
  %v1664 = vsel %vm1657, %v1499, 1e+10
  %v1665 = vsel %vm1657, %v1502, 1e+10
  %v1666 = vsel %vm1657, %v1505, 1e+10
  %v1667 = vsel %vm1657, %v1508, 1e+10
  %v1668 = vsel %vm1657, %v1511, 1e+10
  %v1669 = vsel %vm1657, %v1514, 1e+10
  %v1670 = vsel %vm1657, %v1517, 1e+10
  %v1671 = vsel %vm1657, %v1520, 1e+10
  %v1672 = vsel %vm1657, %v1523, 1e+10
  %v1673 = vsel %vm1657, %v1526, 1e+10
  %v1674 = vsel %vm1656, %v1241, %v1658
  %v1675 = vsel %vm1656, %v1244, %v1659
  %v1676 = vsel %vm1656, %v1247, %v1660
  %v1677 = vsel %vm1656, %v1250, %v1661
  %v1678 = vsel %vm1656, %v1253, %v1662
  %v1679 = vsel %vm1656, %v1256, %v1663
  %v1680 = vsel %vm1656, %v1259, %v1664
  %v1681 = vsel %vm1656, %v1262, %v1665
  %v1682 = vsel %vm1656, %v1265, %v1666
  %v1683 = vsel %vm1656, %v1268, %v1667
  %v1684 = vsel %vm1656, %v1271, %v1668
  %v1685 = vsel %vm1656, %v1274, %v1669
  %v1686 = vsel %vm1656, %v1277, %v1670
  %v1687 = vsel %vm1656, %v1280, %v1671
  %v1688 = vsel %vm1656, %v1283, %v1672
  %v1689 = vsel %vm1656, %v1286, %v1673
  %v1690 = vsel %vm1655, %v984, %v1674
  %v1691 = vsel %vm1655, %v987, %v1675
  %v1692 = vsel %vm1655, %v990, %v1676
  %v1693 = vsel %vm1655, %v993, %v1677
  %v1694 = vsel %vm1655, %v996, %v1678
  %v1695 = vsel %vm1655, %v999, %v1679
  %v1696 = vsel %vm1655, %v1002, %v1680
  %v1697 = vsel %vm1655, %v1005, %v1681
  %v1698 = vsel %vm1655, %v1008, %v1682
  %v1699 = vsel %vm1655, %v1011, %v1683
  %v1700 = vsel %vm1655, %v1014, %v1684
  %v1701 = vsel %vm1655, %v1017, %v1685
  %v1702 = vsel %vm1655, %v1020, %v1686
  %v1703 = vsel %vm1655, %v1023, %v1687
  %v1704 = vsel %vm1655, %v1026, %v1688
  %v1705 = vsel %vm1655, %v1029, %v1689
  %1706 = vst [vmem:[#allocation2] sm:$0xff] %v1690
  %1707 = vst [vmem:[#allocation2 + $0x8] sm:$0xff] %v1691
  %1708 = vst [vmem:[#allocation2 + $0x10] sm:$0xff] %v1692
  %1709 = vst [vmem:[#allocation2 + $0x18] sm:$0xff] %v1693
  %1710 = vst [vmem:[#allocation2 + $0x20] sm:$0xff] %v1694
  %1711 = vst [vmem:[#allocation2 + $0x28] sm:$0xff] %v1695
  %1712 = vst [vmem:[#allocation2 + $0x30] sm:$0xff] %v1696
  %1713 = vst [vmem:[#allocation2 + $0x38] sm:$0xff] %v1697
  %1714 = vst [vmem:[#allocation2 + $0x40] sm:$0xff] %v1698
  %1715 = vst [vmem:[#allocation2 + $0x48] sm:$0xff] %v1699
  %1716 = vst [vmem:[#allocation2 + $0x50] sm:$0xff] %v1700
  %1717 = vst [vmem:[#allocation2 + $0x58] sm:$0xff] %v1701
  %1718 = vst [vmem:[#allocation2 + $0x60] sm:$0xff] %v1702
  %1719 = vst [vmem:[#allocation2 + $0x68] sm:$0xff] %v1703
  %1720 = vst [vmem:[#allocation2 + $0x70] sm:$0xff] %v1704
  %1721 = vst [vmem:[#allocation2 + $0x78] sm:$0xff] %v1705
  %v1722 = vadd.s32 %v947, 128
  %v1723 = vsel %vm1657, %v1639, %v1722
  %v1724 = vsel %vm1657, %v1640, %v1722
  %v1725 = vsel %vm1657, %v1641, %v1722
  %v1726 = vsel %vm1657, %v1642, %v1722
  %v1727 = vsel %vm1657, %v1643, %v1722
  %v1728 = vsel %vm1657, %v1644, %v1722
  %v1729 = vsel %vm1657, %v1645, %v1722
  %v1730 = vsel %vm1657, %v1646, %v1722
  %v1731 = vsel %vm1657, %v1647, %v1722
  %v1732 = vsel %vm1657, %v1648, %v1722
  %v1733 = vsel %vm1657, %v1649, %v1722
  %v1734 = vsel %vm1657, %v1650, %v1722
  %v1735 = vsel %vm1657, %v1651, %v1722
  %v1736 = vsel %vm1657, %v1652, %v1722
  %v1737 = vsel %vm1657, %v1653, %v1722
  %v1738 = vsel %vm1657, %v1654, %v1722
  %v1739 = vsel %vm1656, %v1399, %v1723
  %v1740 = vsel %vm1656, %v1400, %v1724
  %v1741 = vsel %vm1656, %v1401, %v1725
  %v1742 = vsel %vm1656, %v1402, %v1726
  %v1743 = vsel %vm1656, %v1403, %v1727
  %v1744 = vsel %vm1656, %v1404, %v1728
  %v1745 = vsel %vm1656, %v1405, %v1729
  %v1746 = vsel %vm1656, %v1406, %v1730
  %v1747 = vsel %vm1656, %v1407, %v1731
  %v1748 = vsel %vm1656, %v1408, %v1732
  %v1749 = vsel %vm1656, %v1409, %v1733
  %v1750 = vsel %vm1656, %v1410, %v1734
  %v1751 = vsel %vm1656, %v1411, %v1735
  %v1752 = vsel %vm1656, %v1412, %v1736
  %v1753 = vsel %vm1656, %v1413, %v1737
  %v1754 = vsel %vm1656, %v1414, %v1738
  %v1755 = vsel %vm1655, %v1159, %v1739
  %v1756 = vsel %vm1655, %v1160, %v1740
  %v1757 = vsel %vm1655, %v1161, %v1741
  %v1758 = vsel %vm1655, %v1162, %v1742
  %v1759 = vsel %vm1655, %v1163, %v1743
  %v1760 = vsel %vm1655, %v1164, %v1744
  %v1761 = vsel %vm1655, %v1165, %v1745
  %v1762 = vsel %vm1655, %v1166, %v1746
  %v1763 = vsel %vm1655, %v1167, %v1747
  %v1764 = vsel %vm1655, %v1168, %v1748
  %v1765 = vsel %vm1655, %v1169, %v1749
  %v1766 = vsel %vm1655, %v1170, %v1750
  %v1767 = vsel %vm1655, %v1171, %v1751
  %v1768 = vsel %vm1655, %v1172, %v1752
  %v1769 = vsel %vm1655, %v1173, %v1753
  %v1770 = vsel %vm1655, %v1174, %v1754
  %1771 = vst [vmem:[#allocation3] sm:$0xff] %v1755
  %1772 = vst [vmem:[#allocation3 + $0x8] sm:$0xff] %v1756
  %1773 = vst [vmem:[#allocation3 + $0x10] sm:$0xff] %v1757
  %1774 = vst [vmem:[#allocation3 + $0x18] sm:$0xff] %v1758
  %1775 = vst [vmem:[#allocation3 + $0x20] sm:$0xff] %v1759
  %1776 = vst [vmem:[#allocation3 + $0x28] sm:$0xff] %v1760
  %1777 = vst [vmem:[#allocation3 + $0x30] sm:$0xff] %v1761
  %1778 = vst [vmem:[#allocation3 + $0x38] sm:$0xff] %v1762
  %1779 = vst [vmem:[#allocation3 + $0x40] sm:$0xff] %v1763
  %1780 = vst [vmem:[#allocation3 + $0x48] sm:$0xff] %v1764
  %1781 = vst [vmem:[#allocation3 + $0x50] sm:$0xff] %v1765
  %1782 = vst [vmem:[#allocation3 + $0x58] sm:$0xff] %v1766
  %1783 = vst [vmem:[#allocation3 + $0x60] sm:$0xff] %v1767
  %1784 = vst [vmem:[#allocation3 + $0x68] sm:$0xff] %v1768
  %1785 = vst [vmem:[#allocation3 + $0x70] sm:$0xff] %v1769
  %1786 = vst [vmem:[#allocation3 + $0x78] sm:$0xff] %v1770
  // Predicated region
  $region26: #{_lambda_.11} parent=0 // pred_check
    %p1787 = pneg %p22
  $region27: #{_lambda_.11} parent=0 // pred_check_branch
    %1789 = sbr.rel (%p1787) target = $region29
  $region28: #{_lambda_.11} parent=0 // pred_region
    %vm1790 = vcmask 7168
    %v1791 = vsel %vm1790, %v984, %v1241
    %v1792 = vsel %vm1790, %v987, %v1244
    %v1793 = vsel %vm1790, %v990, %v1247
    %v1794 = vsel %vm1790, %v993, %v1250
    %v1795 = vsel %vm1790, %v996, %v1253
    %v1796 = vsel %vm1790, %v999, %v1256
    %v1797 = vsel %vm1790, %v1002, %v1259
    %v1798 = vsel %vm1790, %v1005, %v1262
    %v1799 = vsel %vm1790, %v1008, %v1265
    %v1800 = vsel %vm1790, %v1011, %v1268
    %v1801 = vsel %vm1790, %v1014, %v1271
    %v1802 = vsel %vm1790, %v1017, %v1274
    %v1803 = vsel %vm1790, %v1020, %v1277
    %v1804 = vsel %vm1790, %v1023, %v1280
    %v1805 = vsel %vm1790, %v1026, %v1283
    %v1806 = vsel %vm1790, %v1029, %v1286
    %vm1807 = vcmask 15360
    %v1808 = vsel %vm1807, %v1791, %v1481
    %v1809 = vsel %vm1807, %v1792, %v1484
    %v1810 = vsel %vm1807, %v1793, %v1487
    %v1811 = vsel %vm1807, %v1794, %v1490
    %v1812 = vsel %vm1807, %v1795, %v1493
    %v1813 = vsel %vm1807, %v1796, %v1496
    %v1814 = vsel %vm1807, %v1797, %v1499
    %v1815 = vsel %vm1807, %v1798, %v1502
    %v1816 = vsel %vm1807, %v1799, %v1505
    %v1817 = vsel %vm1807, %v1800, %v1508
    %v1818 = vsel %vm1807, %v1801, %v1511
    %v1819 = vsel %vm1807, %v1802, %v1514
    %v1820 = vsel %vm1807, %v1803, %v1517
    %v1821 = vsel %vm1807, %v1804, %v1520
    %v1822 = vsel %vm1807, %v1805, %v1523
    %v1823 = vsel %vm1807, %v1806, %v1526
    %vm1824 = vcmask 23552
    %1825 = vst.msk [vmem:[%s5] sm:$0xff] %vm1824, %v1808
    %1826 = vst.msk [vmem:[%s5 + $0x8] sm:$0xff] %vm1824, %v1809
    %1827 = vst.msk [vmem:[%s5 + $0x10] sm:$0xff] %vm1824, %v1810
    %1828 = vst.msk [vmem:[%s5 + $0x18] sm:$0xff] %vm1824, %v1811
    %1829 = vst.msk [vmem:[%s5 + $0x20] sm:$0xff] %vm1824, %v1812
    %1830 = vst.msk [vmem:[%s5 + $0x28] sm:$0xff] %vm1824, %v1813
    %1831 = vst.msk [vmem:[%s5 + $0x30] sm:$0xff] %vm1824, %v1814
    %1832 = vst.msk [vmem:[%s5 + $0x38] sm:$0xff] %vm1824, %v1815
    %1833 = vst.msk [vmem:[%s5 + $0x40] sm:$0xff] %vm1824, %v1816
    %1834 = vst.msk [vmem:[%s5 + $0x48] sm:$0xff] %vm1824, %v1817
    %1835 = vst.msk [vmem:[%s5 + $0x50] sm:$0xff] %vm1824, %v1818
    %1836 = vst.msk [vmem:[%s5 + $0x58] sm:$0xff] %vm1824, %v1819
    %1837 = vst.msk [vmem:[%s5 + $0x60] sm:$0xff] %vm1824, %v1820
    %1838 = vst.msk [vmem:[%s5 + $0x68] sm:$0xff] %vm1824, %v1821
    %1839 = vst.msk [vmem:[%s5 + $0x70] sm:$0xff] %vm1824, %v1822
    %1840 = vst.msk [vmem:[%s5 + $0x78] sm:$0xff] %vm1824, %v1823
    %v1841 = vsel %vm1790, %v1159, %v1399
    %v1842 = vsel %vm1790, %v1160, %v1400
    %v1843 = vsel %vm1790, %v1161, %v1401
    %v1844 = vsel %vm1790, %v1162, %v1402
    %v1845 = vsel %vm1790, %v1163, %v1403
    %v1846 = vsel %vm1790, %v1164, %v1404
    %v1847 = vsel %vm1790, %v1165, %v1405
    %v1848 = vsel %vm1790, %v1166, %v1406
    %v1849 = vsel %vm1790, %v1167, %v1407
    %v1850 = vsel %vm1790, %v1168, %v1408
    %v1851 = vsel %vm1790, %v1169, %v1409
    %v1852 = vsel %vm1790, %v1170, %v1410
    %v1853 = vsel %vm1790, %v1171, %v1411
    %v1854 = vsel %vm1790, %v1172, %v1412
    %v1855 = vsel %vm1790, %v1173, %v1413
    %v1856 = vsel %vm1790, %v1174, %v1414
    %v1857 = vsel %vm1807, %v1841, %v1639
    %v1858 = vsel %vm1807, %v1842, %v1640
    %v1859 = vsel %vm1807, %v1843, %v1641
    %v1860 = vsel %vm1807, %v1844, %v1642
    %v1861 = vsel %vm1807, %v1845, %v1643
    %v1862 = vsel %vm1807, %v1846, %v1644
    %v1863 = vsel %vm1807, %v1847, %v1645
    %v1864 = vsel %vm1807, %v1848, %v1646
    %v1865 = vsel %vm1807, %v1849, %v1647
    %v1866 = vsel %vm1807, %v1850, %v1648
    %v1867 = vsel %vm1807, %v1851, %v1649
    %v1868 = vsel %vm1807, %v1852, %v1650
    %v1869 = vsel %vm1807, %v1853, %v1651
    %v1870 = vsel %vm1807, %v1854, %v1652
    %v1871 = vsel %vm1807, %v1855, %v1653
    %v1872 = vsel %vm1807, %v1856, %v1654
    %1873 = vst.msk [vmem:[%s6] sm:$0xff] %vm1824, %v1857
    %1874 = vst.msk [vmem:[%s6 + $0x8] sm:$0xff] %vm1824, %v1858
    %1875 = vst.msk [vmem:[%s6 + $0x10] sm:$0xff] %vm1824, %v1859
    %1876 = vst.msk [vmem:[%s6 + $0x18] sm:$0xff] %vm1824, %v1860
    %1877 = vst.msk [vmem:[%s6 + $0x20] sm:$0xff] %vm1824, %v1861
    %1878 = vst.msk [vmem:[%s6 + $0x28] sm:$0xff] %vm1824, %v1862
    %1879 = vst.msk [vmem:[%s6 + $0x30] sm:$0xff] %vm1824, %v1863
    %1880 = vst.msk [vmem:[%s6 + $0x38] sm:$0xff] %vm1824, %v1864
    %1881 = vst.msk [vmem:[%s6 + $0x40] sm:$0xff] %vm1824, %v1865
    %1882 = vst.msk [vmem:[%s6 + $0x48] sm:$0xff] %vm1824, %v1866
    %1883 = vst.msk [vmem:[%s6 + $0x50] sm:$0xff] %vm1824, %v1867
    %1884 = vst.msk [vmem:[%s6 + $0x58] sm:$0xff] %vm1824, %v1868
    %1885 = vst.msk [vmem:[%s6 + $0x60] sm:$0xff] %vm1824, %v1869
    %1886 = vst.msk [vmem:[%s6 + $0x68] sm:$0xff] %vm1824, %v1870
    %1887 = vst.msk [vmem:[%s6 + $0x70] sm:$0xff] %vm1824, %v1871
    %1888 = vst.msk [vmem:[%s6 + $0x78] sm:$0xff] %vm1824, %v1872
  $region29: #{_lambda_.11} parent=0 // pred_fallthru
    _
  // Predicated region
  $region30: #{_lambda_.11} parent=0 // pred_check
    _
  $region31: #{_lambda_.11} parent=0 // pred_check_branch
    %1890 = sbr.rel (0) target = $region33
  $region32: #{_lambda_.11} parent=0 // pred_region
    _
  $region33: #{_lambda_.11} parent=0 // pred_fallthru
    _
  // Predicated region
  $region34: #{_lambda_.11} parent=0 // pred_check
    _
  $region35: #{_lambda_.11} parent=0 // pred_check_branch
    %1892 = sbr.rel (0) target = $region37
  $region36: #{_lambda_.11} parent=0 // pred_region
    _
  $region37: #{_lambda_.11} parent=0 // pred_fallthru
    _
  // Predicated region
  $region38: #{_lambda_.11} parent=0 // pred_check
    _
  $region39: #{_lambda_.11} parent=0 // pred_check_branch
    %1894 = sbr.rel (0) target = $region41
  $region40: #{_lambda_.11} parent=0 // pred_region
    _
  $region41: #{_lambda_.11} parent=0 // pred_fallthru
    _
  // Predicated region
  $region42: #{_lambda_.11} parent=0 // pred_check
    _
  $region43: #{_lambda_.11} parent=0 // pred_check_branch
    %1896 = sbr.rel (0) target = $region45
  $region44: #{_lambda_.11} parent=0 // pred_region
    _
  $region45: #{_lambda_.11} parent=0 // pred_fallthru
    _

// kernel: _lambda_.16
$region0: #{_lambda_.16}
  #allocation0 [shape = 'u32[]', space=smem, size = 0x4, offset = 0x4, fixed_abs, tag = 'smem constant byte address 0x4 - core index']
  #allocation1 [shape = 'u32[144,128]{1,0:T(1,128)}', space=vmem, size = 0x12000, scoped, tag = 'internal scratch']
  %s0 = inlined_call_operand.vmem [shape: bf16[16,136], index: 0, kind: input, shape index: {}]
  %s1 = inlined_call_operand.vmem [shape: bf16[136,256], index: 1, kind: input, shape index: {}]
  %s2 = inlined_call_operand.vmem [shape: f32[16,256], index: 2, kind: output, shape index: {0}]
  %s3 = inlined_call_operand.vmem [shape: f32[1,2,256], index: 3, kind: output, shape index: {1}]
  %4 = xla_tuple %s2, %s3
  %s5 = sld [smem:[#allocation0]]
  $region26: #{_lambda_.16} parent=0
    _
  %s7 = ssub.s32 1, %s5
  %s8 = scalar_select 0, %s7, %s5
  // Predicated region
  $region2: #{_lambda_.16} parent=0 // pred_check
    _
  $region3: #{_lambda_.16} parent=0 // pred_check_branch
    %10 = sbr.rel (0) target = $region5
  $region4: #{_lambda_.16} parent=0 // pred_region
    _
  $region5: #{_lambda_.16} parent=0 // pred_fallthru
    _
  // Predicated region
  $region6: #{_lambda_.16} parent=0 // pred_check
    _
  $region7: #{_lambda_.16} parent=0 // pred_check_branch
    %12 = sbr.rel (0) target = $region9
  $region8: #{_lambda_.16} parent=0 // pred_region
    _
  $region9: #{_lambda_.16} parent=0 // pred_fallthru
    _
  %v14 = vld [vmem:[%s0] sm:$0xff]
  %v15 = vld [vmem:[%s0 + $0x8] sm:$0xff]
  %v16 = vld [vmem:[%s1] sm:$0xff]
  %v17 = vld [vmem:[%s1 + $0x8] sm:$0xff]
  %v18 = vld [vmem:[%s1 + $0x10] sm:$0xff]
  %v19 = vld [vmem:[%s1 + $0x18] sm:$0xff]
  %v20 = vld [vmem:[%s1 + $0x20] sm:$0xff]
  %v21 = vld [vmem:[%s1 + $0x28] sm:$0xff]
  %v22 = vld [vmem:[%s1 + $0x30] sm:$0xff]
  %v23 = vld [vmem:[%s1 + $0x38] sm:$0xff]
  %v24 = vld [vmem:[%s1 + $0x40] sm:$0xff]
  %v25 = vld [vmem:[%s1 + $0x48] sm:$0xff]
  %v26 = vld [vmem:[%s1 + $0x50] sm:$0xff]
  %v27 = vld [vmem:[%s1 + $0x58] sm:$0xff]
  %v28 = vld [vmem:[%s1 + $0x60] sm:$0xff]
  %v29 = vld [vmem:[%s1 + $0x68] sm:$0xff]
  %v30 = vld [vmem:[%s1 + $0x70] sm:$0xff]
  %v31 = vld [vmem:[%s1 + $0x78] sm:$0xff]
  %v32 = vld [vmem:[%s1 + $0x80] sm:$0xff]
  %v35 = vunpack.c.l.b16 %v14
  %v36 = vunpack.c.h.b16 %v14
  %v37 = vunpack.c.l.b16 %v15
  %v38 = vunpack.c.h.b16 %v15
  %v39 = vpack.c.b16 %v37, %v35
  %v40 = vpack.c.b16 %v38, %v36
  %v59 = vunpack.c.l.b16 %v16
  %v60 = vunpack.c.h.b16 %v16
  %v61 = vunpack.c.l.b16 %v17
  %v62 = vunpack.c.h.b16 %v17
  %v63 = vunpack.c.l.b16 %v18
  %v64 = vunpack.c.h.b16 %v18
  %v65 = vunpack.c.l.b16 %v19
  %v66 = vunpack.c.h.b16 %v19
  %v67 = vunpack.c.l.b16 %v20
  %v68 = vunpack.c.h.b16 %v20
  %v69 = vunpack.c.l.b16 %v21
  %v70 = vunpack.c.h.b16 %v21
  %v71 = vunpack.c.l.b16 %v22
  %v72 = vunpack.c.h.b16 %v22
  %v73 = vunpack.c.l.b16 %v23
  %v74 = vunpack.c.h.b16 %v23
  %v75 = vunpack.c.l.b16 %v24
  %v76 = vunpack.c.h.b16 %v24
  %v77 = vunpack.c.l.b16 %v25
  %v78 = vunpack.c.h.b16 %v25
  %v79 = vunpack.c.l.b16 %v26
  %v80 = vunpack.c.h.b16 %v26
  %v81 = vunpack.c.l.b16 %v27
  %v82 = vunpack.c.h.b16 %v27
  %v83 = vunpack.c.l.b16 %v28
  %v84 = vunpack.c.h.b16 %v28
  %v85 = vunpack.c.l.b16 %v29
  %v86 = vunpack.c.h.b16 %v29
  %v87 = vunpack.c.l.b16 %v30
  %v88 = vunpack.c.h.b16 %v30
  %v89 = vunpack.c.l.b16 %v31
  %v90 = vunpack.c.h.b16 %v31
  %v91 = vunpack.c.l.b16 %v32
  %v92 = vunpack.c.h.b16 %v32
  %v93 = vpack.c.b16 %v61, %v59
  %v94 = vpack.c.b16 %v62, %v60
  %v95 = vpack.c.b16 %v65, %v63
  %v96 = vpack.c.b16 %v66, %v64
  %v97 = vpack.c.b16 %v69, %v67
  %v98 = vpack.c.b16 %v70, %v68
  %v99 = vpack.c.b16 %v73, %v71
  %v100 = vpack.c.b16 %v74, %v72
  %v101 = vpack.c.b16 %v77, %v75
  %v102 = vpack.c.b16 %v78, %v76
  %v103 = vpack.c.b16 %v81, %v79
  %v104 = vpack.c.b16 %v82, %v80
  %v105 = vpack.c.b16 %v85, %v83
  %v106 = vpack.c.b16 %v86, %v84
  %v107 = vpack.c.b16 %v89, %v87
  %v108 = vpack.c.b16 %v90, %v88
  %v109 = vpack.c.b16 %v91, %v91
  %v110 = vpack.c.b16 %v92, %v92
  %vm127 = vcmask 64512
  %v129 = vsel %vm127, %v40, 0
  %vm131 = vcmask 1043456
  %v133 = vsel %vm131, %v109, 0
  %v136 = vsel %vm131, %v110, 0
  %138 = vmatprep.subr.bf16.mxu0 %v94
  %139 = vmatpush1.bf16.msra.mxu0 %v93
  %140 = vmatprep.subr.bf16.mxu0 %v96
  %141 = vmatpush1.bf16.msra.mxu0 %v95
  %142 = vmatprep.subr.bf16.mxu0 %v98
  %143 = vmatpush1.bf16.msra.mxu0 %v97
  %144 = vmatprep.subr.bf16.mxu0 %v100
  %145 = vmatpush1.bf16.msra.mxu0 %v99
  %146 = vmatprep.subr.bf16.mxu0 %v102
  %147 = vmatpush1.bf16.msra.mxu0 %v101
  %148 = vmatprep.subr.bf16.mxu0 %v104
  %149 = vmatpush1.bf16.msra.mxu0 %v103
  %150 = vmatprep.subr.bf16.mxu0 %v106
  %151 = vmatpush1.bf16.msra.mxu0 %v105
  %152 = vmatprep.subr.bf16.mxu0 %v108
  %153 = vmatpush1.bf16.msra.mxu0 %v107
  %154 = vmatprep.subr.bf16.mxu0 %v136
  %155 = vmatpush1.bf16.msra.mxu0 %v133
  %156 = vmatprep.subr.bf16.mxu0 0
  %157 = vmatpush1.bf16.msra.mxu0 0
  %158 = vmatprep.subr.bf16.mxu0 0
  %159 = vmatpush1.bf16.msra.mxu0 0
  %160 = vmatprep.subr.bf16.mxu0 0
  %161 = vmatpush1.bf16.msra.mxu0 0
  %162 = vmatprep.subr.bf16.mxu0 0
  %163 = vmatpush1.bf16.msra.mxu0 0
  %164 = vmatprep.subr.bf16.mxu0 0
  %165 = vmatpush1.bf16.msra.mxu0 0
  %166 = vmatprep.subr.bf16.mxu0 0
  %167 = vmatpush1.bf16.msra.mxu0 0
  %168 = vmatprep.subr.bf16.mxu0 0
  %169 = vmatpush1.bf16.msra.mxu0 0
  %170 = vmatprep.mubr.bf16.mxu0 %v129
  %171 = vmatmul.mubr.bf16.gmra.mrb[0].mxu0 %v39
  %v172 = vpop.f32.mrb[0].mxu0
  %v173 = vadd.f32 0.0, %v172
  %v174 = vpop.f32.mrb[0].mxu0
  %v175 = vadd.f32 0.0, %v174
  %v176 = vpop.f32.mrb[0].mxu0
  %v177 = vadd.f32 0.0, %v176
  %v178 = vpop.f32.mrb[0].mxu0
  %v179 = vadd.f32 0.0, %v178
  %180 = vdwg.mxu0
  %181 = vst [vmem:[%s2] sm:$0xff] %v173
  %182 = vst [vmem:[%s2 + $0x8] sm:$0xff] %v175
  %183 = vst [vmem:[%s2 + $0x10] sm:$0xff] %v177
  %184 = vst [vmem:[%s2 + $0x18] sm:$0xff] %v179
  %v185 = vadd.f32 %v173, %v177
  %v186 = vrot.slane %v185, 4
  %v187 = vadd.f32 %v185, %v186
  %v188 = vrot.slane %v187, 2
  %v189 = vadd.f32 %v187, %v188
  %v190 = vrot.slane %v189, 1
  %v191 = vadd.f32 %v189, %v190
  %v192 = vadd.f32 %v175, %v179
  %v193 = vrot.slane %v192, 4
  %v194 = vadd.f32 %v192, %v193
  %v195 = vrot.slane %v194, 2
  %v196 = vadd.f32 %v194, %v195
  %v197 = vrot.slane %v196, 1
  %v198 = vadd.f32 %v196, %v197
  %v199 = vmul.f32 %v173, %v173
  %v200 = vmul.f32 %v175, %v175
  %v201 = vmul.f32 %v177, %v177
  %v202 = vmul.f32 %v179, %v179
  %v203 = vadd.f32 %v199, %v201
  %v204 = vrot.slane %v203, 4
  %v205 = vadd.f32 %v203, %v204
  %v206 = vrot.slane %v205, 2
  %v207 = vadd.f32 %v205, %v206
  %v208 = vrot.slane %v207, 1
  %v209 = vadd.f32 %v207, %v208
  %v210 = vadd.f32 %v200, %v202
  %v211 = vrot.slane %v210, 4
  %v212 = vadd.f32 %v210, %v211
  %v213 = vrot.slane %v212, 2
  %v214 = vadd.f32 %v212, %v213
  %v215 = vrot.slane %v214, 1
  %v216 = vadd.f32 %v214, %v215
  %vm217 = vcmask 1040384
  %v218 = vsel %vm217, %v191, %v209
  %v219 = vsel %vm217, %v198, %v216
  %v222 = vcombine.low %v218, %v219
  %v224 = vunpack.c.l.s4 1983009808
  %v225 = vunpack.c.0.s8 %v224
  %v226 = vlaneseq
  %v227 = vshrl.u32 %v226, 7
  %v228 = vsub.s32 %v225, %v227
  %v229 = vrot.slane %v222, %v228
  %231 = vst [vmem:[%s3] sm:$0xf] %v229
  // Predicated region
  $region10: #{_lambda_.16} parent=0 // pred_check
    _
  $region11: #{_lambda_.16} parent=0 // pred_check_branch
    %233 = sbr.rel (0) target = $region13
  $region12: #{_lambda_.16} parent=0 // pred_region
    _
  $region13: #{_lambda_.16} parent=0 // pred_fallthru
    _
  // Predicated region
  $region14: #{_lambda_.16} parent=0 // pred_check
    _
  $region15: #{_lambda_.16} parent=0 // pred_check_branch
    %235 = sbr.rel (0) target = $region17
  $region16: #{_lambda_.16} parent=0 // pred_region
    _
  $region17: #{_lambda_.16} parent=0 // pred_fallthru
    _
  // Predicated region
  $region18: #{_lambda_.16} parent=0 // pred_check
    _
  $region19: #{_lambda_.16} parent=0 // pred_check_branch
    %237 = sbr.rel (0) target = $region21
  $region20: #{_lambda_.16} parent=0 // pred_region
    _
  $region21: #{_lambda_.16} parent=0 // pred_fallthru
    _
  // Predicated region
  $region22: #{_lambda_.16} parent=0 // pred_check
    _
  $region23: #{_lambda_.16} parent=0 // pred_check_branch
    %239 = sbr.rel (0) target = $region25
  $region24: #{_lambda_.16} parent=0 // pred_region
    _
  $region25: #{_lambda_.16} parent=0 // pred_fallthru
    _

// kernel: _lambda_.18
$region0: #{_lambda_.18}
  #allocation0 [shape = 'u32[]', space=smem, size = 0x4, offset = 0x4, fixed_abs, tag = 'smem constant byte address 0x4 - core index']
  #allocation1 [shape = 'u32[144,128]{1,0:T(1,128)}', space=vmem, size = 0x12000, scoped, tag = 'internal scratch']
  %s0 = inlined_call_operand.vmem [shape: f32[16,128], index: 0, kind: input, shape index: {}]
  %s1 = inlined_call_operand.vmem [shape: f32[1,128], index: 1, kind: input, shape index: {}]
  %s2 = inlined_call_operand.vmem [shape: f32[1,128], index: 2, kind: input, shape index: {}]
  %s3 = inlined_call_operand.vmem [shape: f32[16,128], index: 3, kind: output, shape index: {}]
  %s4 = sld [smem:[#allocation0]]
  $region22: #{_lambda_.18} parent=0
    _
  %s6 = ssub.s32 1, %s4
  %s7 = scalar_select 0, %s6, %s4
  // Predicated region
  $region2: #{_lambda_.18} parent=0 // pred_check
    _
  $region3: #{_lambda_.18} parent=0 // pred_check_branch
    %9 = sbr.rel (0) target = $region5
  $region4: #{_lambda_.18} parent=0 // pred_region
    _
  $region5: #{_lambda_.18} parent=0 // pred_fallthru
    _
  // Predicated region
  $region6: #{_lambda_.18} parent=0 // pred_check
    _
  $region7: #{_lambda_.18} parent=0 // pred_check_branch
    %11 = sbr.rel (0) target = $region9
  $region8: #{_lambda_.18} parent=0 // pred_region
    _
  $region9: #{_lambda_.18} parent=0 // pred_fallthru
    _
  // Predicated region
  $region10: #{_lambda_.18} parent=0 // pred_check
    _
  $region11: #{_lambda_.18} parent=0 // pred_check_branch
    %13 = sbr.rel (0) target = $region13
  $region12: #{_lambda_.18} parent=0 // pred_region
    _
  $region13: #{_lambda_.18} parent=0 // pred_fallthru
    _
  %v14 = vld [vmem:[%s0] sm:$0xff]
  %v15 = vld [vmem:[%s0 + $0x8] sm:$0xff]
  %v16 = vld [vmem:[%s1] sm:$0x1]
  %v18 = vlaneseq
  %v19 = vshrl.u32 %v18, 7
  %v20 = vsub.s32 0, %v19
  %v21 = vrot.slane %v16, %v20
  %v23 = vmul.f32 %v14, %v21
  %v24 = vmul.f32 %v15, %v21
  %v25 = vld [vmem:[%s2] sm:$0x1]
  %v27 = vlaneseq
  %v28 = vshrl.u32 %v27, 7
  %v29 = vsub.s32 0, %v28
  %v30 = vrot.slane %v25, %v29
  %v32 = vadd.f32 %v23, %v30
  %v33 = vadd.f32 %v24, %v30
  %v34 = vmax.f32 %v32, 0.0
  %v35 = vmax.f32 %v33, 0.0
  %36 = vst [vmem:[%s3] sm:$0xff] %v34
  %37 = vst [vmem:[%s3 + $0x8] sm:$0xff] %v35
  // Predicated region
  $region14: #{_lambda_.18} parent=0 // pred_check
    _
  $region15: #{_lambda_.18} parent=0 // pred_check_branch
    %39 = sbr.rel (0) target = $region17
  $region16: #{_lambda_.18} parent=0 // pred_region
    _
  $region17: #{_lambda_.18} parent=0 // pred_fallthru
    _
  // Predicated region
  $region18: #{_lambda_.18} parent=0 // pred_check
    _
  $region19: #{_lambda_.18} parent=0 // pred_check_branch
    %41 = sbr.rel (0) target = $region21
  $region20: #{_lambda_.18} parent=0 // pred_region
    _
  $region21: #{_lambda_.18} parent=0 // pred_fallthru
    _

// kernel: _lambda_.17
$region0: #{_lambda_.17}
  #allocation0 [shape = 'u32[]', space=smem, size = 0x4, offset = 0x4, fixed_abs, tag = 'smem constant byte address 0x4 - core index']
  #allocation1 [shape = 'u32[144,128]{1,0:T(1,128)}', space=vmem, size = 0x12000, scoped, tag = 'internal scratch']
  %s0 = inlined_call_operand.vmem [shape: f32[16,256], index: 0, kind: input, shape index: {}]
  %s1 = inlined_call_operand.vmem [shape: f32[1,256], index: 1, kind: input, shape index: {}]
  %s2 = inlined_call_operand.vmem [shape: f32[1,256], index: 2, kind: input, shape index: {}]
  %s3 = inlined_call_operand.vmem [shape: bf16[256,128], index: 3, kind: input, shape index: {}]
  %s4 = inlined_call_operand.vmem [shape: f32[16,128], index: 4, kind: output, shape index: {0}]
  %s5 = inlined_call_operand.vmem [shape: f32[1,2,128], index: 5, kind: output, shape index: {1}]
  %6 = xla_tuple %s4, %s5
  %s7 = sld [smem:[#allocation0]]
  $region34: #{_lambda_.17} parent=0
    _
  %s9 = ssub.s32 1, %s7
  %s10 = scalar_select 0, %s9, %s7
  // Predicated region
  $region2: #{_lambda_.17} parent=0 // pred_check
    _
  $region3: #{_lambda_.17} parent=0 // pred_check_branch
    %12 = sbr.rel (0) target = $region5
  $region4: #{_lambda_.17} parent=0 // pred_region
    _
  $region5: #{_lambda_.17} parent=0 // pred_fallthru
    _
  // Predicated region
  $region6: #{_lambda_.17} parent=0 // pred_check
    _
  $region7: #{_lambda_.17} parent=0 // pred_check_branch
    %14 = sbr.rel (0) target = $region9
  $region8: #{_lambda_.17} parent=0 // pred_region
    _
  $region9: #{_lambda_.17} parent=0 // pred_fallthru
    _
  // Predicated region
  $region10: #{_lambda_.17} parent=0 // pred_check
    _
  $region11: #{_lambda_.17} parent=0 // pred_check_branch
    %16 = sbr.rel (0) target = $region13
  $region12: #{_lambda_.17} parent=0 // pred_region
    _
  $region13: #{_lambda_.17} parent=0 // pred_fallthru
    _
  // Predicated region
  $region14: #{_lambda_.17} parent=0 // pred_check
    _
  $region15: #{_lambda_.17} parent=0 // pred_check_branch
    %18 = sbr.rel (0) target = $region17
  $region16: #{_lambda_.17} parent=0 // pred_region
    _
  $region17: #{_lambda_.17} parent=0 // pred_fallthru
    _
  %v20 = vld [vmem:[%s0] sm:$0xff]
  %v21 = vld [vmem:[%s0 + $0x8] sm:$0xff]
  %v22 = vld [vmem:[%s0 + $0x10] sm:$0xff]
  %v23 = vld [vmem:[%s0 + $0x18] sm:$0xff]
  %v24 = vld [vmem:[%s1] sm:$0x3]
  %v26 = vlaneseq
  %v27 = vshrl.u32 %v26, 7
  %v28 = vsub.s32 0, %v27
  %v29 = vrot.slane %v24, %v28
  %v30 = vlaneseq
  %v31 = vshrl.u32 %v30, 7
  %v32 = vsub.s32 1, %v31
  %v33 = vrot.slane %v24, %v32
  %v36 = vmul.f32 %v20, %v29
  %v37 = vmul.f32 %v21, %v33
  %v38 = vmul.f32 %v22, %v29
  %v39 = vmul.f32 %v23, %v33
  %v40 = vld [vmem:[%s2] sm:$0x3]
  %v42 = vlaneseq
  %v43 = vshrl.u32 %v42, 7
  %v44 = vsub.s32 0, %v43
  %v45 = vrot.slane %v40, %v44
  %v46 = vlaneseq
  %v47 = vshrl.u32 %v46, 7
  %v48 = vsub.s32 1, %v47
  %v49 = vrot.slane %v40, %v48
  %v52 = vadd.f32 %v36, %v45
  %v53 = vadd.f32 %v37, %v49
  %v54 = vadd.f32 %v38, %v45
  %v55 = vadd.f32 %v39, %v49
  %v56 = vmax.f32 %v52, 0.0
  %v57 = vmax.f32 %v53, 0.0
  %v58 = vmax.f32 %v54, 0.0
  %v59 = vmax.f32 %v55, 0.0
  %s60 = smul.u32 0, 16
  %v61 = vlaneseq
  %v62 = vshrl.u32 %v61, 7
  %v63 = vadd.s32 %v62, 8
  %v64 = vstv %s60
  %v65 = vadd.s32 %v64, %v62
  %v66 = vadd.s32 %v64, %v63
  %vm67 = vcmp.lt.s32.totalorder %v65, 16
  %vm68 = vcmp.lt.s32.totalorder %v66, 16
  %v69 = vsel %vm67, 1, 0
  %v70 = vsel %vm68, 1, 0
  %vm71 = vcmp.eq.s32.totalorder %v69, 1
  %vm72 = vcmp.eq.s32.totalorder %v70, 1
  %v73 = vsel %vm71, %v56, 0.0
  %v74 = vsel %vm71, %v57, 0.0
  %v75 = vsel %vm72, %v58, 0.0
  %v76 = vsel %vm72, %v59, 0.0
  %v77 = vpack.c.bf16 %v75, %v73
  %v78 = vpack.c.bf16 %v76, %v74
  %v79 = vld [vmem:[%s3] sm:$0xf]
  %v80 = vld [vmem:[%s3 + $0x4] sm:$0xf]
  %v81 = vld [vmem:[%s3 + $0x8] sm:$0xf]
  %v82 = vld [vmem:[%s3 + $0xc] sm:$0xf]
  %v83 = vld [vmem:[%s3 + $0x10] sm:$0xf]
  %v84 = vld [vmem:[%s3 + $0x14] sm:$0xf]
  %v85 = vld [vmem:[%s3 + $0x18] sm:$0xf]
  %v86 = vld [vmem:[%s3 + $0x1c] sm:$0xf]
  %v87 = vld [vmem:[%s3 + $0x20] sm:$0xf]
  %v88 = vld [vmem:[%s3 + $0x24] sm:$0xf]
  %v89 = vld [vmem:[%s3 + $0x28] sm:$0xf]
  %v90 = vld [vmem:[%s3 + $0x2c] sm:$0xf]
  %v91 = vld [vmem:[%s3 + $0x30] sm:$0xf]
  %v92 = vld [vmem:[%s3 + $0x34] sm:$0xf]
  %v93 = vld [vmem:[%s3 + $0x38] sm:$0xf]
  %v94 = vld [vmem:[%s3 + $0x3c] sm:$0xf]
  %v95 = vld [vmem:[%s3 + $0x40] sm:$0xf]
  %v96 = vld [vmem:[%s3 + $0x44] sm:$0xf]
  %v97 = vld [vmem:[%s3 + $0x48] sm:$0xf]
  %v98 = vld [vmem:[%s3 + $0x4c] sm:$0xf]
  %v99 = vld [vmem:[%s3 + $0x50] sm:$0xf]
  %v100 = vld [vmem:[%s3 + $0x54] sm:$0xf]
  %v101 = vld [vmem:[%s3 + $0x58] sm:$0xf]
  %v102 = vld [vmem:[%s3 + $0x5c] sm:$0xf]
  %v103 = vld [vmem:[%s3 + $0x60] sm:$0xf]
  %v104 = vld [vmem:[%s3 + $0x64] sm:$0xf]
  %v105 = vld [vmem:[%s3 + $0x68] sm:$0xf]
  %v106 = vld [vmem:[%s3 + $0x6c] sm:$0xf]
  %v107 = vld [vmem:[%s3 + $0x70] sm:$0xf]
  %v108 = vld [vmem:[%s3 + $0x74] sm:$0xf]
  %v109 = vld [vmem:[%s3 + $0x78] sm:$0xf]
  %v110 = vld [vmem:[%s3 + $0x7c] sm:$0xf]
  %v143 = vunpack.c.l.b16 %v79
  %v144 = vunpack.c.l.b16 %v80
  %v145 = vunpack.c.l.b16 %v81
  %v146 = vunpack.c.l.b16 %v82
  %v147 = vunpack.c.l.b16 %v83
  %v148 = vunpack.c.l.b16 %v84
  %v149 = vunpack.c.l.b16 %v85
  %v150 = vunpack.c.l.b16 %v86
  %v151 = vunpack.c.l.b16 %v87
  %v152 = vunpack.c.l.b16 %v88
  %v153 = vunpack.c.l.b16 %v89
  %v154 = vunpack.c.l.b16 %v90
  %v155 = vunpack.c.l.b16 %v91
  %v156 = vunpack.c.l.b16 %v92
  %v157 = vunpack.c.l.b16 %v93
  %v158 = vunpack.c.l.b16 %v94
  %v159 = vunpack.c.l.b16 %v95
  %v160 = vunpack.c.l.b16 %v96
  %v161 = vunpack.c.l.b16 %v97
  %v162 = vunpack.c.l.b16 %v98
  %v163 = vunpack.c.l.b16 %v99
  %v164 = vunpack.c.l.b16 %v100
  %v165 = vunpack.c.l.b16 %v101
  %v166 = vunpack.c.l.b16 %v102
  %v167 = vunpack.c.l.b16 %v103
  %v168 = vunpack.c.l.b16 %v104
  %v169 = vunpack.c.l.b16 %v105
  %v170 = vunpack.c.l.b16 %v106
  %v171 = vunpack.c.l.b16 %v107
  %v172 = vunpack.c.l.b16 %v108
  %v173 = vunpack.c.l.b16 %v109
  %v174 = vunpack.c.l.b16 %v110
  %v175 = vpack.c.b16 %v144, %v143
  %v176 = vpack.c.b16 %v146, %v145
  %v177 = vpack.c.b16 %v148, %v147
  %v178 = vpack.c.b16 %v150, %v149
  %v179 = vpack.c.b16 %v152, %v151
  %v180 = vpack.c.b16 %v154, %v153
  %v181 = vpack.c.b16 %v156, %v155
  %v182 = vpack.c.b16 %v158, %v157
  %v183 = vpack.c.b16 %v160, %v159
  %v184 = vpack.c.b16 %v162, %v161
  %v185 = vpack.c.b16 %v164, %v163
  %v186 = vpack.c.b16 %v166, %v165
  %v187 = vpack.c.b16 %v168, %v167
  %v188 = vpack.c.b16 %v170, %v169
  %v189 = vpack.c.b16 %v172, %v171
  %v190 = vpack.c.b16 %v174, %v173
  %207 = vmatprep.subr.bf16.mxu0 0
  %208 = vmatpush1.bf16.msra.mxu0 %v175
  %209 = vmatprep.subr.bf16.mxu0 0
  %210 = vmatpush1.bf16.msra.mxu0 %v176
  %211 = vmatprep.subr.bf16.mxu0 0
  %212 = vmatpush1.bf16.msra.mxu0 %v177
  %213 = vmatprep.subr.bf16.mxu0 0
  %214 = vmatpush1.bf16.msra.mxu0 %v178
  %215 = vmatprep.subr.bf16.mxu0 0
  %216 = vmatpush1.bf16.msra.mxu0 %v179
  %217 = vmatprep.subr.bf16.mxu0 0
  %218 = vmatpush1.bf16.msra.mxu0 %v180
  %219 = vmatprep.subr.bf16.mxu0 0
  %220 = vmatpush1.bf16.msra.mxu0 %v181
  %221 = vmatprep.subr.bf16.mxu0 0
  %222 = vmatpush1.bf16.msra.mxu0 %v182
  %223 = vmatprep.subr.bf16.mxu0 0
  %224 = vmatpush1.bf16.msra.mxu0 %v183
  %225 = vmatprep.subr.bf16.mxu0 0
  %226 = vmatpush1.bf16.msra.mxu0 %v184
  %227 = vmatprep.subr.bf16.mxu0 0
  %228 = vmatpush1.bf16.msra.mxu0 %v185
  %229 = vmatprep.subr.bf16.mxu0 0
  %230 = vmatpush1.bf16.msra.mxu0 %v186
  %231 = vmatprep.subr.bf16.mxu0 0
  %232 = vmatpush1.bf16.msra.mxu0 %v187
  %233 = vmatprep.subr.bf16.mxu0 0
  %234 = vmatpush1.bf16.msra.mxu0 %v188
  %235 = vmatprep.subr.bf16.mxu0 0
  %236 = vmatpush1.bf16.msra.mxu0 %v189
  %237 = vmatprep.subr.bf16.mxu0 0
  %238 = vmatpush1.bf16.msra.mxu0 %v190
  %239 = vmatprep.mubr.bf16.mxu0 %v78
  %240 = vmatmul.mubr.bf16.gmra.mrb[0].mxu0 %v77
  %v241 = vpop.f32.mrb[0].mxu0
  %v242 = vadd.f32 0.0, %v241
  %v243 = vpop.f32.mrb[0].mxu0
  %v244 = vpop.f32.mrb[0].mxu0
  %v245 = vadd.f32 0.0, %v244
  %v246 = vpop.f32.mrb[0].mxu0
  %247 = vdwg.mxu0
  %248 = vst [vmem:[%s4] sm:$0xff] %v242
  %249 = vst [vmem:[%s4 + $0x8] sm:$0xff] %v245
  %v250 = vadd.f32 %v242, %v245
  %v251 = vrot.slane %v250, 4
  %v252 = vadd.f32 %v250, %v251
  %v253 = vrot.slane %v252, 2
  %v254 = vadd.f32 %v252, %v253
  %v255 = vrot.slane %v254, 1
  %v256 = vadd.f32 %v254, %v255
  %v257 = vmul.f32 %v242, %v242
  %v258 = vmul.f32 %v245, %v245
  %v259 = vadd.f32 %v257, %v258
  %v260 = vrot.slane %v259, 4
  %v261 = vadd.f32 %v259, %v260
  %v262 = vrot.slane %v261, 2
  %v263 = vadd.f32 %v261, %v262
  %v264 = vrot.slane %v263, 1
  %v265 = vadd.f32 %v263, %v264
  %vm266 = vcmask 1040384
  %v267 = vsel %vm266, %v256, %v265
  %268 = vst [vmem:[%s5] sm:$0x3] %v267
  // Predicated region
  $region18: #{_lambda_.17} parent=0 // pred_check
    _
  $region19: #{_lambda_.17} parent=0 // pred_check_branch
    %270 = sbr.rel (0) target = $region21
  $region20: #{_lambda_.17} parent=0 // pred_region
    _
  $region21: #{_lambda_.17} parent=0 // pred_fallthru
    _
  // Predicated region
  $region22: #{_lambda_.17} parent=0 // pred_check
    _
  $region23: #{_lambda_.17} parent=0 // pred_check_branch
    %272 = sbr.rel (0) target = $region25
  $region24: #{_lambda_.17} parent=0 // pred_region
    _
  $region25: #{_lambda_.17} parent=0 // pred_fallthru
    _
  // Predicated region
  $region26: #{_lambda_.17} parent=0 // pred_check
    _
  $region27: #{_lambda_.17} parent=0 // pred_check_branch
    %274 = sbr.rel (0) target = $region29
  $region28: #{_lambda_.17} parent=0 // pred_region
    _
  $region29: #{_lambda_.17} parent=0 // pred_fallthru
    _
  // Predicated region
  $region30: #{_lambda_.17} parent=0 // pred_check
    _
  $region31: #{_lambda_.17} parent=0 // pred_check_branch
    %276 = sbr.rel (0) target = $region33
  $region32: #{_lambda_.17} parent=0 // pred_region
    _
  $region33: #{_lambda_.17} parent=0 // pred_fallthru
    _

// kernel: _lambda_.20
$region0: #{_lambda_.20}
  #allocation0 [shape = 'u32[]', space=smem, size = 0x4, offset = 0x4, fixed_abs, tag = 'smem constant byte address 0x4 - core index']
  #allocation1 [shape = 'u32[144,128]{1,0:T(1,128)}', space=vmem, size = 0x12000, scoped, tag = 'internal scratch']
  %s0 = inlined_call_operand.vmem [shape: f32[16,128], index: 0, kind: input, shape index: {}]
  %s1 = inlined_call_operand.vmem [shape: f32[1,128], index: 1, kind: input, shape index: {}]
  %s2 = inlined_call_operand.vmem [shape: f32[1,128], index: 2, kind: input, shape index: {}]
  %s3 = inlined_call_operand.vmem [shape: bf16[128,128], index: 3, kind: input, shape index: {}]
  %s4 = inlined_call_operand.vmem [shape: f32[16,128], index: 4, kind: output, shape index: {0}]
  %s5 = inlined_call_operand.vmem [shape: f32[1,2,128], index: 5, kind: output, shape index: {1}]
  %6 = xla_tuple %s4, %s5
  %s7 = sld [smem:[#allocation0]]
  $region34: #{_lambda_.20} parent=0
    _
  %s9 = ssub.s32 1, %s7
  %s10 = scalar_select 0, %s9, %s7
  // Predicated region
  $region2: #{_lambda_.20} parent=0 // pred_check
    _
  $region3: #{_lambda_.20} parent=0 // pred_check_branch
    %12 = sbr.rel (0) target = $region5
  $region4: #{_lambda_.20} parent=0 // pred_region
    _
  $region5: #{_lambda_.20} parent=0 // pred_fallthru
    _
  // Predicated region
  $region6: #{_lambda_.20} parent=0 // pred_check
    _
  $region7: #{_lambda_.20} parent=0 // pred_check_branch
    %14 = sbr.rel (0) target = $region9
  $region8: #{_lambda_.20} parent=0 // pred_region
    _
  $region9: #{_lambda_.20} parent=0 // pred_fallthru
    _
  // Predicated region
  $region10: #{_lambda_.20} parent=0 // pred_check
    _
  $region11: #{_lambda_.20} parent=0 // pred_check_branch
    %16 = sbr.rel (0) target = $region13
  $region12: #{_lambda_.20} parent=0 // pred_region
    _
  $region13: #{_lambda_.20} parent=0 // pred_fallthru
    _
  // Predicated region
  $region14: #{_lambda_.20} parent=0 // pred_check
    _
  $region15: #{_lambda_.20} parent=0 // pred_check_branch
    %18 = sbr.rel (0) target = $region17
  $region16: #{_lambda_.20} parent=0 // pred_region
    _
  $region17: #{_lambda_.20} parent=0 // pred_fallthru
    _
  %v20 = vld [vmem:[%s0] sm:$0xff]
  %v21 = vld [vmem:[%s0 + $0x8] sm:$0xff]
  %v22 = vld [vmem:[%s1] sm:$0x1]
  %v24 = vlaneseq
  %v25 = vshrl.u32 %v24, 7
  %v26 = vsub.s32 0, %v25
  %v27 = vrot.slane %v22, %v26
  %v29 = vmul.f32 %v20, %v27
  %v30 = vmul.f32 %v21, %v27
  %v31 = vld [vmem:[%s2] sm:$0x1]
  %v33 = vlaneseq
  %v34 = vshrl.u32 %v33, 7
  %v35 = vsub.s32 0, %v34
  %v36 = vrot.slane %v31, %v35
  %v38 = vadd.f32 %v29, %v36
  %v39 = vadd.f32 %v30, %v36
  %v40 = vmax.f32 %v38, 0.0
  %v41 = vmax.f32 %v39, 0.0
  %s42 = smul.u32 0, 16
  %v43 = vlaneseq
  %v44 = vshrl.u32 %v43, 7
  %v45 = vadd.s32 %v44, 8
  %v46 = vstv %s42
  %v47 = vadd.s32 %v46, %v44
  %v48 = vadd.s32 %v46, %v45
  %vm49 = vcmp.lt.s32.totalorder %v47, 16
  %vm50 = vcmp.lt.s32.totalorder %v48, 16
  %v51 = vsel %vm49, 1, 0
  %v52 = vsel %vm50, 1, 0
  %vm53 = vcmp.eq.s32.totalorder %v51, 1
  %vm54 = vcmp.eq.s32.totalorder %v52, 1
  %v55 = vsel %vm53, %v40, 0.0
  %v56 = vsel %vm54, %v41, 0.0
  %v57 = vpack.c.bf16 %v56, %v55
  %v58 = vld [vmem:[%s3] sm:$0xf]
  %v59 = vld [vmem:[%s3 + $0x4] sm:$0xf]
  %v60 = vld [vmem:[%s3 + $0x8] sm:$0xf]
  %v61 = vld [vmem:[%s3 + $0xc] sm:$0xf]
  %v62 = vld [vmem:[%s3 + $0x10] sm:$0xf]
  %v63 = vld [vmem:[%s3 + $0x14] sm:$0xf]
  %v64 = vld [vmem:[%s3 + $0x18] sm:$0xf]
  %v65 = vld [vmem:[%s3 + $0x1c] sm:$0xf]
  %v66 = vld [vmem:[%s3 + $0x20] sm:$0xf]
  %v67 = vld [vmem:[%s3 + $0x24] sm:$0xf]
  %v68 = vld [vmem:[%s3 + $0x28] sm:$0xf]
  %v69 = vld [vmem:[%s3 + $0x2c] sm:$0xf]
  %v70 = vld [vmem:[%s3 + $0x30] sm:$0xf]
  %v71 = vld [vmem:[%s3 + $0x34] sm:$0xf]
  %v72 = vld [vmem:[%s3 + $0x38] sm:$0xf]
  %v73 = vld [vmem:[%s3 + $0x3c] sm:$0xf]
  %v90 = vunpack.c.l.b16 %v58
  %v91 = vunpack.c.l.b16 %v59
  %v92 = vunpack.c.l.b16 %v60
  %v93 = vunpack.c.l.b16 %v61
  %v94 = vunpack.c.l.b16 %v62
  %v95 = vunpack.c.l.b16 %v63
  %v96 = vunpack.c.l.b16 %v64
  %v97 = vunpack.c.l.b16 %v65
  %v98 = vunpack.c.l.b16 %v66
  %v99 = vunpack.c.l.b16 %v67
  %v100 = vunpack.c.l.b16 %v68
  %v101 = vunpack.c.l.b16 %v69
  %v102 = vunpack.c.l.b16 %v70
  %v103 = vunpack.c.l.b16 %v71
  %v104 = vunpack.c.l.b16 %v72
  %v105 = vunpack.c.l.b16 %v73
  %v106 = vpack.c.b16 %v91, %v90
  %v107 = vpack.c.b16 %v93, %v92
  %v108 = vpack.c.b16 %v95, %v94
  %v109 = vpack.c.b16 %v97, %v96
  %v110 = vpack.c.b16 %v99, %v98
  %v111 = vpack.c.b16 %v101, %v100
  %v112 = vpack.c.b16 %v103, %v102
  %v113 = vpack.c.b16 %v105, %v104
  %122 = vmatprep.subr.bf16.mxu0 0
  %123 = vmatpush1.bf16.msra.mxu0 %v106
  %124 = vmatprep.subr.bf16.mxu0 0
  %125 = vmatpush1.bf16.msra.mxu0 %v107
  %126 = vmatprep.subr.bf16.mxu0 0
  %127 = vmatpush1.bf16.msra.mxu0 %v108
  %128 = vmatprep.subr.bf16.mxu0 0
  %129 = vmatpush1.bf16.msra.mxu0 %v109
  %130 = vmatprep.subr.bf16.mxu0 0
  %131 = vmatpush1.bf16.msra.mxu0 %v110
  %132 = vmatprep.subr.bf16.mxu0 0
  %133 = vmatpush1.bf16.msra.mxu0 %v111
  %134 = vmatprep.subr.bf16.mxu0 0
  %135 = vmatpush1.bf16.msra.mxu0 %v112
  %136 = vmatprep.subr.bf16.mxu0 0
  %137 = vmatpush1.bf16.msra.mxu0 %v113
  %138 = vmatprep.subr.bf16.mxu0 0
  %139 = vmatpush1.bf16.msra.mxu0 0
  %140 = vmatprep.subr.bf16.mxu0 0
  %141 = vmatpush1.bf16.msra.mxu0 0
  %142 = vmatprep.subr.bf16.mxu0 0
  %143 = vmatpush1.bf16.msra.mxu0 0
  %144 = vmatprep.subr.bf16.mxu0 0
  %145 = vmatpush1.bf16.msra.mxu0 0
  %146 = vmatprep.subr.bf16.mxu0 0
  %147 = vmatpush1.bf16.msra.mxu0 0
  %148 = vmatprep.subr.bf16.mxu0 0
  %149 = vmatpush1.bf16.msra.mxu0 0
  %150 = vmatprep.subr.bf16.mxu0 0
  %151 = vmatpush1.bf16.msra.mxu0 0
  %152 = vmatprep.subr.bf16.mxu0 0
  %153 = vmatpush1.bf16.msra.mxu0 0
  %154 = vmatprep.mubr.bf16.mxu0 0
  %155 = vmatmul.mubr.bf16.gmra.mrb[0].mxu0 %v57
  %v156 = vpop.f32.mrb[0].mxu0
  %v157 = vadd.f32 0.0, %v156
  %v158 = vpop.f32.mrb[0].mxu0
  %v159 = vpop.f32.mrb[0].mxu0
  %v160 = vadd.f32 0.0, %v159
  %v161 = vpop.f32.mrb[0].mxu0
  %162 = vdwg.mxu0
  %163 = vst [vmem:[%s4] sm:$0xff] %v157
  %164 = vst [vmem:[%s4 + $0x8] sm:$0xff] %v160
  %v165 = vadd.f32 %v157, %v160
  %v166 = vrot.slane %v165, 4
  %v167 = vadd.f32 %v165, %v166
  %v168 = vrot.slane %v167, 2
  %v169 = vadd.f32 %v167, %v168
  %v170 = vrot.slane %v169, 1
  %v171 = vadd.f32 %v169, %v170
  %v172 = vmul.f32 %v157, %v157
  %v173 = vmul.f32 %v160, %v160
  %v174 = vadd.f32 %v172, %v173
  %v175 = vrot.slane %v174, 4
  %v176 = vadd.f32 %v174, %v175
  %v177 = vrot.slane %v176, 2
  %v178 = vadd.f32 %v176, %v177
  %v179 = vrot.slane %v178, 1
  %v180 = vadd.f32 %v178, %v179
  %vm181 = vcmask 1040384
  %v182 = vsel %vm181, %v171, %v180
  %183 = vst [vmem:[%s5] sm:$0x3] %v182
  // Predicated region
  $region18: #{_lambda_.20} parent=0 // pred_check
    _
  $region19: #{_lambda_.20} parent=0 // pred_check_branch
    %185 = sbr.rel (0) target = $region21
  $region20: #{_lambda_.20} parent=0 // pred_region
    _
  $region21: #{_lambda_.20} parent=0 // pred_fallthru
    _
  // Predicated region
  $region22: #{_lambda_.20} parent=0 // pred_check
    _
  $region23: #{_lambda_.20} parent=0 // pred_check_branch
    %187 = sbr.rel (0) target = $region25
  $region24: #{_lambda_.20} parent=0 // pred_region
    _
  $region25: #{_lambda_.20} parent=0 // pred_fallthru
    _
  // Predicated region
  $region26: #{_lambda_.20} parent=0 // pred_check
    _
  $region27: #{_lambda_.20} parent=0 // pred_check_branch
    %189 = sbr.rel (0) target = $region29
  $region28: #{_lambda_.20} parent=0 // pred_region
    _
  $region29: #{_lambda_.20} parent=0 // pred_fallthru
    _
  // Predicated region
  $region30: #{_lambda_.20} parent=0 // pred_check
    _
  $region31: #{_lambda_.20} parent=0 // pred_check_branch
    %191 = sbr.rel (0) target = $region33
  $region32: #{_lambda_.20} parent=0 // pred_region
    _
  $region33: #{_lambda_.20} parent=0 // pred_fallthru
    _

// kernel: _lambda_.21
$region0: #{_lambda_.21}
  #allocation0 [shape = 'u32[]', space=smem, size = 0x4, offset = 0x4, fixed_abs, tag = 'smem constant byte address 0x4 - core index']
  #allocation1 [shape = 'u32[144,128]{1,0:T(1,128)}', space=vmem, size = 0x12000, scoped, tag = 'internal scratch']
  %s0 = inlined_call_operand.vmem [shape: f32[16,128], index: 0, kind: input, shape index: {}]
  %s1 = inlined_call_operand.vmem [shape: f32[1,128], index: 1, kind: input, shape index: {}]
  %s2 = inlined_call_operand.vmem [shape: f32[1,128], index: 2, kind: input, shape index: {}]
  %s3 = inlined_call_operand.hbm [shape: f32[16,128], index: 3, kind: output, shape index: {}]
  %s4 = sld [smem:[#allocation0]]
  $region22: #{_lambda_.21} parent=0
    _
  %s6 = ssub.s32 1, %s4
  %s7 = scalar_select 0, %s6, %s4
  $region1: #{_lambda_.21} parent=0
    #allocation2 [shape = 'u8[8192]{0}', space=vmem, size = 0x2000, scoped, tag = 'output window, operand 0, single buffered']
    #allocation3 [shape = 's32[1]{0}', space=sflag, size = 0x4, scoped, tag = 'scoped memory for _lambda_.21']
    %8 = vsyncpa [#allocation3], 0
    // Predicated region
    $region2: #{_lambda_.21} parent=1 // pred_check
      _
    $region3: #{_lambda_.21} parent=1 // pred_check_branch
      %10 = sbr.rel (0) target = $region5
    $region4: #{_lambda_.21} parent=1 // pred_region
      _
    $region5: #{_lambda_.21} parent=1 // pred_fallthru
      _
    // Predicated region
    $region6: #{_lambda_.21} parent=1 // pred_check
      _
    $region7: #{_lambda_.21} parent=1 // pred_check_branch
      %12 = sbr.rel (0) target = $region9
    $region8: #{_lambda_.21} parent=1 // pred_region
      _
    $region9: #{_lambda_.21} parent=1 // pred_fallthru
      _
    // Predicated region
    $region10: #{_lambda_.21} parent=1 // pred_check
      _
    $region11: #{_lambda_.21} parent=1 // pred_check_branch
      %14 = sbr.rel (0) target = $region13
    $region12: #{_lambda_.21} parent=1 // pred_region
      _
    $region13: #{_lambda_.21} parent=1 // pred_fallthru
      _
    %v15 = vld [vmem:[%s0] sm:$0xff]
    %v16 = vld [vmem:[%s0 + $0x8] sm:$0xff]
    %v17 = vld [vmem:[%s1] sm:$0x1]
    %v19 = vlaneseq
    %v20 = vshrl.u32 %v19, 7
    %v21 = vsub.s32 0, %v20
    %v22 = vrot.slane %v17, %v21
    %v24 = vmul.f32 %v15, %v22
    %v25 = vmul.f32 %v16, %v22
    %v26 = vld [vmem:[%s2] sm:$0x1]
    %v28 = vlaneseq
    %v29 = vshrl.u32 %v28, 7
    %v30 = vsub.s32 0, %v29
    %v31 = vrot.slane %v26, %v30
    %v33 = vadd.f32 %v24, %v31
    %v34 = vadd.f32 %v25, %v31
    %v35 = vmax.f32 %v33, 0.0
    %v36 = vmax.f32 %v34, 0.0
    %37 = vst [vmem:[#allocation2] sm:$0xff] %v35
    %38 = vst [vmem:[#allocation2 + $0x8] sm:$0xff] %v36
    // Predicated region
    $region14: #{_lambda_.21} parent=1 // pred_check
      _
    $region15: #{_lambda_.21} parent=1 // pred_check_branch
      %40 = sbr.rel (0) target = $region17
    $region16: #{_lambda_.21} parent=1 // pred_region
      %s42 = ssub.s32 256, 256
      %43 = vsyncadd [#allocation3], %s42
      %s44 = sshll.u32 [#allocation2], 4
      %s45 = int_to_ptr.vmem [resolvable:$true] %s44
      %50 = dma.vmem_to_hbm [thread:$0]  %s45, 256, %s3, [#allocation3], 128, 128, 8
    $region17: #{_lambda_.21} parent=1 // pred_fallthru
      _
    // Predicated region
    $region18: #{_lambda_.21} parent=1 // pred_check
      _
    $region19: #{_lambda_.21} parent=1 // pred_check_branch
      %52 = sbr.rel (0) target = $region21
    $region20: #{_lambda_.21} parent=1 // pred_region
      %53 = dma.done [#allocation3], 256
    $region21: #{_lambda_.21} parent=1 // pred_fallthru
      _
    %54 = vsyncpa [#allocation3], 1

// kernel: _lambda_.19
$region0: #{_lambda_.19}
  #allocation0 [shape = 'u32[]', space=smem, size = 0x4, offset = 0x4, fixed_abs, tag = 'smem constant byte address 0x4 - core index']
  #allocation1 [shape = 'u32[144,128]{1,0:T(1,128)}', space=vmem, size = 0x12000, scoped, tag = 'internal scratch']
  %s0 = inlined_call_operand.vmem [shape: bf16[16,67], index: 0, kind: input, shape index: {}]
  %s1 = inlined_call_operand.vmem [shape: bf16[67,128], index: 1, kind: input, shape index: {}]
  %s2 = inlined_call_operand.vmem [shape: f32[16,128], index: 2, kind: output, shape index: {0}]
  %s3 = inlined_call_operand.vmem [shape: f32[1,2,128], index: 3, kind: output, shape index: {1}]
  %4 = xla_tuple %s2, %s3
  %s5 = sld [smem:[#allocation0]]
  $region26: #{_lambda_.19} parent=0
    _
  %s7 = ssub.s32 1, %s5
  %s8 = scalar_select 0, %s7, %s5
  // Predicated region
  $region2: #{_lambda_.19} parent=0 // pred_check
    _
  $region3: #{_lambda_.19} parent=0 // pred_check_branch
    %10 = sbr.rel (0) target = $region5
  $region4: #{_lambda_.19} parent=0 // pred_region
    _
  $region5: #{_lambda_.19} parent=0 // pred_fallthru
    _
  // Predicated region
  $region6: #{_lambda_.19} parent=0 // pred_check
    _
  $region7: #{_lambda_.19} parent=0 // pred_check_branch
    %12 = sbr.rel (0) target = $region9
  $region8: #{_lambda_.19} parent=0 // pred_region
    _
  $region9: #{_lambda_.19} parent=0 // pred_fallthru
    _
  %v14 = vld [vmem:[%s0] sm:$0xf]
  %v15 = vld [vmem:[%s0 + $0x4] sm:$0xf]
  %v16 = vld [vmem:[%s1] sm:$0xf]
  %v17 = vld [vmem:[%s1 + $0x4] sm:$0xf]
  %v18 = vld [vmem:[%s1 + $0x8] sm:$0xf]
  %v19 = vld [vmem:[%s1 + $0xc] sm:$0xf]
  %v20 = vld [vmem:[%s1 + $0x10] sm:$0xf]
  %v21 = vld [vmem:[%s1 + $0x14] sm:$0xf]
  %v22 = vld [vmem:[%s1 + $0x18] sm:$0xf]
  %v23 = vld [vmem:[%s1 + $0x1c] sm:$0xf]
  %v24 = vld [vmem:[%s1 + $0x20] sm:$0x3]
  %v27 = vunpack.c.l.b16 %v14
  %v28 = vunpack.c.l.b16 %v15
  %v29 = vpack.c.b16 %v28, %v27
  %v39 = vunpack.c.l.b16 %v16
  %v40 = vunpack.c.l.b16 %v17
  %v41 = vunpack.c.l.b16 %v18
  %v42 = vunpack.c.l.b16 %v19
  %v43 = vunpack.c.l.b16 %v20
  %v44 = vunpack.c.l.b16 %v21
  %v45 = vunpack.c.l.b16 %v22
  %v46 = vunpack.c.l.b16 %v23
  %v47 = vunpack.c.l.b16 %v24
  %v48 = vpack.c.b16 %v40, %v39
  %v49 = vpack.c.b16 %v42, %v41
  %v50 = vpack.c.b16 %v44, %v43
  %v51 = vpack.c.b16 %v46, %v45
  %v52 = vpack.c.b16 %v47, %v47
  %vm57 = vcmask 547840
  %v59 = vsel %vm57, %v29, 0
  %vm61 = vcmask 1040384
  %vm62 = vcmask 1041408
  %v63 = vsel %vm61, 4294967295, 65535
  %v64 = vsel %vm62, %v63, 0
  %v66 = vand.u32 %v52, %v64
  %68 = vmatprep.subr.bf16.mxu0 0
  %69 = vmatpush1.bf16.msra.mxu0 %v48
  %70 = vmatprep.subr.bf16.mxu0 0
  %71 = vmatpush1.bf16.msra.mxu0 %v49
  %72 = vmatprep.subr.bf16.mxu0 0
  %73 = vmatpush1.bf16.msra.mxu0 %v50
  %74 = vmatprep.subr.bf16.mxu0 0
  %75 = vmatpush1.bf16.msra.mxu0 %v51
  %76 = vmatprep.subr.bf16.mxu0 0
  %77 = vmatpush1.bf16.msra.mxu0 %v66
  %78 = vmatprep.subr.bf16.mxu0 0
  %79 = vmatpush1.bf16.msra.mxu0 0
  %80 = vmatprep.subr.bf16.mxu0 0
  %81 = vmatpush1.bf16.msra.mxu0 0
  %82 = vmatprep.subr.bf16.mxu0 0
  %83 = vmatpush1.bf16.msra.mxu0 0
  %84 = vmatprep.subr.bf16.mxu0 0
  %85 = vmatpush1.bf16.msra.mxu0 0
  %86 = vmatprep.subr.bf16.mxu0 0
  %87 = vmatpush1.bf16.msra.mxu0 0
  %88 = vmatprep.subr.bf16.mxu0 0
  %89 = vmatpush1.bf16.msra.mxu0 0
  %90 = vmatprep.subr.bf16.mxu0 0
  %91 = vmatpush1.bf16.msra.mxu0 0
  %92 = vmatprep.subr.bf16.mxu0 0
  %93 = vmatpush1.bf16.msra.mxu0 0
  %94 = vmatprep.subr.bf16.mxu0 0
  %95 = vmatpush1.bf16.msra.mxu0 0
  %96 = vmatprep.subr.bf16.mxu0 0
  %97 = vmatpush1.bf16.msra.mxu0 0
  %98 = vmatprep.subr.bf16.mxu0 0
  %99 = vmatpush1.bf16.msra.mxu0 0
  %100 = vmatprep.mubr.bf16.mxu0 0
  %101 = vmatmul.mubr.bf16.gmra.mrb[0].mxu0 %v59
  %v102 = vpop.f32.mrb[0].mxu0
  %v103 = vadd.f32 0.0, %v102
  %v104 = vpop.f32.mrb[0].mxu0
  %v105 = vpop.f32.mrb[0].mxu0
  %v106 = vadd.f32 0.0, %v105
  %v107 = vpop.f32.mrb[0].mxu0
  %108 = vdwg.mxu0
  %109 = vst [vmem:[%s2] sm:$0xff] %v103
  %110 = vst [vmem:[%s2 + $0x8] sm:$0xff] %v106
  %v111 = vadd.f32 %v103, %v106
  %v112 = vrot.slane %v111, 4
  %v113 = vadd.f32 %v111, %v112
  %v114 = vrot.slane %v113, 2
  %v115 = vadd.f32 %v113, %v114
  %v116 = vrot.slane %v115, 1
  %v117 = vadd.f32 %v115, %v116
  %v118 = vmul.f32 %v103, %v103
  %v119 = vmul.f32 %v106, %v106
  %v120 = vadd.f32 %v118, %v119
  %v121 = vrot.slane %v120, 4
  %v122 = vadd.f32 %v120, %v121
  %v123 = vrot.slane %v122, 2
  %v124 = vadd.f32 %v122, %v123
  %v125 = vrot.slane %v124, 1
  %v126 = vadd.f32 %v124, %v125
  %v127 = vsel %vm61, %v117, %v126
  %128 = vst [vmem:[%s3] sm:$0x3] %v127
  // Predicated region
  $region10: #{_lambda_.19} parent=0 // pred_check
    _
  $region11: #{_lambda_.19} parent=0 // pred_check_branch
    %130 = sbr.rel (0) target = $region13
  $region12: #{_lambda_.19} parent=0 // pred_region
    _
  $region13: #{_lambda_.19} parent=0 // pred_fallthru
    _
  // Predicated region
  $region14: #{_lambda_.19} parent=0 // pred_check
    _
  $region15: #{_lambda_.19} parent=0 // pred_check_branch
    %132 = sbr.rel (0) target = $region17
  $region16: #{_lambda_.19} parent=0 // pred_region
    _
  $region17: #{_lambda_.19} parent=0 // pred_fallthru
    _
  // Predicated region
  $region18: #{_lambda_.19} parent=0 // pred_check
    _
  $region19: #{_lambda_.19} parent=0 // pred_check_branch
    %134 = sbr.rel (0) target = $region21
  $region20: #{_lambda_.19} parent=0 // pred_region
    _
  $region21: #{_lambda_.19} parent=0 // pred_fallthru
    _
  // Predicated region
  $region22: #{_lambda_.19} parent=0 // pred_check
    _
  $region23: #{_lambda_.19} parent=0 // pred_check_branch
    %136 = sbr.rel (0) target = $region25
  $region24: #{_lambda_.19} parent=0 // pred_region
    _
  $region25: #{_lambda_.19} parent=0 // pred_fallthru
    _

</llo_original>
